<compile_context>
chip_gen: v6e
topology: v6e:2x2x1
jax: 0.10.0
libtpu: 0.0.40
codegen_flags: <defaults>
</compile_context>

<pallas_src>
import jax
import jax.numpy as jnp
from jax.experimental import pallas as pl
from jax.experimental.pallas import tpu as pltpu

N_IN = 1024
H1, H2, H3 = 2048, 512, 128
N_OUT = 23
N_OUT_PADDED = 128  # lane-dense output slab; sliced back to N_OUT in the wrapper


def fused_mlp_kernel(x_ref, w1_ref, s1_ref, b1_ref,
                     w2_ref, s2_ref, b2_ref,
                     w3_ref, b3_ref, w4_ref, b4_ref, o_ref):
    """Entire 1024->2048->512->128->128(pad of 23) MLP for one batch tile.

    x_ref: (TB, 1024) f32; w1/w2: int8 (storage-only quant, per-out-channel
    scales s1/s2 in f32); w3/w4: bf16; biases f32; o_ref: (TB, 128) f32.
    All matmuls are bf16 x bf16 on the MXU with f32 accumulation.
    """
    x = x_ref[...].astype(jnp.bfloat16)          # cast input in-kernel (VPU)

    # Layer 1 + ReLU  (dropout1: identity in eval mode)
    w1 = w1_ref[...].astype(jnp.bfloat16)        # int8 -> bf16 decode (exact)
    h = jnp.dot(x, w1, preferred_element_type=jnp.float32)
    h = jnp.maximum(h * s1_ref[...] + b1_ref[...], 0.0)

    # Layer 2 + ReLU  (dropout2: identity in eval mode)
    w2 = w2_ref[...].astype(jnp.bfloat16)
    h = jnp.dot(h.astype(jnp.bfloat16), w2, preferred_element_type=jnp.float32)
    h = jnp.maximum(h * s2_ref[...] + b2_ref[...], 0.0)

    # Layer 3 + ReLU  (dropout3: identity in eval mode)
    h = jnp.dot(h.astype(jnp.bfloat16), w3_ref[...],
                preferred_element_type=jnp.float32)
    h = jnp.maximum(h + b3_ref[...], 0.0)

    # Layer 4 (no ReLU), padded to 128 output lanes for an unmasked store.
    h = jnp.dot(h.astype(jnp.bfloat16), w4_ref[...],
                preferred_element_type=jnp.float32)
    o_ref[...] = (h + b4_ref[...]).astype(o_ref.dtype)


def _round_up(n, m):
    return ((n + m - 1) // m) * m


def fused_mlp(x_f32, params):
    """x_f32: (B, 1024) f32 -> (B, 23) f32 via one batch-tiled fused Pallas call."""
    B = x_f32.shape[0]
    # Batch tile: single step for small B, 256-row tiles (pipelined + megacore
    # parallel) for large B. Always a multiple of 8 so stores are unmasked.
    if B <= 256:
        TB = _round_up(max(B, 1), 8)
    else:
        TB = 256
    Bp = _round_up(B, TB)
    if Bp != B:
        x_f32 = jnp.pad(x_f32, ((0, Bp - B), (0, 0)))

    const = lambda i: (0, 0)   # weights/biases: constant block index -> no re-DMA

    out_padded = pl.pallas_call(
        fused_mlp_kernel,
        out_shape=jax.ShapeDtypeStruct((Bp, N_OUT_PADDED), jnp.float32),
        grid=(Bp // TB,),
        in_specs=[
            pl.BlockSpec((TB, N_IN), lambda i: (i, 0)),          # x: streams per tile
            pl.BlockSpec((N_IN, H1), const),                     # w1 (int8)
            pl.BlockSpec((1, H1), const),                        # s1
            pl.BlockSpec((1, H1), const),                        # b1
            pl.BlockSpec((H1, H2), const),                       # w2 (int8)
            pl.BlockSpec((1, H2), const),                        # s2
            pl.BlockSpec((1, H2), const),                        # b2
            pl.BlockSpec((H2, H3), const),                       # w3 (bf16)
            pl.BlockSpec((1, H3), const),                        # b3
            pl.BlockSpec((H3, N_OUT_PADDED), const),             # w4 (bf16, padded)
            pl.BlockSpec((1, N_OUT_PADDED), const),              # b4 (padded)
        ],
        out_specs=pl.BlockSpec((TB, N_OUT_PADDED), lambda i: (i, 0)),
        compiler_params=pltpu.CompilerParams(
            dimension_semantics=("parallel",),   # batch split: v7x uses both TCs
            vmem_limit_bytes=48 * 1024 * 1024,
        ),
    )(x_f32,
      params["w1"], params["s1"], params["b1"],
      params["w2"], params["s2"], params["b2"],
      params["w3"], params["b3"],
      params["w4"], params["b4"])
    return out_padded[:B, :N_OUT]


@jax.jit
def network_forward(params, x_nchw):
    B = x_nchw.shape[0]
    x = x_nchw.reshape(B, -1)       # torch.flatten(x, start_dim=1) -> (B, 1024)
    return fused_mlp(x, params)     # f32 in; cast to bf16 happens inside the kernel


# ----------------------------- parameters ----------------------------------

def init_linear(key, fan_in, fan_out):
    """Deterministic init mimicking torch.nn.Linear (uniform +-1/sqrt(fan_in))."""
    kw, kb = jax.random.split(key)
    bound = 1.0 / jnp.sqrt(jnp.float32(fan_in))
    w = jax.random.uniform(kw, (fan_in, fan_out), jnp.float32, -bound, bound)
    b = jax.random.uniform(kb, (1, fan_out), jnp.float32, -bound, bound)
    return w, b


def init_params(key):
    k1, k2, k3, k4 = jax.random.split(key, 4)
    return {
        "l1": init_linear(k1, N_IN, H1),
        "l2": init_linear(k2, H1, H2),
        "l3": init_linear(k3, H2, H3),
        "l4": init_linear(k4, H3, N_OUT),
    }


def quantize_int8_per_channel(w):
    """Symmetric per-output-channel int8 quantization (storage format only)."""
    amax = jnp.max(jnp.abs(w), axis=0, keepdims=True)            # (1, out)
    scale = jnp.maximum(amax, 1e-8) / 127.0
    q = jnp.clip(jnp.round(w / scale), -127.0, 127.0).astype(jnp.int8)
    return q, scale.astype(jnp.float32)


def prepare_params(params_f32):
    """One-time prep: int8 w1/w2 (halves dominant HBM stream), bf16 w3/w4,
    layer-4 padded to 128 output lanes."""
    w1, b1 = params_f32["l1"]
    w2, b2 = params_f32["l2"]
    w3, b3 = params_f32["l3"]
    w4, b4 = params_f32["l4"]
    q1, s1 = quantize_int8_per_channel(w1)
    q2, s2 = quantize_int8_per_channel(w2)
    w4p = jnp.zeros((H3, N_OUT_PADDED), jnp.float32).at[:, :N_OUT].set(w4)
    b4p = jnp.zeros((1, N_OUT_PADDED), jnp.float32).at[:, :N_OUT].set(b4)
    return {
        "w1": q1, "s1": s1, "b1": b1,
        "w2": q2, "s2": s2, "b2": b2,
        "w3": w3.astype(jnp.bfloat16), "b3": b3,
        "w4": w4p.astype(jnp.bfloat16), "b4": b4p,
    }


# ----------------------------- reference ------------------------------------

def ref_forward(params, x_nchw):
    """Pure-JAX reference that mirrors the kernel's quantization/rounding points."""
    hp = jax.lax.Precision.HIGHEST
    x = x_nchw.reshape(x_nchw.shape[0], -1)

    h = x.astype(jnp.bfloat16).astype(jnp.float32)
    w1 = params["w1"].astype(jnp.bfloat16).astype(jnp.float32)
    h = jnp.dot(h, w1, precision=hp) * params["s1"] + params["b1"]
    h = jnp.maximum(h, 0.0)

    h = h.astype(jnp.bfloat16).astype(jnp.float32)
    w2 = params["w2"].astype(jnp.bfloat16).astype(jnp.float32)
    h = jnp.dot(h, w2, precision=hp) * params["s2"] + params["b2"]
    h = jnp.maximum(h, 0.0)

    h = h.astype(jnp.bfloat16).astype(jnp.float32)
    h = jnp.dot(h, params["w3"].astype(jnp.float32), precision=hp) + params["b3"]
    h = jnp.maximum(h, 0.0)

    h = h.astype(jnp.bfloat16).astype(jnp.float32)
    h = jnp.dot(h, params["w4"].astype(jnp.float32), precision=hp) + params["b4"]
    return h[:, :N_OUT]


if __name__ == "__main__":
    root = jax.random.PRNGKey(0)
    k_params, k_x = jax.random.split(root)

    params = prepare_params(init_params(k_params))
    x = jax.random.uniform(k_x, (2, 1, 32, 32), jnp.float32)  # NCHW, B=2

    out = network_forward(params, x)
    jax.block_until_ready(out)

    ref = ref_forward(params, x)
    assert out.shape == (2, N_OUT), out.shape
    max_err = float(jnp.max(jnp.abs(out - ref)))
    assert jnp.allclose(out, ref, atol=2e-2, rtol=2e-2), max_err

    print("KERNEL_OK")
</pallas_src>

<mosaic_0001>
module attributes {stable_mosaic.version = 11 : i64} {
  func.func @fused_mlp_kernel(%arg0: i32, %arg1: memref<8x1024xf32, #tpu.memory_space<vmem>>, %arg2: memref<1024x2048xi8, #tpu.memory_space<vmem>>, %arg3: memref<1x2048xf32, #tpu.memory_space<vmem>>, %arg4: memref<1x2048xf32, #tpu.memory_space<vmem>>, %arg5: memref<2048x512xi8, #tpu.memory_space<vmem>>, %arg6: memref<1x512xf32, #tpu.memory_space<vmem>>, %arg7: memref<1x512xf32, #tpu.memory_space<vmem>>, %arg8: memref<512x128xbf16, #tpu.memory_space<vmem>>, %arg9: memref<1x128xf32, #tpu.memory_space<vmem>>, %arg10: memref<128x128xbf16, #tpu.memory_space<vmem>>, %arg11: memref<1x128xf32, #tpu.memory_space<vmem>>, %arg12: memref<8x128xf32, #tpu.memory_space<vmem>>) attributes {dimension_semantics = [#tpu.dimension_semantics<parallel>], iteration_bounds = array<i64: 1>, scalar_prefetch = 0 : i64, scratch_operands = 0 : i64, tpu.core_type = #tpu.core_type<tc>, window_params = [{transform_indices = @transform_0, window_bounds = array<i64: 8, 1024>}, {pipeline_mode = #tpu.pipeline_mode<synchronous>, transform_indices = @transform_1, window_bounds = array<i64: 1024, 2048>}, {pipeline_mode = #tpu.pipeline_mode<synchronous>, transform_indices = @transform_2, window_bounds = array<i64: 1, 2048>}, {pipeline_mode = #tpu.pipeline_mode<synchronous>, transform_indices = @transform_3, window_bounds = array<i64: 1, 2048>}, {pipeline_mode = #tpu.pipeline_mode<synchronous>, transform_indices = @transform_4, window_bounds = array<i64: 2048, 512>}, {pipeline_mode = #tpu.pipeline_mode<synchronous>, transform_indices = @transform_5, window_bounds = array<i64: 1, 512>}, {pipeline_mode = #tpu.pipeline_mode<synchronous>, transform_indices = @transform_6, window_bounds = array<i64: 1, 512>}, {pipeline_mode = #tpu.pipeline_mode<synchronous>, transform_indices = @transform_7, window_bounds = array<i64: 512, 128>}, {pipeline_mode = #tpu.pipeline_mode<synchronous>, transform_indices = @transform_8, window_bounds = array<i64: 1, 128>}, {pipeline_mode = #tpu.pipeline_mode<synchronous>, transform_indices = @transform_9, window_bounds = array<i64: 128, 128>}, {pipeline_mode = #tpu.pipeline_mode<synchronous>, transform_indices = @transform_10, window_bounds = array<i64: 1, 128>}, {transform_indices = @transform_11, window_bounds = array<i64: 8, 128>}]} {
    %c0 = arith.constant 0 : index
    %c0_0 = arith.constant 0 : index
    %0 = vector.load %arg1[%c0, %c0_0] : memref<8x1024xf32, #tpu.memory_space<vmem>>, vector<8x1024xf32>
    %1 = arith.truncf %0 : vector<8x1024xf32> to vector<8x1024xbf16>
    %c0_1 = arith.constant 0 : index
    %c0_2 = arith.constant 0 : index
    %2 = vector.load %arg2[%c0_1, %c0_2] : memref<1024x2048xi8, #tpu.memory_space<vmem>>, vector<1024x2048xi8>
    %3 = arith.sitofp %2 : vector<1024x2048xi8> to vector<1024x2048xbf16>
    %cst = arith.constant dense<0.000000e+00> : vector<8x2048xf32>
    %4 = tpu.matmul %1, %3, %cst {dimension_numbers = #tpu.dot_dimension_numbers<[1], [0], [0], [1], [0, 0, 1, 1], [], []>} : vector<8x1024xbf16>, vector<1024x2048xbf16>, vector<8x2048xf32> -> vector<8x2048xf32>
    %c0_3 = arith.constant 0 : index
    %c0_4 = arith.constant 0 : index
    %5 = vector.load %arg3[%c0_3, %c0_4] : memref<1x2048xf32, #tpu.memory_space<vmem>>, vector<1x2048xf32>
    %6 = vector.broadcast %5 : vector<1x2048xf32> to vector<8x2048xf32>
    %7 = arith.mulf %4, %6 : vector<8x2048xf32>
    %c0_5 = arith.constant 0 : index
    %c0_6 = arith.constant 0 : index
    %8 = vector.load %arg4[%c0_5, %c0_6] : memref<1x2048xf32, #tpu.memory_space<vmem>>, vector<1x2048xf32>
    %9 = vector.broadcast %8 : vector<1x2048xf32> to vector<8x2048xf32>
    %10 = arith.addf %7, %9 : vector<8x2048xf32>
    %cst_7 = arith.constant 0.000000e+00 : f32
    %11 = vector.broadcast %cst_7 : f32 to vector<8x2048xf32>
    %12 = arith.maximumf %10, %11 : vector<8x2048xf32>
    %c0_8 = arith.constant 0 : index
    %c0_9 = arith.constant 0 : index
    %13 = vector.load %arg5[%c0_8, %c0_9] : memref<2048x512xi8, #tpu.memory_space<vmem>>, vector<2048x512xi8>
    %14 = arith.sitofp %13 : vector<2048x512xi8> to vector<2048x512xbf16>
    %15 = arith.truncf %12 : vector<8x2048xf32> to vector<8x2048xbf16>
    %cst_10 = arith.constant dense<0.000000e+00> : vector<8x512xf32>
    %16 = tpu.matmul %15, %14, %cst_10 {dimension_numbers = #tpu.dot_dimension_numbers<[1], [0], [0], [1], [0, 0, 1, 1], [], []>} : vector<8x2048xbf16>, vector<2048x512xbf16>, vector<8x512xf32> -> vector<8x512xf32>
    %c0_11 = arith.constant 0 : index
    %c0_12 = arith.constant 0 : index
    %17 = vector.load %arg6[%c0_11, %c0_12] : memref<1x512xf32, #tpu.memory_space<vmem>>, vector<1x512xf32>
    %18 = vector.broadcast %17 : vector<1x512xf32> to vector<8x512xf32>
    %19 = arith.mulf %16, %18 : vector<8x512xf32>
    %c0_13 = arith.constant 0 : index
    %c0_14 = arith.constant 0 : index
    %20 = vector.load %arg7[%c0_13, %c0_14] : memref<1x512xf32, #tpu.memory_space<vmem>>, vector<1x512xf32>
    %21 = vector.broadcast %20 : vector<1x512xf32> to vector<8x512xf32>
    %22 = arith.addf %19, %21 : vector<8x512xf32>
    %cst_15 = arith.constant 0.000000e+00 : f32
    %23 = vector.broadcast %cst_15 : f32 to vector<8x512xf32>
    %24 = arith.maximumf %22, %23 : vector<8x512xf32>
    %25 = arith.truncf %24 : vector<8x512xf32> to vector<8x512xbf16>
    %c0_16 = arith.constant 0 : index
    %c0_17 = arith.constant 0 : index
    %26 = vector.load %arg8[%c0_16, %c0_17] : memref<512x128xbf16, #tpu.memory_space<vmem>>, vector<512x128xbf16>
    %cst_18 = arith.constant dense<0.000000e+00> : vector<8x128xf32>
    %27 = tpu.matmul %25, %26, %cst_18 {dimension_numbers = #tpu.dot_dimension_numbers<[1], [0], [0], [1], [0, 0, 1, 1], [], []>} : vector<8x512xbf16>, vector<512x128xbf16>, vector<8x128xf32> -> vector<8x128xf32>
    %c0_19 = arith.constant 0 : index
    %c0_20 = arith.constant 0 : index
    %28 = vector.load %arg9[%c0_19, %c0_20] : memref<1x128xf32, #tpu.memory_space<vmem>>, vector<1x128xf32>
    %29 = vector.broadcast %28 : vector<1x128xf32> to vector<8x128xf32>
    %30 = arith.addf %27, %29 : vector<8x128xf32>
    %cst_21 = arith.constant 0.000000e+00 : f32
    %31 = vector.broadcast %cst_21 : f32 to vector<8x128xf32>
    %32 = arith.maximumf %30, %31 : vector<8x128xf32>
    %33 = arith.truncf %32 : vector<8x128xf32> to vector<8x128xbf16>
    %c0_22 = arith.constant 0 : index
    %c0_23 = arith.constant 0 : index
    %34 = vector.load %arg10[%c0_22, %c0_23] : memref<128x128xbf16, #tpu.memory_space<vmem>>, vector<128x128xbf16>
    %cst_24 = arith.constant dense<0.000000e+00> : vector<8x128xf32>
    %35 = tpu.matmul %33, %34, %cst_24 {dimension_numbers = #tpu.dot_dimension_numbers<[1], [0], [0], [1], [0, 0, 1, 1], [], []>} : vector<8x128xbf16>, vector<128x128xbf16>, vector<8x128xf32> -> vector<8x128xf32>
    %c0_25 = arith.constant 0 : index
    %c0_26 = arith.constant 0 : index
    %36 = vector.load %arg11[%c0_25, %c0_26] : memref<1x128xf32, #tpu.memory_space<vmem>>, vector<1x128xf32>
    %37 = vector.broadcast %36 : vector<1x128xf32> to vector<8x128xf32>
    %38 = arith.addf %35, %37 : vector<8x128xf32>
    %c0_27 = arith.constant 0 : index
    %c0_28 = arith.constant 0 : index
    %39 = vector.load %arg12[%c0_27, %c0_28] : memref<8x128xf32, #tpu.memory_space<vmem>>, vector<8x128xf32>
    tpu.vector_store %arg12[%c0_27, %c0_28], %38 {strides = array<i32>} : memref<8x128xf32, #tpu.memory_space<vmem>>, vector<8x128xf32>,
    return
  }
  func.func @transform_0(%arg0: i32) -> (i32, i32) {
    %c0_i32 = arith.constant 0 : i32
    %c0_i32_0 = arith.constant 0 : i32
    return %arg0, %c0_i32 : i32, i32
  }
  func.func @transform_1(%arg0: i32) -> (i32, i32) {
    %c0_i32 = arith.constant 0 : i32
    %c0_i32_0 = arith.constant 0 : i32
    %c0_i32_1 = arith.constant 0 : i32
    return %c0_i32, %c0_i32_0 : i32, i32
  }
  func.func @transform_2(%arg0: i32) -> (i32, i32) {
    %c0_i32 = arith.constant 0 : i32
    %c0_i32_0 = arith.constant 0 : i32
    %c0_i32_1 = arith.constant 0 : i32
    return %c0_i32, %c0_i32_0 : i32, i32
  }
  func.func @transform_3(%arg0: i32) -> (i32, i32) {
    %c0_i32 = arith.constant 0 : i32
    %c0_i32_0 = arith.constant 0 : i32
    %c0_i32_1 = arith.constant 0 : i32
    return %c0_i32, %c0_i32_0 : i32, i32
  }
  func.func @transform_4(%arg0: i32) -> (i32, i32) {
    %c0_i32 = arith.constant 0 : i32
    %c0_i32_0 = arith.constant 0 : i32
    %c0_i32_1 = arith.constant 0 : i32
    return %c0_i32, %c0_i32_0 : i32, i32
  }
  func.func @transform_5(%arg0: i32) -> (i32, i32) {
    %c0_i32 = arith.constant 0 : i32
    %c0_i32_0 = arith.constant 0 : i32
    %c0_i32_1 = arith.constant 0 : i32
    return %c0_i32, %c0_i32_0 : i32, i32
  }
  func.func @transform_6(%arg0: i32) -> (i32, i32) {
    %c0_i32 = arith.constant 0 : i32
    %c0_i32_0 = arith.constant 0 : i32
    %c0_i32_1 = arith.constant 0 : i32
    return %c0_i32, %c0_i32_0 : i32, i32
  }
  func.func @transform_7(%arg0: i32) -> (i32, i32) {
    %c0_i32 = arith.constant 0 : i32
    %c0_i32_0 = arith.constant 0 : i32
    %c0_i32_1 = arith.constant 0 : i32
    return %c0_i32, %c0_i32_0 : i32, i32
  }
  func.func @transform_8(%arg0: i32) -> (i32, i32) {
    %c0_i32 = arith.constant 0 : i32
    %c0_i32_0 = arith.constant 0 : i32
    %c0_i32_1 = arith.constant 0 : i32
    return %c0_i32, %c0_i32_0 : i32, i32
  }
  func.func @transform_9(%arg0: i32) -> (i32, i32) {
    %c0_i32 = arith.constant 0 : i32
    %c0_i32_0 = arith.constant 0 : i32
    %c0_i32_1 = arith.constant 0 : i32
    return %c0_i32, %c0_i32_0 : i32, i32
  }
  func.func @transform_10(%arg0: i32) -> (i32, i32) {
    %c0_i32 = arith.constant 0 : i32
    %c0_i32_0 = arith.constant 0 : i32
    %c0_i32_1 = arith.constant 0 : i32
    return %c0_i32, %c0_i32_0 : i32, i32
  }
  func.func @transform_11(%arg0: i32) -> (i32, i32) {
    %c0_i32 = arith.constant 0 : i32
    %c0_i32_0 = arith.constant 0 : i32
    return %arg0, %c0_i32 : i32, i32
  }
}

</mosaic_0001>

<llo_original>
// kernel: network_forward.1
$region0: #{network_forward.1}
  #allocation0 [shape = 'u32[]', space=smem, size = 0x4, offset = 0x4, fixed_abs, tag = 'smem constant byte address 0x4 - core index']
  #allocation1 [shape = 'u32[144,128]{1,0:T(1,128)}', space=vmem, size = 0x12000, scoped, tag = 'internal scratch']
  %s0 = inlined_call_operand.vmem [shape: f32[8,1024], index: 0, kind: input, shape index: {}]
  %s1 = inlined_call_operand.hbm [shape: s8[1024,2048], index: 1, kind: input, shape index: {}]
  %s2 = inlined_call_operand.hbm [shape: f32[1,2048], index: 2, kind: input, shape index: {}]
  %s3 = inlined_call_operand.hbm [shape: f32[1,2048], index: 3, kind: input, shape index: {}]
  %s4 = inlined_call_operand.hbm [shape: s8[2048,512], index: 4, kind: input, shape index: {}]
  %s5 = inlined_call_operand.hbm [shape: f32[1,512], index: 5, kind: input, shape index: {}]
  %s6 = inlined_call_operand.hbm [shape: f32[1,512], index: 6, kind: input, shape index: {}]
  %s7 = inlined_call_operand.hbm [shape: bf16[512,128], index: 7, kind: input, shape index: {}]
  %s8 = inlined_call_operand.hbm [shape: f32[1,128], index: 8, kind: input, shape index: {}]
  %s9 = inlined_call_operand.hbm [shape: bf16[128,128], index: 9, kind: input, shape index: {}]
  %s10 = inlined_call_operand.hbm [shape: f32[1,128], index: 10, kind: input, shape index: {}]
  %s11 = inlined_call_operand.vmem [shape: f32[8,128], index: 11, kind: output, shape index: {}]
  %s12 = sld [smem:[#allocation0]]
  $region94: #{network_forward.1} parent=0
    _
  %s14 = ssub.s32 1, %s12
  %s15 = scalar_select 0, %s14, %s12
  $region1: #{network_forward.1} parent=0
    #allocation2 [shape = 'u8[2097152]{0}', space=vmem, size = 0x200000, scoped, tag = 'input window, operand 1, single buffered']
    #allocation3 [shape = 's32[1]{0}', space=sflag, size = 0x4, scoped, tag = 'scoped memory for network_forward.1']
    #allocation4 [shape = 'u8[8192]{0}', space=vmem, size = 0x2000, scoped, tag = 'input window, operand 2, single buffered']
    #allocation5 [shape = 's32[1]{0}', space=sflag, size = 0x4, scoped, tag = 'scoped memory for network_forward.1']
    #allocation6 [shape = 'u8[8192]{0}', space=vmem, size = 0x2000, scoped, tag = 'input window, operand 3, single buffered']
    #allocation7 [shape = 'u8[1048576]{0}', space=vmem, size = 0x100000, scoped, tag = 'input window, operand 4, single buffered']
    #allocation8 [shape = 's32[1]{0}', space=sflag, size = 0x4, scoped, tag = 'scoped memory for network_forward.1']
    #allocation9 [shape = 'u8[2048]{0}', space=vmem, size = 0x800, scoped, tag = 'input window, operand 5, single buffered']
    #allocation10 [shape = 'u8[2048]{0}', space=vmem, size = 0x800, scoped, tag = 'input window, operand 6, single buffered']
    #allocation11 [shape = 's32[1]{0}', space=sflag, size = 0x4, scoped, tag = 'scoped memory for network_forward.1']
    #allocation12 [shape = 'u8[131072]{0}', space=vmem, size = 0x20000, scoped, tag = 'input window, operand 7, single buffered']
    #allocation13 [shape = 'u8[512]{0}', space=vmem, size = 0x400, scoped, tag = 'input window, operand 8, single buffered']
    #allocation14 [shape = 's32[1]{0}', space=sflag, size = 0x4, scoped, tag = 'scoped memory for network_forward.1']
    #allocation15 [shape = 'u8[32768]{0}', space=vmem, size = 0x8000, scoped, tag = 'input window, operand 9, single buffered']
    #allocation16 [shape = 'u8[512]{0}', space=vmem, size = 0x400, scoped, tag = 'input window, operand 10, single buffered']
    #allocation17 [shape = 's32[1]{0}', space=sflag, size = 0x4, scoped, tag = 'scoped memory for network_forward.1']
    %16 = vsyncpa [#allocation3], 0
    %17 = vsyncpa [#allocation5], 0
    %18 = vsyncpa [#allocation8], 0
    %19 = vsyncpa [#allocation11], 0
    %20 = vsyncpa [#allocation14], 0
    %21 = vsyncpa [#allocation17], 0
    // Predicated region
    $region2: #{network_forward.1} parent=1 // pred_check
      _
    $region3: #{network_forward.1} parent=1 // pred_check_branch
      %23 = sbr.rel (0) target = $region5
    $region4: #{network_forward.1} parent=1 // pred_region
      _
    $region5: #{network_forward.1} parent=1 // pred_fallthru
      _
    // Predicated region
    $region6: #{network_forward.1} parent=1 // pred_check
      _
    $region7: #{network_forward.1} parent=1 // pred_check_branch
      %25 = sbr.rel (0) target = $region9
    $region8: #{network_forward.1} parent=1 // pred_region
      %s27 = ssub.s32 65536, 65536
      %28 = vsyncadd [#allocation3], %s27
      %s29 = sshll.u32 [#allocation2], 4
      %s30 = int_to_ptr.vmem [resolvable:$true] %s29
      %35 = dma.hbm_to_vmem [thread:$0]  %s1, 65536, %s30, [#allocation3], 2048, 2048, 128
    $region9: #{network_forward.1} parent=1 // pred_fallthru
      _
    // Predicated region
    $region10: #{network_forward.1} parent=1 // pred_check
      _
    $region11: #{network_forward.1} parent=1 // pred_check_branch
      %37 = sbr.rel (0) target = $region13
    $region12: #{network_forward.1} parent=1 // pred_region
      %s39 = ssub.s32 256, 256
      %40 = vsyncadd [#allocation5], %s39
      %s42 = sshll.u32 [#allocation4], 4
      %s43 = int_to_ptr.vmem [resolvable:$true] %s42
      %45 = dma.hbm_to_vmem [thread:$0]  %s2, 256, %s43, [#allocation5]
    $region13: #{network_forward.1} parent=1 // pred_fallthru
      _
    // Predicated region
    $region14: #{network_forward.1} parent=1 // pred_check
      _
    $region15: #{network_forward.1} parent=1 // pred_check_branch
      %47 = sbr.rel (0) target = $region17
    $region16: #{network_forward.1} parent=1 // pred_region
      %s49 = ssub.s32 256, 256
      %50 = vsyncadd [#allocation5], %s49
      %s52 = sshll.u32 [#allocation6], 4
      %s53 = int_to_ptr.vmem [resolvable:$true] %s52
      %55 = dma.hbm_to_vmem [thread:$0]  %s3, 256, %s53, [#allocation5]
    $region17: #{network_forward.1} parent=1 // pred_fallthru
      _
    // Predicated region
    $region18: #{network_forward.1} parent=1 // pred_check
      _
    $region19: #{network_forward.1} parent=1 // pred_check_branch
      %57 = sbr.rel (0) target = $region21
    $region20: #{network_forward.1} parent=1 // pred_region
      %s59 = ssub.s32 32768, 32768
      %60 = vsyncadd [#allocation8], %s59
      %s61 = sshll.u32 [#allocation7], 4
      %s62 = int_to_ptr.vmem [resolvable:$true] %s61
      %67 = dma.hbm_to_vmem [thread:$0]  %s4, 32768, %s62, [#allocation8], 512, 512, 32
    $region21: #{network_forward.1} parent=1 // pred_fallthru
      _
    // Predicated region
    $region22: #{network_forward.1} parent=1 // pred_check
      _
    $region23: #{network_forward.1} parent=1 // pred_check_branch
      %69 = sbr.rel (0) target = $region25
    $region24: #{network_forward.1} parent=1 // pred_region
      %s71 = ssub.s32 64, 64
      %72 = vsyncadd [#allocation8], %s71
      %s74 = sshll.u32 [#allocation9], 4
      %s75 = int_to_ptr.vmem [resolvable:$true] %s74
      %77 = dma.hbm_to_vmem [thread:$0]  %s5, 64, %s75, [#allocation8]
    $region25: #{network_forward.1} parent=1 // pred_fallthru
      _
    // Predicated region
    $region26: #{network_forward.1} parent=1 // pred_check
      _
    $region27: #{network_forward.1} parent=1 // pred_check_branch
      %79 = sbr.rel (0) target = $region29
    $region28: #{network_forward.1} parent=1 // pred_region
      %s81 = ssub.s32 64, 64
      %82 = vsyncadd [#allocation11], %s81
      %s84 = sshll.u32 [#allocation10], 4
      %s85 = int_to_ptr.vmem [resolvable:$true] %s84
      %87 = dma.hbm_to_vmem [thread:$0]  %s6, 64, %s85, [#allocation11]
    $region29: #{network_forward.1} parent=1 // pred_fallthru
      _
    // Predicated region
    $region30: #{network_forward.1} parent=1 // pred_check
      _
    $region31: #{network_forward.1} parent=1 // pred_check_branch
      %89 = sbr.rel (0) target = $region33
    $region32: #{network_forward.1} parent=1 // pred_region
      %s91 = ssub.s32 4096, 4096
      %92 = vsyncadd [#allocation11], %s91
      %s93 = sshll.u32 [#allocation12], 4
      %s94 = int_to_ptr.vmem [resolvable:$true] %s93
      %99 = dma.hbm_to_vmem [thread:$0]  %s7, 4096, %s94, [#allocation11], 64, 64, 4
    $region33: #{network_forward.1} parent=1 // pred_fallthru
      _
    // Predicated region
    $region34: #{network_forward.1} parent=1 // pred_check
      _
    $region35: #{network_forward.1} parent=1 // pred_check_branch
      %101 = sbr.rel (0) target = $region37
    $region36: #{network_forward.1} parent=1 // pred_region
      %s103 = ssub.s32 16, 16
      %104 = vsyncadd [#allocation14], %s103
      %s106 = sshll.u32 [#allocation13], 4
      %s107 = int_to_ptr.vmem [resolvable:$true] %s106
      %109 = dma.hbm_to_vmem [thread:$0]  %s8, 16, %s107, [#allocation14]
    $region37: #{network_forward.1} parent=1 // pred_fallthru
      _
    // Predicated region
    $region38: #{network_forward.1} parent=1 // pred_check
      _
    $region39: #{network_forward.1} parent=1 // pred_check_branch
      %111 = sbr.rel (0) target = $region41
    $region40: #{network_forward.1} parent=1 // pred_region
      %s113 = ssub.s32 1024, 1024
      %114 = vsyncadd [#allocation14], %s113
      %s115 = sshll.u32 [#allocation15], 4
      %s116 = int_to_ptr.vmem [resolvable:$true] %s115
      %121 = dma.hbm_to_vmem [thread:$0]  %s9, 1024, %s116, [#allocation14], 64, 64, 4
    $region41: #{network_forward.1} parent=1 // pred_fallthru
      _
    // Predicated region
    $region42: #{network_forward.1} parent=1 // pred_check
      _
    $region43: #{network_forward.1} parent=1 // pred_check_branch
      %123 = sbr.rel (0) target = $region45
    $region44: #{network_forward.1} parent=1 // pred_region
      %s125 = ssub.s32 16, 16
      %126 = vsyncadd [#allocation17], %s125
      %s128 = sshll.u32 [#allocation16], 4
      %s129 = int_to_ptr.vmem [resolvable:$true] %s128
      %131 = dma.hbm_to_vmem [thread:$0]  %s10, 16, %s129, [#allocation17]
    $region45: #{network_forward.1} parent=1 // pred_fallthru
      _
    // Predicated region
    $region46: #{network_forward.1} parent=1 // pred_check
      _
    $region47: #{network_forward.1} parent=1 // pred_check_branch
      %133 = sbr.rel (0) target = $region49
    $region48: #{network_forward.1} parent=1 // pred_region
      %134 = dma.done [#allocation3], 65536
    $region49: #{network_forward.1} parent=1 // pred_fallthru
      _
    // Predicated region
    $region50: #{network_forward.1} parent=1 // pred_check
      _
    $region51: #{network_forward.1} parent=1 // pred_check_branch
      %136 = sbr.rel (0) target = $region53
    $region52: #{network_forward.1} parent=1 // pred_region
      %137 = dma.done [#allocation5], 256
    $region53: #{network_forward.1} parent=1 // pred_fallthru
      _
    // Predicated region
    $region54: #{network_forward.1} parent=1 // pred_check
      _
    $region55: #{network_forward.1} parent=1 // pred_check_branch
      %139 = sbr.rel (0) target = $region57
    $region56: #{network_forward.1} parent=1 // pred_region
      %140 = dma.done [#allocation5], 256
    $region57: #{network_forward.1} parent=1 // pred_fallthru
      _
    // Predicated region
    $region58: #{network_forward.1} parent=1 // pred_check
      _
    $region59: #{network_forward.1} parent=1 // pred_check_branch
      %142 = sbr.rel (0) target = $region61
    $region60: #{network_forward.1} parent=1 // pred_region
      %143 = dma.done [#allocation8], 32768
    $region61: #{network_forward.1} parent=1 // pred_fallthru
      _
    // Predicated region
    $region62: #{network_forward.1} parent=1 // pred_check
      _
    $region63: #{network_forward.1} parent=1 // pred_check_branch
      %145 = sbr.rel (0) target = $region65
    $region64: #{network_forward.1} parent=1 // pred_region
      %146 = dma.done [#allocation8], 64
    $region65: #{network_forward.1} parent=1 // pred_fallthru
      _
    // Predicated region
    $region66: #{network_forward.1} parent=1 // pred_check
      _
    $region67: #{network_forward.1} parent=1 // pred_check_branch
      %148 = sbr.rel (0) target = $region69
    $region68: #{network_forward.1} parent=1 // pred_region
      %149 = dma.done [#allocation11], 64
    $region69: #{network_forward.1} parent=1 // pred_fallthru
      _
    // Predicated region
    $region70: #{network_forward.1} parent=1 // pred_check
      _
    $region71: #{network_forward.1} parent=1 // pred_check_branch
      %151 = sbr.rel (0) target = $region73
    $region72: #{network_forward.1} parent=1 // pred_region
      %152 = dma.done [#allocation11], 4096
    $region73: #{network_forward.1} parent=1 // pred_fallthru
      _
    // Predicated region
    $region74: #{network_forward.1} parent=1 // pred_check
      _
    $region75: #{network_forward.1} parent=1 // pred_check_branch
      %154 = sbr.rel (0) target = $region77
    $region76: #{network_forward.1} parent=1 // pred_region
      %155 = dma.done [#allocation14], 16
    $region77: #{network_forward.1} parent=1 // pred_fallthru
      _
    // Predicated region
    $region78: #{network_forward.1} parent=1 // pred_check
      _
    $region79: #{network_forward.1} parent=1 // pred_check_branch
      %157 = sbr.rel (0) target = $region81
    $region80: #{network_forward.1} parent=1 // pred_region
      %158 = dma.done [#allocation14], 1024
    $region81: #{network_forward.1} parent=1 // pred_fallthru
      _
    // Predicated region
    $region82: #{network_forward.1} parent=1 // pred_check
      _
    $region83: #{network_forward.1} parent=1 // pred_check_branch
      %160 = sbr.rel (0) target = $region85
    $region84: #{network_forward.1} parent=1 // pred_region
      %161 = dma.done [#allocation17], 16
    $region85: #{network_forward.1} parent=1 // pred_fallthru
      _
    %v163 = vld [vmem:[%s0] sm:$0xff]
    %v164 = vld [vmem:[%s0 + $0x8] sm:$0xff]
    %v165 = vld [vmem:[%s0 + $0x10] sm:$0xff]
    %v166 = vld [vmem:[%s0 + $0x18] sm:$0xff]
    %v167 = vld [vmem:[%s0 + $0x20] sm:$0xff]
    %v168 = vld [vmem:[%s0 + $0x28] sm:$0xff]
    %v169 = vld [vmem:[%s0 + $0x30] sm:$0xff]
    %v170 = vld [vmem:[%s0 + $0x38] sm:$0xff]
    %v171 = vpack.c.bf16 %v163, %v163
    %v172 = vpack.c.bf16 %v164, %v164
    %v173 = vpack.c.bf16 %v165, %v165
    %v174 = vpack.c.bf16 %v166, %v166
    %v175 = vpack.c.bf16 %v167, %v167
    %v176 = vpack.c.bf16 %v168, %v168
    %v177 = vpack.c.bf16 %v169, %v169
    %v178 = vpack.c.bf16 %v170, %v170
    %v179 = vld [vmem:[#allocation2] sm:$0xff]
    %v180 = vld [vmem:[#allocation2 + $0x8] sm:$0xff]
    %v181 = vld [vmem:[#allocation2 + $0x10] sm:$0xff]
    %v182 = vld [vmem:[#allocation2 + $0x18] sm:$0xff]
    %v183 = vld [vmem:[#allocation2 + $0x20] sm:$0xff]
    %v184 = vld [vmem:[#allocation2 + $0x28] sm:$0xff]
    %v185 = vld [vmem:[#allocation2 + $0x30] sm:$0xff]
    %v186 = vld [vmem:[#allocation2 + $0x38] sm:$0xff]
    %v187 = vld [vmem:[#allocation2 + $0x40] sm:$0xff]
    %v188 = vld [vmem:[#allocation2 + $0x48] sm:$0xff]
    %v189 = vld [vmem:[#allocation2 + $0x50] sm:$0xff]
    %v190 = vld [vmem:[#allocation2 + $0x58] sm:$0xff]
    %v191 = vld [vmem:[#allocation2 + $0x60] sm:$0xff]
    %v192 = vld [vmem:[#allocation2 + $0x68] sm:$0xff]
    %v193 = vld [vmem:[#allocation2 + $0x70] sm:$0xff]
    %v194 = vld [vmem:[#allocation2 + $0x78] sm:$0xff]
    %v195 = vld [vmem:[#allocation2 + $0x80] sm:$0xff]
    %v196 = vld [vmem:[#allocation2 + $0x88] sm:$0xff]
    %v197 = vld [vmem:[#allocation2 + $0x90] sm:$0xff]
    %v198 = vld [vmem:[#allocation2 + $0x98] sm:$0xff]
    %v199 = vld [vmem:[#allocation2 + $0xa0] sm:$0xff]
    %v200 = vld [vmem:[#allocation2 + $0xa8] sm:$0xff]
    %v201 = vld [vmem:[#allocation2 + $0xb0] sm:$0xff]
    %v202 = vld [vmem:[#allocation2 + $0xb8] sm:$0xff]
    %v203 = vld [vmem:[#allocation2 + $0xc0] sm:$0xff]
    %v204 = vld [vmem:[#allocation2 + $0xc8] sm:$0xff]
    %v205 = vld [vmem:[#allocation2 + $0xd0] sm:$0xff]
    %v206 = vld [vmem:[#allocation2 + $0xd8] sm:$0xff]
    %v207 = vld [vmem:[#allocation2 + $0xe0] sm:$0xff]
    %v208 = vld [vmem:[#allocation2 + $0xe8] sm:$0xff]
    %v209 = vld [vmem:[#allocation2 + $0xf0] sm:$0xff]
    %v210 = vld [vmem:[#allocation2 + $0xf8] sm:$0xff]
    %v211 = vld [vmem:[#allocation2 + $0x100] sm:$0xff]
    %v212 = vld [vmem:[#allocation2 + $0x108] sm:$0xff]
    %v213 = vld [vmem:[#allocation2 + $0x110] sm:$0xff]
    %v214 = vld [vmem:[#allocation2 + $0x118] sm:$0xff]
    %v215 = vld [vmem:[#allocation2 + $0x120] sm:$0xff]
    %v216 = vld [vmem:[#allocation2 + $0x128] sm:$0xff]
    %v217 = vld [vmem:[#allocation2 + $0x130] sm:$0xff]
    %v218 = vld [vmem:[#allocation2 + $0x138] sm:$0xff]
    %v219 = vld [vmem:[#allocation2 + $0x140] sm:$0xff]
    %v220 = vld [vmem:[#allocation2 + $0x148] sm:$0xff]
    %v221 = vld [vmem:[#allocation2 + $0x150] sm:$0xff]
    %v222 = vld [vmem:[#allocation2 + $0x158] sm:$0xff]
    %v223 = vld [vmem:[#allocation2 + $0x160] sm:$0xff]
    %v224 = vld [vmem:[#allocation2 + $0x168] sm:$0xff]
    %v225 = vld [vmem:[#allocation2 + $0x170] sm:$0xff]
    %v226 = vld [vmem:[#allocation2 + $0x178] sm:$0xff]
    %v227 = vld [vmem:[#allocation2 + $0x180] sm:$0xff]
    %v228 = vld [vmem:[#allocation2 + $0x188] sm:$0xff]
    %v229 = vld [vmem:[#allocation2 + $0x190] sm:$0xff]
    %v230 = vld [vmem:[#allocation2 + $0x198] sm:$0xff]
    %v231 = vld [vmem:[#allocation2 + $0x1a0] sm:$0xff]
    %v232 = vld [vmem:[#allocation2 + $0x1a8] sm:$0xff]
    %v233 = vld [vmem:[#allocation2 + $0x1b0] sm:$0xff]
    %v234 = vld [vmem:[#allocation2 + $0x1b8] sm:$0xff]
    %v235 = vld [vmem:[#allocation2 + $0x1c0] sm:$0xff]
    %v236 = vld [vmem:[#allocation2 + $0x1c8] sm:$0xff]
    %v237 = vld [vmem:[#allocation2 + $0x1d0] sm:$0xff]
    %v238 = vld [vmem:[#allocation2 + $0x1d8] sm:$0xff]
    %v239 = vld [vmem:[#allocation2 + $0x1e0] sm:$0xff]
    %v240 = vld [vmem:[#allocation2 + $0x1e8] sm:$0xff]
    %v241 = vld [vmem:[#allocation2 + $0x1f0] sm:$0xff]
    %v242 = vld [vmem:[#allocation2 + $0x1f8] sm:$0xff]
    %v243 = vld [vmem:[#allocation2 + $0x200] sm:$0xff]
    %v244 = vld [vmem:[#allocation2 + $0x208] sm:$0xff]
    %v245 = vld [vmem:[#allocation2 + $0x210] sm:$0xff]
    %v246 = vld [vmem:[#allocation2 + $0x218] sm:$0xff]
    %v247 = vld [vmem:[#allocation2 + $0x220] sm:$0xff]
    %v248 = vld [vmem:[#allocation2 + $0x228] sm:$0xff]
    %v249 = vld [vmem:[#allocation2 + $0x230] sm:$0xff]
    %v250 = vld [vmem:[#allocation2 + $0x238] sm:$0xff]
    %v251 = vld [vmem:[#allocation2 + $0x240] sm:$0xff]
    %v252 = vld [vmem:[#allocation2 + $0x248] sm:$0xff]
    %v253 = vld [vmem:[#allocation2 + $0x250] sm:$0xff]
    %v254 = vld [vmem:[#allocation2 + $0x258] sm:$0xff]
    %v255 = vld [vmem:[#allocation2 + $0x260] sm:$0xff]
    %v256 = vld [vmem:[#allocation2 + $0x268] sm:$0xff]
    %v257 = vld [vmem:[#allocation2 + $0x270] sm:$0xff]
    %v258 = vld [vmem:[#allocation2 + $0x278] sm:$0xff]
    %v259 = vld [vmem:[#allocation2 + $0x280] sm:$0xff]
    %v260 = vld [vmem:[#allocation2 + $0x288] sm:$0xff]
    %v261 = vld [vmem:[#allocation2 + $0x290] sm:$0xff]
    %v262 = vld [vmem:[#allocation2 + $0x298] sm:$0xff]
    %v263 = vld [vmem:[#allocation2 + $0x2a0] sm:$0xff]
    %v264 = vld [vmem:[#allocation2 + $0x2a8] sm:$0xff]
    %v265 = vld [vmem:[#allocation2 + $0x2b0] sm:$0xff]
    %v266 = vld [vmem:[#allocation2 + $0x2b8] sm:$0xff]
    %v267 = vld [vmem:[#allocation2 + $0x2c0] sm:$0xff]
    %v268 = vld [vmem:[#allocation2 + $0x2c8] sm:$0xff]
    %v269 = vld [vmem:[#allocation2 + $0x2d0] sm:$0xff]
    %v270 = vld [vmem:[#allocation2 + $0x2d8] sm:$0xff]
    %v271 = vld [vmem:[#allocation2 + $0x2e0] sm:$0xff]
    %v272 = vld [vmem:[#allocation2 + $0x2e8] sm:$0xff]
    %v273 = vld [vmem:[#allocation2 + $0x2f0] sm:$0xff]
    %v274 = vld [vmem:[#allocation2 + $0x2f8] sm:$0xff]
    %v275 = vld [vmem:[#allocation2 + $0x300] sm:$0xff]
    %v276 = vld [vmem:[#allocation2 + $0x308] sm:$0xff]
    %v277 = vld [vmem:[#allocation2 + $0x310] sm:$0xff]
    %v278 = vld [vmem:[#allocation2 + $0x318] sm:$0xff]
    %v279 = vld [vmem:[#allocation2 + $0x320] sm:$0xff]
    %v280 = vld [vmem:[#allocation2 + $0x328] sm:$0xff]
    %v281 = vld [vmem:[#allocation2 + $0x330] sm:$0xff]
    %v282 = vld [vmem:[#allocation2 + $0x338] sm:$0xff]
    %v283 = vld [vmem:[#allocation2 + $0x340] sm:$0xff]
    %v284 = vld [vmem:[#allocation2 + $0x348] sm:$0xff]
    %v285 = vld [vmem:[#allocation2 + $0x350] sm:$0xff]
    %v286 = vld [vmem:[#allocation2 + $0x358] sm:$0xff]
    %v287 = vld [vmem:[#allocation2 + $0x360] sm:$0xff]
    %v288 = vld [vmem:[#allocation2 + $0x368] sm:$0xff]
    %v289 = vld [vmem:[#allocation2 + $0x370] sm:$0xff]
    %v290 = vld [vmem:[#allocation2 + $0x378] sm:$0xff]
    %v291 = vld [vmem:[#allocation2 + $0x380] sm:$0xff]
    %v292 = vld [vmem:[#allocation2 + $0x388] sm:$0xff]
    %v293 = vld [vmem:[#allocation2 + $0x390] sm:$0xff]
    %v294 = vld [vmem:[#allocation2 + $0x398] sm:$0xff]
    %v295 = vld [vmem:[#allocation2 + $0x3a0] sm:$0xff]
    %v296 = vld [vmem:[#allocation2 + $0x3a8] sm:$0xff]
    %v297 = vld [vmem:[#allocation2 + $0x3b0] sm:$0xff]
    %v298 = vld [vmem:[#allocation2 + $0x3b8] sm:$0xff]
    %v299 = vld [vmem:[#allocation2 + $0x3c0] sm:$0xff]
    %v300 = vld [vmem:[#allocation2 + $0x3c8] sm:$0xff]
    %v301 = vld [vmem:[#allocation2 + $0x3d0] sm:$0xff]
    %v302 = vld [vmem:[#allocation2 + $0x3d8] sm:$0xff]
    %v303 = vld [vmem:[#allocation2 + $0x3e0] sm:$0xff]
    %v304 = vld [vmem:[#allocation2 + $0x3e8] sm:$0xff]
    %v305 = vld [vmem:[#allocation2 + $0x3f0] sm:$0xff]
    %v306 = vld [vmem:[#allocation2 + $0x3f8] sm:$0xff]
    %v307 = vld [vmem:[#allocation2 + $0x400] sm:$0xff]
    %v308 = vld [vmem:[#allocation2 + $0x408] sm:$0xff]
    %v309 = vld [vmem:[#allocation2 + $0x410] sm:$0xff]
    %v310 = vld [vmem:[#allocation2 + $0x418] sm:$0xff]
    %v311 = vld [vmem:[#allocation2 + $0x420] sm:$0xff]
    %v312 = vld [vmem:[#allocation2 + $0x428] sm:$0xff]
    %v313 = vld [vmem:[#allocation2 + $0x430] sm:$0xff]
    %v314 = vld [vmem:[#allocation2 + $0x438] sm:$0xff]
    %v315 = vld [vmem:[#allocation2 + $0x440] sm:$0xff]
    %v316 = vld [vmem:[#allocation2 + $0x448] sm:$0xff]
    %v317 = vld [vmem:[#allocation2 + $0x450] sm:$0xff]
    %v318 = vld [vmem:[#allocation2 + $0x458] sm:$0xff]
    %v319 = vld [vmem:[#allocation2 + $0x460] sm:$0xff]
    %v320 = vld [vmem:[#allocation2 + $0x468] sm:$0xff]
    %v321 = vld [vmem:[#allocation2 + $0x470] sm:$0xff]
    %v322 = vld [vmem:[#allocation2 + $0x478] sm:$0xff]
    %v323 = vld [vmem:[#allocation2 + $0x480] sm:$0xff]
    %v324 = vld [vmem:[#allocation2 + $0x488] sm:$0xff]
    %v325 = vld [vmem:[#allocation2 + $0x490] sm:$0xff]
    %v326 = vld [vmem:[#allocation2 + $0x498] sm:$0xff]
    %v327 = vld [vmem:[#allocation2 + $0x4a0] sm:$0xff]
    %v328 = vld [vmem:[#allocation2 + $0x4a8] sm:$0xff]
    %v329 = vld [vmem:[#allocation2 + $0x4b0] sm:$0xff]
    %v330 = vld [vmem:[#allocation2 + $0x4b8] sm:$0xff]
    %v331 = vld [vmem:[#allocation2 + $0x4c0] sm:$0xff]
    %v332 = vld [vmem:[#allocation2 + $0x4c8] sm:$0xff]
    %v333 = vld [vmem:[#allocation2 + $0x4d0] sm:$0xff]
    %v334 = vld [vmem:[#allocation2 + $0x4d8] sm:$0xff]
    %v335 = vld [vmem:[#allocation2 + $0x4e0] sm:$0xff]
    %v336 = vld [vmem:[#allocation2 + $0x4e8] sm:$0xff]
    %v337 = vld [vmem:[#allocation2 + $0x4f0] sm:$0xff]
    %v338 = vld [vmem:[#allocation2 + $0x4f8] sm:$0xff]
    %v339 = vld [vmem:[#allocation2 + $0x500] sm:$0xff]
    %v340 = vld [vmem:[#allocation2 + $0x508] sm:$0xff]
    %v341 = vld [vmem:[#allocation2 + $0x510] sm:$0xff]
    %v342 = vld [vmem:[#allocation2 + $0x518] sm:$0xff]
    %v343 = vld [vmem:[#allocation2 + $0x520] sm:$0xff]
    %v344 = vld [vmem:[#allocation2 + $0x528] sm:$0xff]
    %v345 = vld [vmem:[#allocation2 + $0x530] sm:$0xff]
    %v346 = vld [vmem:[#allocation2 + $0x538] sm:$0xff]
    %v347 = vld [vmem:[#allocation2 + $0x540] sm:$0xff]
    %v348 = vld [vmem:[#allocation2 + $0x548] sm:$0xff]
    %v349 = vld [vmem:[#allocation2 + $0x550] sm:$0xff]
    %v350 = vld [vmem:[#allocation2 + $0x558] sm:$0xff]
    %v351 = vld [vmem:[#allocation2 + $0x560] sm:$0xff]
    %v352 = vld [vmem:[#allocation2 + $0x568] sm:$0xff]
    %v353 = vld [vmem:[#allocation2 + $0x570] sm:$0xff]
    %v354 = vld [vmem:[#allocation2 + $0x578] sm:$0xff]
    %v355 = vld [vmem:[#allocation2 + $0x580] sm:$0xff]
    %v356 = vld [vmem:[#allocation2 + $0x588] sm:$0xff]
    %v357 = vld [vmem:[#allocation2 + $0x590] sm:$0xff]
    %v358 = vld [vmem:[#allocation2 + $0x598] sm:$0xff]
    %v359 = vld [vmem:[#allocation2 + $0x5a0] sm:$0xff]
    %v360 = vld [vmem:[#allocation2 + $0x5a8] sm:$0xff]
    %v361 = vld [vmem:[#allocation2 + $0x5b0] sm:$0xff]
    %v362 = vld [vmem:[#allocation2 + $0x5b8] sm:$0xff]
    %v363 = vld [vmem:[#allocation2 + $0x5c0] sm:$0xff]
    %v364 = vld [vmem:[#allocation2 + $0x5c8] sm:$0xff]
    %v365 = vld [vmem:[#allocation2 + $0x5d0] sm:$0xff]
    %v366 = vld [vmem:[#allocation2 + $0x5d8] sm:$0xff]
    %v367 = vld [vmem:[#allocation2 + $0x5e0] sm:$0xff]
    %v368 = vld [vmem:[#allocation2 + $0x5e8] sm:$0xff]
    %v369 = vld [vmem:[#allocation2 + $0x5f0] sm:$0xff]
    %v370 = vld [vmem:[#allocation2 + $0x5f8] sm:$0xff]
    %v371 = vld [vmem:[#allocation2 + $0x600] sm:$0xff]
    %v372 = vld [vmem:[#allocation2 + $0x608] sm:$0xff]
    %v373 = vld [vmem:[#allocation2 + $0x610] sm:$0xff]
    %v374 = vld [vmem:[#allocation2 + $0x618] sm:$0xff]
    %v375 = vld [vmem:[#allocation2 + $0x620] sm:$0xff]
    %v376 = vld [vmem:[#allocation2 + $0x628] sm:$0xff]
    %v377 = vld [vmem:[#allocation2 + $0x630] sm:$0xff]
    %v378 = vld [vmem:[#allocation2 + $0x638] sm:$0xff]
    %v379 = vld [vmem:[#allocation2 + $0x640] sm:$0xff]
    %v380 = vld [vmem:[#allocation2 + $0x648] sm:$0xff]
    %v381 = vld [vmem:[#allocation2 + $0x650] sm:$0xff]
    %v382 = vld [vmem:[#allocation2 + $0x658] sm:$0xff]
    %v383 = vld [vmem:[#allocation2 + $0x660] sm:$0xff]
    %v384 = vld [vmem:[#allocation2 + $0x668] sm:$0xff]
    %v385 = vld [vmem:[#allocation2 + $0x670] sm:$0xff]
    %v386 = vld [vmem:[#allocation2 + $0x678] sm:$0xff]
    %v387 = vld [vmem:[#allocation2 + $0x680] sm:$0xff]
    %v388 = vld [vmem:[#allocation2 + $0x688] sm:$0xff]
    %v389 = vld [vmem:[#allocation2 + $0x690] sm:$0xff]
    %v390 = vld [vmem:[#allocation2 + $0x698] sm:$0xff]
    %v391 = vld [vmem:[#allocation2 + $0x6a0] sm:$0xff]
    %v392 = vld [vmem:[#allocation2 + $0x6a8] sm:$0xff]
    %v393 = vld [vmem:[#allocation2 + $0x6b0] sm:$0xff]
    %v394 = vld [vmem:[#allocation2 + $0x6b8] sm:$0xff]
    %v395 = vld [vmem:[#allocation2 + $0x6c0] sm:$0xff]
    %v396 = vld [vmem:[#allocation2 + $0x6c8] sm:$0xff]
    %v397 = vld [vmem:[#allocation2 + $0x6d0] sm:$0xff]
    %v398 = vld [vmem:[#allocation2 + $0x6d8] sm:$0xff]
    %v399 = vld [vmem:[#allocation2 + $0x6e0] sm:$0xff]
    %v400 = vld [vmem:[#allocation2 + $0x6e8] sm:$0xff]
    %v401 = vld [vmem:[#allocation2 + $0x6f0] sm:$0xff]
    %v402 = vld [vmem:[#allocation2 + $0x6f8] sm:$0xff]
    %v403 = vld [vmem:[#allocation2 + $0x700] sm:$0xff]
    %v404 = vld [vmem:[#allocation2 + $0x708] sm:$0xff]
    %v405 = vld [vmem:[#allocation2 + $0x710] sm:$0xff]
    %v406 = vld [vmem:[#allocation2 + $0x718] sm:$0xff]
    %v407 = vld [vmem:[#allocation2 + $0x720] sm:$0xff]
    %v408 = vld [vmem:[#allocation2 + $0x728] sm:$0xff]
    %v409 = vld [vmem:[#allocation2 + $0x730] sm:$0xff]
    %v410 = vld [vmem:[#allocation2 + $0x738] sm:$0xff]
    %v411 = vld [vmem:[#allocation2 + $0x740] sm:$0xff]
    %v412 = vld [vmem:[#allocation2 + $0x748] sm:$0xff]
    %v413 = vld [vmem:[#allocation2 + $0x750] sm:$0xff]
    %v414 = vld [vmem:[#allocation2 + $0x758] sm:$0xff]
    %v415 = vld [vmem:[#allocation2 + $0x760] sm:$0xff]
    %v416 = vld [vmem:[#allocation2 + $0x768] sm:$0xff]
    %v417 = vld [vmem:[#allocation2 + $0x770] sm:$0xff]
    %v418 = vld [vmem:[#allocation2 + $0x778] sm:$0xff]
    %v419 = vld [vmem:[#allocation2 + $0x780] sm:$0xff]
    %v420 = vld [vmem:[#allocation2 + $0x788] sm:$0xff]
    %v421 = vld [vmem:[#allocation2 + $0x790] sm:$0xff]
    %v422 = vld [vmem:[#allocation2 + $0x798] sm:$0xff]
    %v423 = vld [vmem:[#allocation2 + $0x7a0] sm:$0xff]
    %v424 = vld [vmem:[#allocation2 + $0x7a8] sm:$0xff]
    %v425 = vld [vmem:[#allocation2 + $0x7b0] sm:$0xff]
    %v426 = vld [vmem:[#allocation2 + $0x7b8] sm:$0xff]
    %v427 = vld [vmem:[#allocation2 + $0x7c0] sm:$0xff]
    %v428 = vld [vmem:[#allocation2 + $0x7c8] sm:$0xff]
    %v429 = vld [vmem:[#allocation2 + $0x7d0] sm:$0xff]
    %v430 = vld [vmem:[#allocation2 + $0x7d8] sm:$0xff]
    %v431 = vld [vmem:[#allocation2 + $0x7e0] sm:$0xff]
    %v432 = vld [vmem:[#allocation2 + $0x7e8] sm:$0xff]
    %v433 = vld [vmem:[#allocation2 + $0x7f0] sm:$0xff]
    %v434 = vld [vmem:[#allocation2 + $0x7f8] sm:$0xff]
    %v435 = vld [vmem:[#allocation2 + $0x800] sm:$0xff]
    %v436 = vld [vmem:[#allocation2 + $0x808] sm:$0xff]
    %v437 = vld [vmem:[#allocation2 + $0x810] sm:$0xff]
    %v438 = vld [vmem:[#allocation2 + $0x818] sm:$0xff]
    %v439 = vld [vmem:[#allocation2 + $0x820] sm:$0xff]
    %v440 = vld [vmem:[#allocation2 + $0x828] sm:$0xff]
    %v441 = vld [vmem:[#allocation2 + $0x830] sm:$0xff]
    %v442 = vld [vmem:[#allocation2 + $0x838] sm:$0xff]
    %v443 = vld [vmem:[#allocation2 + $0x840] sm:$0xff]
    %v444 = vld [vmem:[#allocation2 + $0x848] sm:$0xff]
    %v445 = vld [vmem:[#allocation2 + $0x850] sm:$0xff]
    %v446 = vld [vmem:[#allocation2 + $0x858] sm:$0xff]
    %v447 = vld [vmem:[#allocation2 + $0x860] sm:$0xff]
    %v448 = vld [vmem:[#allocation2 + $0x868] sm:$0xff]
    %v449 = vld [vmem:[#allocation2 + $0x870] sm:$0xff]
    %v450 = vld [vmem:[#allocation2 + $0x878] sm:$0xff]
    %v451 = vld [vmem:[#allocation2 + $0x880] sm:$0xff]
    %v452 = vld [vmem:[#allocation2 + $0x888] sm:$0xff]
    %v453 = vld [vmem:[#allocation2 + $0x890] sm:$0xff]
    %v454 = vld [vmem:[#allocation2 + $0x898] sm:$0xff]
    %v455 = vld [vmem:[#allocation2 + $0x8a0] sm:$0xff]
    %v456 = vld [vmem:[#allocation2 + $0x8a8] sm:$0xff]
    %v457 = vld [vmem:[#allocation2 + $0x8b0] sm:$0xff]
    %v458 = vld [vmem:[#allocation2 + $0x8b8] sm:$0xff]
    %v459 = vld [vmem:[#allocation2 + $0x8c0] sm:$0xff]
    %v460 = vld [vmem:[#allocation2 + $0x8c8] sm:$0xff]
    %v461 = vld [vmem:[#allocation2 + $0x8d0] sm:$0xff]
    %v462 = vld [vmem:[#allocation2 + $0x8d8] sm:$0xff]
    %v463 = vld [vmem:[#allocation2 + $0x8e0] sm:$0xff]
    %v464 = vld [vmem:[#allocation2 + $0x8e8] sm:$0xff]
    %v465 = vld [vmem:[#allocation2 + $0x8f0] sm:$0xff]
    %v466 = vld [vmem:[#allocation2 + $0x8f8] sm:$0xff]
    %v467 = vld [vmem:[#allocation2 + $0x900] sm:$0xff]
    %v468 = vld [vmem:[#allocation2 + $0x908] sm:$0xff]
    %v469 = vld [vmem:[#allocation2 + $0x910] sm:$0xff]
    %v470 = vld [vmem:[#allocation2 + $0x918] sm:$0xff]
    %v471 = vld [vmem:[#allocation2 + $0x920] sm:$0xff]
    %v472 = vld [vmem:[#allocation2 + $0x928] sm:$0xff]
    %v473 = vld [vmem:[#allocation2 + $0x930] sm:$0xff]
    %v474 = vld [vmem:[#allocation2 + $0x938] sm:$0xff]
    %v475 = vld [vmem:[#allocation2 + $0x940] sm:$0xff]
    %v476 = vld [vmem:[#allocation2 + $0x948] sm:$0xff]
    %v477 = vld [vmem:[#allocation2 + $0x950] sm:$0xff]
    %v478 = vld [vmem:[#allocation2 + $0x958] sm:$0xff]
    %v479 = vld [vmem:[#allocation2 + $0x960] sm:$0xff]
    %v480 = vld [vmem:[#allocation2 + $0x968] sm:$0xff]
    %v481 = vld [vmem:[#allocation2 + $0x970] sm:$0xff]
    %v482 = vld [vmem:[#allocation2 + $0x978] sm:$0xff]
    %v483 = vld [vmem:[#allocation2 + $0x980] sm:$0xff]
    %v484 = vld [vmem:[#allocation2 + $0x988] sm:$0xff]
    %v485 = vld [vmem:[#allocation2 + $0x990] sm:$0xff]
    %v486 = vld [vmem:[#allocation2 + $0x998] sm:$0xff]
    %v487 = vld [vmem:[#allocation2 + $0x9a0] sm:$0xff]
    %v488 = vld [vmem:[#allocation2 + $0x9a8] sm:$0xff]
    %v489 = vld [vmem:[#allocation2 + $0x9b0] sm:$0xff]
    %v490 = vld [vmem:[#allocation2 + $0x9b8] sm:$0xff]
    %v491 = vld [vmem:[#allocation2 + $0x9c0] sm:$0xff]
    %v492 = vld [vmem:[#allocation2 + $0x9c8] sm:$0xff]
    %v493 = vld [vmem:[#allocation2 + $0x9d0] sm:$0xff]
    %v494 = vld [vmem:[#allocation2 + $0x9d8] sm:$0xff]
    %v495 = vld [vmem:[#allocation2 + $0x9e0] sm:$0xff]
    %v496 = vld [vmem:[#allocation2 + $0x9e8] sm:$0xff]
    %v497 = vld [vmem:[#allocation2 + $0x9f0] sm:$0xff]
    %v498 = vld [vmem:[#allocation2 + $0x9f8] sm:$0xff]
    %v499 = vld [vmem:[#allocation2 + $0xa00] sm:$0xff]
    %v500 = vld [vmem:[#allocation2 + $0xa08] sm:$0xff]
    %v501 = vld [vmem:[#allocation2 + $0xa10] sm:$0xff]
    %v502 = vld [vmem:[#allocation2 + $0xa18] sm:$0xff]
    %v503 = vld [vmem:[#allocation2 + $0xa20] sm:$0xff]
    %v504 = vld [vmem:[#allocation2 + $0xa28] sm:$0xff]
    %v505 = vld [vmem:[#allocation2 + $0xa30] sm:$0xff]
    %v506 = vld [vmem:[#allocation2 + $0xa38] sm:$0xff]
    %v507 = vld [vmem:[#allocation2 + $0xa40] sm:$0xff]
    %v508 = vld [vmem:[#allocation2 + $0xa48] sm:$0xff]
    %v509 = vld [vmem:[#allocation2 + $0xa50] sm:$0xff]
    %v510 = vld [vmem:[#allocation2 + $0xa58] sm:$0xff]
    %v511 = vld [vmem:[#allocation2 + $0xa60] sm:$0xff]
    %v512 = vld [vmem:[#allocation2 + $0xa68] sm:$0xff]
    %v513 = vld [vmem:[#allocation2 + $0xa70] sm:$0xff]
    %v514 = vld [vmem:[#allocation2 + $0xa78] sm:$0xff]
    %v515 = vld [vmem:[#allocation2 + $0xa80] sm:$0xff]
    %v516 = vld [vmem:[#allocation2 + $0xa88] sm:$0xff]
    %v517 = vld [vmem:[#allocation2 + $0xa90] sm:$0xff]
    %v518 = vld [vmem:[#allocation2 + $0xa98] sm:$0xff]
    %v519 = vld [vmem:[#allocation2 + $0xaa0] sm:$0xff]
    %v520 = vld [vmem:[#allocation2 + $0xaa8] sm:$0xff]
    %v521 = vld [vmem:[#allocation2 + $0xab0] sm:$0xff]
    %v522 = vld [vmem:[#allocation2 + $0xab8] sm:$0xff]
    %v523 = vld [vmem:[#allocation2 + $0xac0] sm:$0xff]
    %v524 = vld [vmem:[#allocation2 + $0xac8] sm:$0xff]
    %v525 = vld [vmem:[#allocation2 + $0xad0] sm:$0xff]
    %v526 = vld [vmem:[#allocation2 + $0xad8] sm:$0xff]
    %v527 = vld [vmem:[#allocation2 + $0xae0] sm:$0xff]
    %v528 = vld [vmem:[#allocation2 + $0xae8] sm:$0xff]
    %v529 = vld [vmem:[#allocation2 + $0xaf0] sm:$0xff]
    %v530 = vld [vmem:[#allocation2 + $0xaf8] sm:$0xff]
    %v531 = vld [vmem:[#allocation2 + $0xb00] sm:$0xff]
    %v532 = vld [vmem:[#allocation2 + $0xb08] sm:$0xff]
    %v533 = vld [vmem:[#allocation2 + $0xb10] sm:$0xff]
    %v534 = vld [vmem:[#allocation2 + $0xb18] sm:$0xff]
    %v535 = vld [vmem:[#allocation2 + $0xb20] sm:$0xff]
    %v536 = vld [vmem:[#allocation2 + $0xb28] sm:$0xff]
    %v537 = vld [vmem:[#allocation2 + $0xb30] sm:$0xff]
    %v538 = vld [vmem:[#allocation2 + $0xb38] sm:$0xff]
    %v539 = vld [vmem:[#allocation2 + $0xb40] sm:$0xff]
    %v540 = vld [vmem:[#allocation2 + $0xb48] sm:$0xff]
    %v541 = vld [vmem:[#allocation2 + $0xb50] sm:$0xff]
    %v542 = vld [vmem:[#allocation2 + $0xb58] sm:$0xff]
    %v543 = vld [vmem:[#allocation2 + $0xb60] sm:$0xff]
    %v544 = vld [vmem:[#allocation2 + $0xb68] sm:$0xff]
    %v545 = vld [vmem:[#allocation2 + $0xb70] sm:$0xff]
    %v546 = vld [vmem:[#allocation2 + $0xb78] sm:$0xff]
    %v547 = vld [vmem:[#allocation2 + $0xb80] sm:$0xff]
    %v548 = vld [vmem:[#allocation2 + $0xb88] sm:$0xff]
    %v549 = vld [vmem:[#allocation2 + $0xb90] sm:$0xff]
    %v550 = vld [vmem:[#allocation2 + $0xb98] sm:$0xff]
    %v551 = vld [vmem:[#allocation2 + $0xba0] sm:$0xff]
    %v552 = vld [vmem:[#allocation2 + $0xba8] sm:$0xff]
    %v553 = vld [vmem:[#allocation2 + $0xbb0] sm:$0xff]
    %v554 = vld [vmem:[#allocation2 + $0xbb8] sm:$0xff]
    %v555 = vld [vmem:[#allocation2 + $0xbc0] sm:$0xff]
    %v556 = vld [vmem:[#allocation2 + $0xbc8] sm:$0xff]
    %v557 = vld [vmem:[#allocation2 + $0xbd0] sm:$0xff]
    %v558 = vld [vmem:[#allocation2 + $0xbd8] sm:$0xff]
    %v559 = vld [vmem:[#allocation2 + $0xbe0] sm:$0xff]
    %v560 = vld [vmem:[#allocation2 + $0xbe8] sm:$0xff]
    %v561 = vld [vmem:[#allocation2 + $0xbf0] sm:$0xff]
    %v562 = vld [vmem:[#allocation2 + $0xbf8] sm:$0xff]
    %v563 = vld [vmem:[#allocation2 + $0xc00] sm:$0xff]
    %v564 = vld [vmem:[#allocation2 + $0xc08] sm:$0xff]
    %v565 = vld [vmem:[#allocation2 + $0xc10] sm:$0xff]
    %v566 = vld [vmem:[#allocation2 + $0xc18] sm:$0xff]
    %v567 = vld [vmem:[#allocation2 + $0xc20] sm:$0xff]
    %v568 = vld [vmem:[#allocation2 + $0xc28] sm:$0xff]
    %v569 = vld [vmem:[#allocation2 + $0xc30] sm:$0xff]
    %v570 = vld [vmem:[#allocation2 + $0xc38] sm:$0xff]
    %v571 = vld [vmem:[#allocation2 + $0xc40] sm:$0xff]
    %v572 = vld [vmem:[#allocation2 + $0xc48] sm:$0xff]
    %v573 = vld [vmem:[#allocation2 + $0xc50] sm:$0xff]
    %v574 = vld [vmem:[#allocation2 + $0xc58] sm:$0xff]
    %v575 = vld [vmem:[#allocation2 + $0xc60] sm:$0xff]
    %v576 = vld [vmem:[#allocation2 + $0xc68] sm:$0xff]
    %v577 = vld [vmem:[#allocation2 + $0xc70] sm:$0xff]
    %v578 = vld [vmem:[#allocation2 + $0xc78] sm:$0xff]
    %v579 = vld [vmem:[#allocation2 + $0xc80] sm:$0xff]
    %v580 = vld [vmem:[#allocation2 + $0xc88] sm:$0xff]
    %v581 = vld [vmem:[#allocation2 + $0xc90] sm:$0xff]
    %v582 = vld [vmem:[#allocation2 + $0xc98] sm:$0xff]
    %v583 = vld [vmem:[#allocation2 + $0xca0] sm:$0xff]
    %v584 = vld [vmem:[#allocation2 + $0xca8] sm:$0xff]
    %v585 = vld [vmem:[#allocation2 + $0xcb0] sm:$0xff]
    %v586 = vld [vmem:[#allocation2 + $0xcb8] sm:$0xff]
    %v587 = vld [vmem:[#allocation2 + $0xcc0] sm:$0xff]
    %v588 = vld [vmem:[#allocation2 + $0xcc8] sm:$0xff]
    %v589 = vld [vmem:[#allocation2 + $0xcd0] sm:$0xff]
    %v590 = vld [vmem:[#allocation2 + $0xcd8] sm:$0xff]
    %v591 = vld [vmem:[#allocation2 + $0xce0] sm:$0xff]
    %v592 = vld [vmem:[#allocation2 + $0xce8] sm:$0xff]
    %v593 = vld [vmem:[#allocation2 + $0xcf0] sm:$0xff]
    %v594 = vld [vmem:[#allocation2 + $0xcf8] sm:$0xff]
    %v595 = vld [vmem:[#allocation2 + $0xd00] sm:$0xff]
    %v596 = vld [vmem:[#allocation2 + $0xd08] sm:$0xff]
    %v597 = vld [vmem:[#allocation2 + $0xd10] sm:$0xff]
    %v598 = vld [vmem:[#allocation2 + $0xd18] sm:$0xff]
    %v599 = vld [vmem:[#allocation2 + $0xd20] sm:$0xff]
    %v600 = vld [vmem:[#allocation2 + $0xd28] sm:$0xff]
    %v601 = vld [vmem:[#allocation2 + $0xd30] sm:$0xff]
    %v602 = vld [vmem:[#allocation2 + $0xd38] sm:$0xff]
    %v603 = vld [vmem:[#allocation2 + $0xd40] sm:$0xff]
    %v604 = vld [vmem:[#allocation2 + $0xd48] sm:$0xff]
    %v605 = vld [vmem:[#allocation2 + $0xd50] sm:$0xff]
    %v606 = vld [vmem:[#allocation2 + $0xd58] sm:$0xff]
    %v607 = vld [vmem:[#allocation2 + $0xd60] sm:$0xff]
    %v608 = vld [vmem:[#allocation2 + $0xd68] sm:$0xff]
    %v609 = vld [vmem:[#allocation2 + $0xd70] sm:$0xff]
    %v610 = vld [vmem:[#allocation2 + $0xd78] sm:$0xff]
    %v611 = vld [vmem:[#allocation2 + $0xd80] sm:$0xff]
    %v612 = vld [vmem:[#allocation2 + $0xd88] sm:$0xff]
    %v613 = vld [vmem:[#allocation2 + $0xd90] sm:$0xff]
    %v614 = vld [vmem:[#allocation2 + $0xd98] sm:$0xff]
    %v615 = vld [vmem:[#allocation2 + $0xda0] sm:$0xff]
    %v616 = vld [vmem:[#allocation2 + $0xda8] sm:$0xff]
    %v617 = vld [vmem:[#allocation2 + $0xdb0] sm:$0xff]
    %v618 = vld [vmem:[#allocation2 + $0xdb8] sm:$0xff]
    %v619 = vld [vmem:[#allocation2 + $0xdc0] sm:$0xff]
    %v620 = vld [vmem:[#allocation2 + $0xdc8] sm:$0xff]
    %v621 = vld [vmem:[#allocation2 + $0xdd0] sm:$0xff]
    %v622 = vld [vmem:[#allocation2 + $0xdd8] sm:$0xff]
    %v623 = vld [vmem:[#allocation2 + $0xde0] sm:$0xff]
    %v624 = vld [vmem:[#allocation2 + $0xde8] sm:$0xff]
    %v625 = vld [vmem:[#allocation2 + $0xdf0] sm:$0xff]
    %v626 = vld [vmem:[#allocation2 + $0xdf8] sm:$0xff]
    %v627 = vld [vmem:[#allocation2 + $0xe00] sm:$0xff]
    %v628 = vld [vmem:[#allocation2 + $0xe08] sm:$0xff]
    %v629 = vld [vmem:[#allocation2 + $0xe10] sm:$0xff]
    %v630 = vld [vmem:[#allocation2 + $0xe18] sm:$0xff]
    %v631 = vld [vmem:[#allocation2 + $0xe20] sm:$0xff]
    %v632 = vld [vmem:[#allocation2 + $0xe28] sm:$0xff]
    %v633 = vld [vmem:[#allocation2 + $0xe30] sm:$0xff]
    %v634 = vld [vmem:[#allocation2 + $0xe38] sm:$0xff]
    %v635 = vld [vmem:[#allocation2 + $0xe40] sm:$0xff]
    %v636 = vld [vmem:[#allocation2 + $0xe48] sm:$0xff]
    %v637 = vld [vmem:[#allocation2 + $0xe50] sm:$0xff]
    %v638 = vld [vmem:[#allocation2 + $0xe58] sm:$0xff]
    %v639 = vld [vmem:[#allocation2 + $0xe60] sm:$0xff]
    %v640 = vld [vmem:[#allocation2 + $0xe68] sm:$0xff]
    %v641 = vld [vmem:[#allocation2 + $0xe70] sm:$0xff]
    %v642 = vld [vmem:[#allocation2 + $0xe78] sm:$0xff]
    %v643 = vld [vmem:[#allocation2 + $0xe80] sm:$0xff]
    %v644 = vld [vmem:[#allocation2 + $0xe88] sm:$0xff]
    %v645 = vld [vmem:[#allocation2 + $0xe90] sm:$0xff]
    %v646 = vld [vmem:[#allocation2 + $0xe98] sm:$0xff]
    %v647 = vld [vmem:[#allocation2 + $0xea0] sm:$0xff]
    %v648 = vld [vmem:[#allocation2 + $0xea8] sm:$0xff]
    %v649 = vld [vmem:[#allocation2 + $0xeb0] sm:$0xff]
    %v650 = vld [vmem:[#allocation2 + $0xeb8] sm:$0xff]
    %v651 = vld [vmem:[#allocation2 + $0xec0] sm:$0xff]
    %v652 = vld [vmem:[#allocation2 + $0xec8] sm:$0xff]
    %v653 = vld [vmem:[#allocation2 + $0xed0] sm:$0xff]
    %v654 = vld [vmem:[#allocation2 + $0xed8] sm:$0xff]
    %v655 = vld [vmem:[#allocation2 + $0xee0] sm:$0xff]
    %v656 = vld [vmem:[#allocation2 + $0xee8] sm:$0xff]
    %v657 = vld [vmem:[#allocation2 + $0xef0] sm:$0xff]
    %v658 = vld [vmem:[#allocation2 + $0xef8] sm:$0xff]
    %v659 = vld [vmem:[#allocation2 + $0xf00] sm:$0xff]
    %v660 = vld [vmem:[#allocation2 + $0xf08] sm:$0xff]
    %v661 = vld [vmem:[#allocation2 + $0xf10] sm:$0xff]
    %v662 = vld [vmem:[#allocation2 + $0xf18] sm:$0xff]
    %v663 = vld [vmem:[#allocation2 + $0xf20] sm:$0xff]
    %v664 = vld [vmem:[#allocation2 + $0xf28] sm:$0xff]
    %v665 = vld [vmem:[#allocation2 + $0xf30] sm:$0xff]
    %v666 = vld [vmem:[#allocation2 + $0xf38] sm:$0xff]
    %v667 = vld [vmem:[#allocation2 + $0xf40] sm:$0xff]
    %v668 = vld [vmem:[#allocation2 + $0xf48] sm:$0xff]
    %v669 = vld [vmem:[#allocation2 + $0xf50] sm:$0xff]
    %v670 = vld [vmem:[#allocation2 + $0xf58] sm:$0xff]
    %v671 = vld [vmem:[#allocation2 + $0xf60] sm:$0xff]
    %v672 = vld [vmem:[#allocation2 + $0xf68] sm:$0xff]
    %v673 = vld [vmem:[#allocation2 + $0xf70] sm:$0xff]
    %v674 = vld [vmem:[#allocation2 + $0xf78] sm:$0xff]
    %v675 = vld [vmem:[#allocation2 + $0xf80] sm:$0xff]
    %v676 = vld [vmem:[#allocation2 + $0xf88] sm:$0xff]
    %v677 = vld [vmem:[#allocation2 + $0xf90] sm:$0xff]
    %v678 = vld [vmem:[#allocation2 + $0xf98] sm:$0xff]
    %v679 = vld [vmem:[#allocation2 + $0xfa0] sm:$0xff]
    %v680 = vld [vmem:[#allocation2 + $0xfa8] sm:$0xff]
    %v681 = vld [vmem:[#allocation2 + $0xfb0] sm:$0xff]
    %v682 = vld [vmem:[#allocation2 + $0xfb8] sm:$0xff]
    %v683 = vld [vmem:[#allocation2 + $0xfc0] sm:$0xff]
    %v684 = vld [vmem:[#allocation2 + $0xfc8] sm:$0xff]
    %v685 = vld [vmem:[#allocation2 + $0xfd0] sm:$0xff]
    %v686 = vld [vmem:[#allocation2 + $0xfd8] sm:$0xff]
    %v687 = vld [vmem:[#allocation2 + $0xfe0] sm:$0xff]
    %v688 = vld [vmem:[#allocation2 + $0xfe8] sm:$0xff]
    %v689 = vld [vmem:[#allocation2 + $0xff0] sm:$0xff]
    %v690 = vld [vmem:[#allocation2 + $0xff8] sm:$0xff]
    %v691 = vunpack.c.l.s8.bf16 %v179
    %v692 = vunpack.c.l.s8.bf16 %v180
    %v693 = vunpack.c.l.s8.bf16 %v181
    %v694 = vunpack.c.l.s8.bf16 %v182
    %v695 = vunpack.c.l.s8.bf16 %v183
    %v696 = vunpack.c.l.s8.bf16 %v184
    %v697 = vunpack.c.l.s8.bf16 %v185
    %v698 = vunpack.c.l.s8.bf16 %v186
    %v699 = vunpack.c.l.s8.bf16 %v187
    %v700 = vunpack.c.l.s8.bf16 %v188
    %v701 = vunpack.c.l.s8.bf16 %v189
    %v702 = vunpack.c.l.s8.bf16 %v190
    %v703 = vunpack.c.l.s8.bf16 %v191
    %v704 = vunpack.c.l.s8.bf16 %v192
    %v705 = vunpack.c.l.s8.bf16 %v193
    %v706 = vunpack.c.l.s8.bf16 %v194
    %v707 = vunpack.c.h.s8.bf16 %v179
    %v708 = vunpack.c.h.s8.bf16 %v180
    %v709 = vunpack.c.h.s8.bf16 %v181
    %v710 = vunpack.c.h.s8.bf16 %v182
    %v711 = vunpack.c.h.s8.bf16 %v183
    %v712 = vunpack.c.h.s8.bf16 %v184
    %v713 = vunpack.c.h.s8.bf16 %v185
    %v714 = vunpack.c.h.s8.bf16 %v186
    %v715 = vunpack.c.h.s8.bf16 %v187
    %v716 = vunpack.c.h.s8.bf16 %v188
    %v717 = vunpack.c.h.s8.bf16 %v189
    %v718 = vunpack.c.h.s8.bf16 %v190
    %v719 = vunpack.c.h.s8.bf16 %v191
    %v720 = vunpack.c.h.s8.bf16 %v192
    %v721 = vunpack.c.h.s8.bf16 %v193
    %v722 = vunpack.c.h.s8.bf16 %v194
    %v723 = vunpack.c.l.s8.bf16 %v195
    %v724 = vunpack.c.l.s8.bf16 %v196
    %v725 = vunpack.c.l.s8.bf16 %v197
    %v726 = vunpack.c.l.s8.bf16 %v198
    %v727 = vunpack.c.l.s8.bf16 %v199
    %v728 = vunpack.c.l.s8.bf16 %v200
    %v729 = vunpack.c.l.s8.bf16 %v201
    %v730 = vunpack.c.l.s8.bf16 %v202
    %v731 = vunpack.c.l.s8.bf16 %v203
    %v732 = vunpack.c.l.s8.bf16 %v204
    %v733 = vunpack.c.l.s8.bf16 %v205
    %v734 = vunpack.c.l.s8.bf16 %v206
    %v735 = vunpack.c.l.s8.bf16 %v207
    %v736 = vunpack.c.l.s8.bf16 %v208
    %v737 = vunpack.c.l.s8.bf16 %v209
    %v738 = vunpack.c.l.s8.bf16 %v210
    %v739 = vunpack.c.h.s8.bf16 %v195
    %v740 = vunpack.c.h.s8.bf16 %v196
    %v741 = vunpack.c.h.s8.bf16 %v197
    %v742 = vunpack.c.h.s8.bf16 %v198
    %v743 = vunpack.c.h.s8.bf16 %v199
    %v744 = vunpack.c.h.s8.bf16 %v200
    %v745 = vunpack.c.h.s8.bf16 %v201
    %v746 = vunpack.c.h.s8.bf16 %v202
    %v747 = vunpack.c.h.s8.bf16 %v203
    %v748 = vunpack.c.h.s8.bf16 %v204
    %v749 = vunpack.c.h.s8.bf16 %v205
    %v750 = vunpack.c.h.s8.bf16 %v206
    %v751 = vunpack.c.h.s8.bf16 %v207
    %v752 = vunpack.c.h.s8.bf16 %v208
    %v753 = vunpack.c.h.s8.bf16 %v209
    %v754 = vunpack.c.h.s8.bf16 %v210
    %v755 = vunpack.c.l.s8.bf16 %v211
    %v756 = vunpack.c.l.s8.bf16 %v212
    %v757 = vunpack.c.l.s8.bf16 %v213
    %v758 = vunpack.c.l.s8.bf16 %v214
    %v759 = vunpack.c.l.s8.bf16 %v215
    %v760 = vunpack.c.l.s8.bf16 %v216
    %v761 = vunpack.c.l.s8.bf16 %v217
    %v762 = vunpack.c.l.s8.bf16 %v218
    %v763 = vunpack.c.l.s8.bf16 %v219
    %v764 = vunpack.c.l.s8.bf16 %v220
    %v765 = vunpack.c.l.s8.bf16 %v221
    %v766 = vunpack.c.l.s8.bf16 %v222
    %v767 = vunpack.c.l.s8.bf16 %v223
    %v768 = vunpack.c.l.s8.bf16 %v224
    %v769 = vunpack.c.l.s8.bf16 %v225
    %v770 = vunpack.c.l.s8.bf16 %v226
    %v771 = vunpack.c.h.s8.bf16 %v211
    %v772 = vunpack.c.h.s8.bf16 %v212
    %v773 = vunpack.c.h.s8.bf16 %v213
    %v774 = vunpack.c.h.s8.bf16 %v214
    %v775 = vunpack.c.h.s8.bf16 %v215
    %v776 = vunpack.c.h.s8.bf16 %v216
    %v777 = vunpack.c.h.s8.bf16 %v217
    %v778 = vunpack.c.h.s8.bf16 %v218
    %v779 = vunpack.c.h.s8.bf16 %v219
    %v780 = vunpack.c.h.s8.bf16 %v220
    %v781 = vunpack.c.h.s8.bf16 %v221
    %v782 = vunpack.c.h.s8.bf16 %v222
    %v783 = vunpack.c.h.s8.bf16 %v223
    %v784 = vunpack.c.h.s8.bf16 %v224
    %v785 = vunpack.c.h.s8.bf16 %v225
    %v786 = vunpack.c.h.s8.bf16 %v226
    %v787 = vunpack.c.l.s8.bf16 %v227
    %v788 = vunpack.c.l.s8.bf16 %v228
    %v789 = vunpack.c.l.s8.bf16 %v229
    %v790 = vunpack.c.l.s8.bf16 %v230
    %v791 = vunpack.c.l.s8.bf16 %v231
    %v792 = vunpack.c.l.s8.bf16 %v232
    %v793 = vunpack.c.l.s8.bf16 %v233
    %v794 = vunpack.c.l.s8.bf16 %v234
    %v795 = vunpack.c.l.s8.bf16 %v235
    %v796 = vunpack.c.l.s8.bf16 %v236
    %v797 = vunpack.c.l.s8.bf16 %v237
    %v798 = vunpack.c.l.s8.bf16 %v238
    %v799 = vunpack.c.l.s8.bf16 %v239
    %v800 = vunpack.c.l.s8.bf16 %v240
    %v801 = vunpack.c.l.s8.bf16 %v241
    %v802 = vunpack.c.l.s8.bf16 %v242
    %v803 = vunpack.c.h.s8.bf16 %v227
    %v804 = vunpack.c.h.s8.bf16 %v228
    %v805 = vunpack.c.h.s8.bf16 %v229
    %v806 = vunpack.c.h.s8.bf16 %v230
    %v807 = vunpack.c.h.s8.bf16 %v231
    %v808 = vunpack.c.h.s8.bf16 %v232
    %v809 = vunpack.c.h.s8.bf16 %v233
    %v810 = vunpack.c.h.s8.bf16 %v234
    %v811 = vunpack.c.h.s8.bf16 %v235
    %v812 = vunpack.c.h.s8.bf16 %v236
    %v813 = vunpack.c.h.s8.bf16 %v237
    %v814 = vunpack.c.h.s8.bf16 %v238
    %v815 = vunpack.c.h.s8.bf16 %v239
    %v816 = vunpack.c.h.s8.bf16 %v240
    %v817 = vunpack.c.h.s8.bf16 %v241
    %v818 = vunpack.c.h.s8.bf16 %v242
    %v819 = vunpack.c.l.s8.bf16 %v243
    %v820 = vunpack.c.l.s8.bf16 %v244
    %v821 = vunpack.c.l.s8.bf16 %v245
    %v822 = vunpack.c.l.s8.bf16 %v246
    %v823 = vunpack.c.l.s8.bf16 %v247
    %v824 = vunpack.c.l.s8.bf16 %v248
    %v825 = vunpack.c.l.s8.bf16 %v249
    %v826 = vunpack.c.l.s8.bf16 %v250
    %v827 = vunpack.c.l.s8.bf16 %v251
    %v828 = vunpack.c.l.s8.bf16 %v252
    %v829 = vunpack.c.l.s8.bf16 %v253
    %v830 = vunpack.c.l.s8.bf16 %v254
    %v831 = vunpack.c.l.s8.bf16 %v255
    %v832 = vunpack.c.l.s8.bf16 %v256
    %v833 = vunpack.c.l.s8.bf16 %v257
    %v834 = vunpack.c.l.s8.bf16 %v258
    %v835 = vunpack.c.h.s8.bf16 %v243
    %v836 = vunpack.c.h.s8.bf16 %v244
    %v837 = vunpack.c.h.s8.bf16 %v245
    %v838 = vunpack.c.h.s8.bf16 %v246
    %v839 = vunpack.c.h.s8.bf16 %v247
    %v840 = vunpack.c.h.s8.bf16 %v248
    %v841 = vunpack.c.h.s8.bf16 %v249
    %v842 = vunpack.c.h.s8.bf16 %v250
    %v843 = vunpack.c.h.s8.bf16 %v251
    %v844 = vunpack.c.h.s8.bf16 %v252
    %v845 = vunpack.c.h.s8.bf16 %v253
    %v846 = vunpack.c.h.s8.bf16 %v254
    %v847 = vunpack.c.h.s8.bf16 %v255
    %v848 = vunpack.c.h.s8.bf16 %v256
    %v849 = vunpack.c.h.s8.bf16 %v257
    %v850 = vunpack.c.h.s8.bf16 %v258
    %v851 = vunpack.c.l.s8.bf16 %v259
    %v852 = vunpack.c.l.s8.bf16 %v260
    %v853 = vunpack.c.l.s8.bf16 %v261
    %v854 = vunpack.c.l.s8.bf16 %v262
    %v855 = vunpack.c.l.s8.bf16 %v263
    %v856 = vunpack.c.l.s8.bf16 %v264
    %v857 = vunpack.c.l.s8.bf16 %v265
    %v858 = vunpack.c.l.s8.bf16 %v266
    %v859 = vunpack.c.l.s8.bf16 %v267
    %v860 = vunpack.c.l.s8.bf16 %v268
    %v861 = vunpack.c.l.s8.bf16 %v269
    %v862 = vunpack.c.l.s8.bf16 %v270
    %v863 = vunpack.c.l.s8.bf16 %v271
    %v864 = vunpack.c.l.s8.bf16 %v272
    %v865 = vunpack.c.l.s8.bf16 %v273
    %v866 = vunpack.c.l.s8.bf16 %v274
    %v867 = vunpack.c.h.s8.bf16 %v259
    %v868 = vunpack.c.h.s8.bf16 %v260
    %v869 = vunpack.c.h.s8.bf16 %v261
    %v870 = vunpack.c.h.s8.bf16 %v262
    %v871 = vunpack.c.h.s8.bf16 %v263
    %v872 = vunpack.c.h.s8.bf16 %v264
    %v873 = vunpack.c.h.s8.bf16 %v265
    %v874 = vunpack.c.h.s8.bf16 %v266
    %v875 = vunpack.c.h.s8.bf16 %v267
    %v876 = vunpack.c.h.s8.bf16 %v268
    %v877 = vunpack.c.h.s8.bf16 %v269
    %v878 = vunpack.c.h.s8.bf16 %v270
    %v879 = vunpack.c.h.s8.bf16 %v271
    %v880 = vunpack.c.h.s8.bf16 %v272
    %v881 = vunpack.c.h.s8.bf16 %v273
    %v882 = vunpack.c.h.s8.bf16 %v274
    %v883 = vunpack.c.l.s8.bf16 %v275
    %v884 = vunpack.c.l.s8.bf16 %v276
    %v885 = vunpack.c.l.s8.bf16 %v277
    %v886 = vunpack.c.l.s8.bf16 %v278
    %v887 = vunpack.c.l.s8.bf16 %v279
    %v888 = vunpack.c.l.s8.bf16 %v280
    %v889 = vunpack.c.l.s8.bf16 %v281
    %v890 = vunpack.c.l.s8.bf16 %v282
    %v891 = vunpack.c.l.s8.bf16 %v283
    %v892 = vunpack.c.l.s8.bf16 %v284
    %v893 = vunpack.c.l.s8.bf16 %v285
    %v894 = vunpack.c.l.s8.bf16 %v286
    %v895 = vunpack.c.l.s8.bf16 %v287
    %v896 = vunpack.c.l.s8.bf16 %v288
    %v897 = vunpack.c.l.s8.bf16 %v289
    %v898 = vunpack.c.l.s8.bf16 %v290
    %v899 = vunpack.c.h.s8.bf16 %v275
    %v900 = vunpack.c.h.s8.bf16 %v276
    %v901 = vunpack.c.h.s8.bf16 %v277
    %v902 = vunpack.c.h.s8.bf16 %v278
    %v903 = vunpack.c.h.s8.bf16 %v279
    %v904 = vunpack.c.h.s8.bf16 %v280
    %v905 = vunpack.c.h.s8.bf16 %v281
    %v906 = vunpack.c.h.s8.bf16 %v282
    %v907 = vunpack.c.h.s8.bf16 %v283
    %v908 = vunpack.c.h.s8.bf16 %v284
    %v909 = vunpack.c.h.s8.bf16 %v285
    %v910 = vunpack.c.h.s8.bf16 %v286
    %v911 = vunpack.c.h.s8.bf16 %v287
    %v912 = vunpack.c.h.s8.bf16 %v288
    %v913 = vunpack.c.h.s8.bf16 %v289
    %v914 = vunpack.c.h.s8.bf16 %v290
    %v915 = vunpack.c.l.s8.bf16 %v291
    %v916 = vunpack.c.l.s8.bf16 %v292
    %v917 = vunpack.c.l.s8.bf16 %v293
    %v918 = vunpack.c.l.s8.bf16 %v294
    %v919 = vunpack.c.l.s8.bf16 %v295
    %v920 = vunpack.c.l.s8.bf16 %v296
    %v921 = vunpack.c.l.s8.bf16 %v297
    %v922 = vunpack.c.l.s8.bf16 %v298
    %v923 = vunpack.c.l.s8.bf16 %v299
    %v924 = vunpack.c.l.s8.bf16 %v300
    %v925 = vunpack.c.l.s8.bf16 %v301
    %v926 = vunpack.c.l.s8.bf16 %v302
    %v927 = vunpack.c.l.s8.bf16 %v303
    %v928 = vunpack.c.l.s8.bf16 %v304
    %v929 = vunpack.c.l.s8.bf16 %v305
    %v930 = vunpack.c.l.s8.bf16 %v306
    %v931 = vunpack.c.h.s8.bf16 %v291
    %v932 = vunpack.c.h.s8.bf16 %v292
    %v933 = vunpack.c.h.s8.bf16 %v293
    %v934 = vunpack.c.h.s8.bf16 %v294
    %v935 = vunpack.c.h.s8.bf16 %v295
    %v936 = vunpack.c.h.s8.bf16 %v296
    %v937 = vunpack.c.h.s8.bf16 %v297
    %v938 = vunpack.c.h.s8.bf16 %v298
    %v939 = vunpack.c.h.s8.bf16 %v299
    %v940 = vunpack.c.h.s8.bf16 %v300
    %v941 = vunpack.c.h.s8.bf16 %v301
    %v942 = vunpack.c.h.s8.bf16 %v302
    %v943 = vunpack.c.h.s8.bf16 %v303
    %v944 = vunpack.c.h.s8.bf16 %v304
    %v945 = vunpack.c.h.s8.bf16 %v305
    %v946 = vunpack.c.h.s8.bf16 %v306
    %v947 = vunpack.c.l.s8.bf16 %v307
    %v948 = vunpack.c.l.s8.bf16 %v308
    %v949 = vunpack.c.l.s8.bf16 %v309
    %v950 = vunpack.c.l.s8.bf16 %v310
    %v951 = vunpack.c.l.s8.bf16 %v311
    %v952 = vunpack.c.l.s8.bf16 %v312
    %v953 = vunpack.c.l.s8.bf16 %v313
    %v954 = vunpack.c.l.s8.bf16 %v314
    %v955 = vunpack.c.l.s8.bf16 %v315
    %v956 = vunpack.c.l.s8.bf16 %v316
    %v957 = vunpack.c.l.s8.bf16 %v317
    %v958 = vunpack.c.l.s8.bf16 %v318
    %v959 = vunpack.c.l.s8.bf16 %v319
    %v960 = vunpack.c.l.s8.bf16 %v320
    %v961 = vunpack.c.l.s8.bf16 %v321
    %v962 = vunpack.c.l.s8.bf16 %v322
    %v963 = vunpack.c.h.s8.bf16 %v307
    %v964 = vunpack.c.h.s8.bf16 %v308
    %v965 = vunpack.c.h.s8.bf16 %v309
    %v966 = vunpack.c.h.s8.bf16 %v310
    %v967 = vunpack.c.h.s8.bf16 %v311
    %v968 = vunpack.c.h.s8.bf16 %v312
    %v969 = vunpack.c.h.s8.bf16 %v313
    %v970 = vunpack.c.h.s8.bf16 %v314
    %v971 = vunpack.c.h.s8.bf16 %v315
    %v972 = vunpack.c.h.s8.bf16 %v316
    %v973 = vunpack.c.h.s8.bf16 %v317
    %v974 = vunpack.c.h.s8.bf16 %v318
    %v975 = vunpack.c.h.s8.bf16 %v319
    %v976 = vunpack.c.h.s8.bf16 %v320
    %v977 = vunpack.c.h.s8.bf16 %v321
    %v978 = vunpack.c.h.s8.bf16 %v322
    %v979 = vunpack.c.l.s8.bf16 %v323
    %v980 = vunpack.c.l.s8.bf16 %v324
    %v981 = vunpack.c.l.s8.bf16 %v325
    %v982 = vunpack.c.l.s8.bf16 %v326
    %v983 = vunpack.c.l.s8.bf16 %v327
    %v984 = vunpack.c.l.s8.bf16 %v328
    %v985 = vunpack.c.l.s8.bf16 %v329
    %v986 = vunpack.c.l.s8.bf16 %v330
    %v987 = vunpack.c.l.s8.bf16 %v331
    %v988 = vunpack.c.l.s8.bf16 %v332
    %v989 = vunpack.c.l.s8.bf16 %v333
    %v990 = vunpack.c.l.s8.bf16 %v334
    %v991 = vunpack.c.l.s8.bf16 %v335
    %v992 = vunpack.c.l.s8.bf16 %v336
    %v993 = vunpack.c.l.s8.bf16 %v337
    %v994 = vunpack.c.l.s8.bf16 %v338
    %v995 = vunpack.c.h.s8.bf16 %v323
    %v996 = vunpack.c.h.s8.bf16 %v324
    %v997 = vunpack.c.h.s8.bf16 %v325
    %v998 = vunpack.c.h.s8.bf16 %v326
    %v999 = vunpack.c.h.s8.bf16 %v327
    %v1000 = vunpack.c.h.s8.bf16 %v328
    %v1001 = vunpack.c.h.s8.bf16 %v329
    %v1002 = vunpack.c.h.s8.bf16 %v330
    %v1003 = vunpack.c.h.s8.bf16 %v331
    %v1004 = vunpack.c.h.s8.bf16 %v332
    %v1005 = vunpack.c.h.s8.bf16 %v333
    %v1006 = vunpack.c.h.s8.bf16 %v334
    %v1007 = vunpack.c.h.s8.bf16 %v335
    %v1008 = vunpack.c.h.s8.bf16 %v336
    %v1009 = vunpack.c.h.s8.bf16 %v337
    %v1010 = vunpack.c.h.s8.bf16 %v338
    %v1011 = vunpack.c.l.s8.bf16 %v339
    %v1012 = vunpack.c.l.s8.bf16 %v340
    %v1013 = vunpack.c.l.s8.bf16 %v341
    %v1014 = vunpack.c.l.s8.bf16 %v342
    %v1015 = vunpack.c.l.s8.bf16 %v343
    %v1016 = vunpack.c.l.s8.bf16 %v344
    %v1017 = vunpack.c.l.s8.bf16 %v345
    %v1018 = vunpack.c.l.s8.bf16 %v346
    %v1019 = vunpack.c.l.s8.bf16 %v347
    %v1020 = vunpack.c.l.s8.bf16 %v348
    %v1021 = vunpack.c.l.s8.bf16 %v349
    %v1022 = vunpack.c.l.s8.bf16 %v350
    %v1023 = vunpack.c.l.s8.bf16 %v351
    %v1024 = vunpack.c.l.s8.bf16 %v352
    %v1025 = vunpack.c.l.s8.bf16 %v353
    %v1026 = vunpack.c.l.s8.bf16 %v354
    %v1027 = vunpack.c.h.s8.bf16 %v339
    %v1028 = vunpack.c.h.s8.bf16 %v340
    %v1029 = vunpack.c.h.s8.bf16 %v341
    %v1030 = vunpack.c.h.s8.bf16 %v342
    %v1031 = vunpack.c.h.s8.bf16 %v343
    %v1032 = vunpack.c.h.s8.bf16 %v344
    %v1033 = vunpack.c.h.s8.bf16 %v345
    %v1034 = vunpack.c.h.s8.bf16 %v346
    %v1035 = vunpack.c.h.s8.bf16 %v347
    %v1036 = vunpack.c.h.s8.bf16 %v348
    %v1037 = vunpack.c.h.s8.bf16 %v349
    %v1038 = vunpack.c.h.s8.bf16 %v350
    %v1039 = vunpack.c.h.s8.bf16 %v351
    %v1040 = vunpack.c.h.s8.bf16 %v352
    %v1041 = vunpack.c.h.s8.bf16 %v353
    %v1042 = vunpack.c.h.s8.bf16 %v354
    %v1043 = vunpack.c.l.s8.bf16 %v355
    %v1044 = vunpack.c.l.s8.bf16 %v356
    %v1045 = vunpack.c.l.s8.bf16 %v357
    %v1046 = vunpack.c.l.s8.bf16 %v358
    %v1047 = vunpack.c.l.s8.bf16 %v359
    %v1048 = vunpack.c.l.s8.bf16 %v360
    %v1049 = vunpack.c.l.s8.bf16 %v361
    %v1050 = vunpack.c.l.s8.bf16 %v362
    %v1051 = vunpack.c.l.s8.bf16 %v363
    %v1052 = vunpack.c.l.s8.bf16 %v364
    %v1053 = vunpack.c.l.s8.bf16 %v365
    %v1054 = vunpack.c.l.s8.bf16 %v366
    %v1055 = vunpack.c.l.s8.bf16 %v367
    %v1056 = vunpack.c.l.s8.bf16 %v368
    %v1057 = vunpack.c.l.s8.bf16 %v369
    %v1058 = vunpack.c.l.s8.bf16 %v370
    %v1059 = vunpack.c.h.s8.bf16 %v355
    %v1060 = vunpack.c.h.s8.bf16 %v356
    %v1061 = vunpack.c.h.s8.bf16 %v357
    %v1062 = vunpack.c.h.s8.bf16 %v358
    %v1063 = vunpack.c.h.s8.bf16 %v359
    %v1064 = vunpack.c.h.s8.bf16 %v360
    %v1065 = vunpack.c.h.s8.bf16 %v361
    %v1066 = vunpack.c.h.s8.bf16 %v362
    %v1067 = vunpack.c.h.s8.bf16 %v363
    %v1068 = vunpack.c.h.s8.bf16 %v364
    %v1069 = vunpack.c.h.s8.bf16 %v365
    %v1070 = vunpack.c.h.s8.bf16 %v366
    %v1071 = vunpack.c.h.s8.bf16 %v367
    %v1072 = vunpack.c.h.s8.bf16 %v368
    %v1073 = vunpack.c.h.s8.bf16 %v369
    %v1074 = vunpack.c.h.s8.bf16 %v370
    %v1075 = vunpack.c.l.s8.bf16 %v371
    %v1076 = vunpack.c.l.s8.bf16 %v372
    %v1077 = vunpack.c.l.s8.bf16 %v373
    %v1078 = vunpack.c.l.s8.bf16 %v374
    %v1079 = vunpack.c.l.s8.bf16 %v375
    %v1080 = vunpack.c.l.s8.bf16 %v376
    %v1081 = vunpack.c.l.s8.bf16 %v377
    %v1082 = vunpack.c.l.s8.bf16 %v378
    %v1083 = vunpack.c.l.s8.bf16 %v379
    %v1084 = vunpack.c.l.s8.bf16 %v380
    %v1085 = vunpack.c.l.s8.bf16 %v381
    %v1086 = vunpack.c.l.s8.bf16 %v382
    %v1087 = vunpack.c.l.s8.bf16 %v383
    %v1088 = vunpack.c.l.s8.bf16 %v384
    %v1089 = vunpack.c.l.s8.bf16 %v385
    %v1090 = vunpack.c.l.s8.bf16 %v386
    %v1091 = vunpack.c.h.s8.bf16 %v371
    %v1092 = vunpack.c.h.s8.bf16 %v372
    %v1093 = vunpack.c.h.s8.bf16 %v373
    %v1094 = vunpack.c.h.s8.bf16 %v374
    %v1095 = vunpack.c.h.s8.bf16 %v375
    %v1096 = vunpack.c.h.s8.bf16 %v376
    %v1097 = vunpack.c.h.s8.bf16 %v377
    %v1098 = vunpack.c.h.s8.bf16 %v378
    %v1099 = vunpack.c.h.s8.bf16 %v379
    %v1100 = vunpack.c.h.s8.bf16 %v380
    %v1101 = vunpack.c.h.s8.bf16 %v381
    %v1102 = vunpack.c.h.s8.bf16 %v382
    %v1103 = vunpack.c.h.s8.bf16 %v383
    %v1104 = vunpack.c.h.s8.bf16 %v384
    %v1105 = vunpack.c.h.s8.bf16 %v385
    %v1106 = vunpack.c.h.s8.bf16 %v386
    %v1107 = vunpack.c.l.s8.bf16 %v387
    %v1108 = vunpack.c.l.s8.bf16 %v388
    %v1109 = vunpack.c.l.s8.bf16 %v389
    %v1110 = vunpack.c.l.s8.bf16 %v390
    %v1111 = vunpack.c.l.s8.bf16 %v391
    %v1112 = vunpack.c.l.s8.bf16 %v392
    %v1113 = vunpack.c.l.s8.bf16 %v393
    %v1114 = vunpack.c.l.s8.bf16 %v394
    %v1115 = vunpack.c.l.s8.bf16 %v395
    %v1116 = vunpack.c.l.s8.bf16 %v396
    %v1117 = vunpack.c.l.s8.bf16 %v397
    %v1118 = vunpack.c.l.s8.bf16 %v398
    %v1119 = vunpack.c.l.s8.bf16 %v399
    %v1120 = vunpack.c.l.s8.bf16 %v400
    %v1121 = vunpack.c.l.s8.bf16 %v401
    %v1122 = vunpack.c.l.s8.bf16 %v402
    %v1123 = vunpack.c.h.s8.bf16 %v387
    %v1124 = vunpack.c.h.s8.bf16 %v388
    %v1125 = vunpack.c.h.s8.bf16 %v389
    %v1126 = vunpack.c.h.s8.bf16 %v390
    %v1127 = vunpack.c.h.s8.bf16 %v391
    %v1128 = vunpack.c.h.s8.bf16 %v392
    %v1129 = vunpack.c.h.s8.bf16 %v393
    %v1130 = vunpack.c.h.s8.bf16 %v394
    %v1131 = vunpack.c.h.s8.bf16 %v395
    %v1132 = vunpack.c.h.s8.bf16 %v396
    %v1133 = vunpack.c.h.s8.bf16 %v397
    %v1134 = vunpack.c.h.s8.bf16 %v398
    %v1135 = vunpack.c.h.s8.bf16 %v399
    %v1136 = vunpack.c.h.s8.bf16 %v400
    %v1137 = vunpack.c.h.s8.bf16 %v401
    %v1138 = vunpack.c.h.s8.bf16 %v402
    %v1139 = vunpack.c.l.s8.bf16 %v403
    %v1140 = vunpack.c.l.s8.bf16 %v404
    %v1141 = vunpack.c.l.s8.bf16 %v405
    %v1142 = vunpack.c.l.s8.bf16 %v406
    %v1143 = vunpack.c.l.s8.bf16 %v407
    %v1144 = vunpack.c.l.s8.bf16 %v408
    %v1145 = vunpack.c.l.s8.bf16 %v409
    %v1146 = vunpack.c.l.s8.bf16 %v410
    %v1147 = vunpack.c.l.s8.bf16 %v411
    %v1148 = vunpack.c.l.s8.bf16 %v412
    %v1149 = vunpack.c.l.s8.bf16 %v413
    %v1150 = vunpack.c.l.s8.bf16 %v414
    %v1151 = vunpack.c.l.s8.bf16 %v415
    %v1152 = vunpack.c.l.s8.bf16 %v416
    %v1153 = vunpack.c.l.s8.bf16 %v417
    %v1154 = vunpack.c.l.s8.bf16 %v418
    %v1155 = vunpack.c.h.s8.bf16 %v403
    %v1156 = vunpack.c.h.s8.bf16 %v404
    %v1157 = vunpack.c.h.s8.bf16 %v405
    %v1158 = vunpack.c.h.s8.bf16 %v406
    %v1159 = vunpack.c.h.s8.bf16 %v407
    %v1160 = vunpack.c.h.s8.bf16 %v408
    %v1161 = vunpack.c.h.s8.bf16 %v409
    %v1162 = vunpack.c.h.s8.bf16 %v410
    %v1163 = vunpack.c.h.s8.bf16 %v411
    %v1164 = vunpack.c.h.s8.bf16 %v412
    %v1165 = vunpack.c.h.s8.bf16 %v413
    %v1166 = vunpack.c.h.s8.bf16 %v414
    %v1167 = vunpack.c.h.s8.bf16 %v415
    %v1168 = vunpack.c.h.s8.bf16 %v416
    %v1169 = vunpack.c.h.s8.bf16 %v417
    %v1170 = vunpack.c.h.s8.bf16 %v418
    %v1171 = vunpack.c.l.s8.bf16 %v419
    %v1172 = vunpack.c.l.s8.bf16 %v420
    %v1173 = vunpack.c.l.s8.bf16 %v421
    %v1174 = vunpack.c.l.s8.bf16 %v422
    %v1175 = vunpack.c.l.s8.bf16 %v423
    %v1176 = vunpack.c.l.s8.bf16 %v424
    %v1177 = vunpack.c.l.s8.bf16 %v425
    %v1178 = vunpack.c.l.s8.bf16 %v426
    %v1179 = vunpack.c.l.s8.bf16 %v427
    %v1180 = vunpack.c.l.s8.bf16 %v428
    %v1181 = vunpack.c.l.s8.bf16 %v429
    %v1182 = vunpack.c.l.s8.bf16 %v430
    %v1183 = vunpack.c.l.s8.bf16 %v431
    %v1184 = vunpack.c.l.s8.bf16 %v432
    %v1185 = vunpack.c.l.s8.bf16 %v433
    %v1186 = vunpack.c.l.s8.bf16 %v434
    %v1187 = vunpack.c.h.s8.bf16 %v419
    %v1188 = vunpack.c.h.s8.bf16 %v420
    %v1189 = vunpack.c.h.s8.bf16 %v421
    %v1190 = vunpack.c.h.s8.bf16 %v422
    %v1191 = vunpack.c.h.s8.bf16 %v423
    %v1192 = vunpack.c.h.s8.bf16 %v424
    %v1193 = vunpack.c.h.s8.bf16 %v425
    %v1194 = vunpack.c.h.s8.bf16 %v426
    %v1195 = vunpack.c.h.s8.bf16 %v427
    %v1196 = vunpack.c.h.s8.bf16 %v428
    %v1197 = vunpack.c.h.s8.bf16 %v429
    %v1198 = vunpack.c.h.s8.bf16 %v430
    %v1199 = vunpack.c.h.s8.bf16 %v431
    %v1200 = vunpack.c.h.s8.bf16 %v432
    %v1201 = vunpack.c.h.s8.bf16 %v433
    %v1202 = vunpack.c.h.s8.bf16 %v434
    %v1203 = vunpack.c.l.s8.bf16 %v435
    %v1204 = vunpack.c.l.s8.bf16 %v436
    %v1205 = vunpack.c.l.s8.bf16 %v437
    %v1206 = vunpack.c.l.s8.bf16 %v438
    %v1207 = vunpack.c.l.s8.bf16 %v439
    %v1208 = vunpack.c.l.s8.bf16 %v440
    %v1209 = vunpack.c.l.s8.bf16 %v441
    %v1210 = vunpack.c.l.s8.bf16 %v442
    %v1211 = vunpack.c.l.s8.bf16 %v443
    %v1212 = vunpack.c.l.s8.bf16 %v444
    %v1213 = vunpack.c.l.s8.bf16 %v445
    %v1214 = vunpack.c.l.s8.bf16 %v446
    %v1215 = vunpack.c.l.s8.bf16 %v447
    %v1216 = vunpack.c.l.s8.bf16 %v448
    %v1217 = vunpack.c.l.s8.bf16 %v449
    %v1218 = vunpack.c.l.s8.bf16 %v450
    %v1219 = vunpack.c.h.s8.bf16 %v435
    %v1220 = vunpack.c.h.s8.bf16 %v436
    %v1221 = vunpack.c.h.s8.bf16 %v437
    %v1222 = vunpack.c.h.s8.bf16 %v438
    %v1223 = vunpack.c.h.s8.bf16 %v439
    %v1224 = vunpack.c.h.s8.bf16 %v440
    %v1225 = vunpack.c.h.s8.bf16 %v441
    %v1226 = vunpack.c.h.s8.bf16 %v442
    %v1227 = vunpack.c.h.s8.bf16 %v443
    %v1228 = vunpack.c.h.s8.bf16 %v444
    %v1229 = vunpack.c.h.s8.bf16 %v445
    %v1230 = vunpack.c.h.s8.bf16 %v446
    %v1231 = vunpack.c.h.s8.bf16 %v447
    %v1232 = vunpack.c.h.s8.bf16 %v448
    %v1233 = vunpack.c.h.s8.bf16 %v449
    %v1234 = vunpack.c.h.s8.bf16 %v450
    %v1235 = vunpack.c.l.s8.bf16 %v451
    %v1236 = vunpack.c.l.s8.bf16 %v452
    %v1237 = vunpack.c.l.s8.bf16 %v453
    %v1238 = vunpack.c.l.s8.bf16 %v454
    %v1239 = vunpack.c.l.s8.bf16 %v455
    %v1240 = vunpack.c.l.s8.bf16 %v456
    %v1241 = vunpack.c.l.s8.bf16 %v457
    %v1242 = vunpack.c.l.s8.bf16 %v458
    %v1243 = vunpack.c.l.s8.bf16 %v459
    %v1244 = vunpack.c.l.s8.bf16 %v460
    %v1245 = vunpack.c.l.s8.bf16 %v461
    %v1246 = vunpack.c.l.s8.bf16 %v462
    %v1247 = vunpack.c.l.s8.bf16 %v463
    %v1248 = vunpack.c.l.s8.bf16 %v464
    %v1249 = vunpack.c.l.s8.bf16 %v465
    %v1250 = vunpack.c.l.s8.bf16 %v466
    %v1251 = vunpack.c.h.s8.bf16 %v451
    %v1252 = vunpack.c.h.s8.bf16 %v452
    %v1253 = vunpack.c.h.s8.bf16 %v453
    %v1254 = vunpack.c.h.s8.bf16 %v454
    %v1255 = vunpack.c.h.s8.bf16 %v455
    %v1256 = vunpack.c.h.s8.bf16 %v456
    %v1257 = vunpack.c.h.s8.bf16 %v457
    %v1258 = vunpack.c.h.s8.bf16 %v458
    %v1259 = vunpack.c.h.s8.bf16 %v459
    %v1260 = vunpack.c.h.s8.bf16 %v460
    %v1261 = vunpack.c.h.s8.bf16 %v461
    %v1262 = vunpack.c.h.s8.bf16 %v462
    %v1263 = vunpack.c.h.s8.bf16 %v463
    %v1264 = vunpack.c.h.s8.bf16 %v464
    %v1265 = vunpack.c.h.s8.bf16 %v465
    %v1266 = vunpack.c.h.s8.bf16 %v466
    %v1267 = vunpack.c.l.s8.bf16 %v467
    %v1268 = vunpack.c.l.s8.bf16 %v468
    %v1269 = vunpack.c.l.s8.bf16 %v469
    %v1270 = vunpack.c.l.s8.bf16 %v470
    %v1271 = vunpack.c.l.s8.bf16 %v471
    %v1272 = vunpack.c.l.s8.bf16 %v472
    %v1273 = vunpack.c.l.s8.bf16 %v473
    %v1274 = vunpack.c.l.s8.bf16 %v474
    %v1275 = vunpack.c.l.s8.bf16 %v475
    %v1276 = vunpack.c.l.s8.bf16 %v476
    %v1277 = vunpack.c.l.s8.bf16 %v477
    %v1278 = vunpack.c.l.s8.bf16 %v478
    %v1279 = vunpack.c.l.s8.bf16 %v479
    %v1280 = vunpack.c.l.s8.bf16 %v480
    %v1281 = vunpack.c.l.s8.bf16 %v481
    %v1282 = vunpack.c.l.s8.bf16 %v482
    %v1283 = vunpack.c.h.s8.bf16 %v467
    %v1284 = vunpack.c.h.s8.bf16 %v468
    %v1285 = vunpack.c.h.s8.bf16 %v469
    %v1286 = vunpack.c.h.s8.bf16 %v470
    %v1287 = vunpack.c.h.s8.bf16 %v471
    %v1288 = vunpack.c.h.s8.bf16 %v472
    %v1289 = vunpack.c.h.s8.bf16 %v473
    %v1290 = vunpack.c.h.s8.bf16 %v474
    %v1291 = vunpack.c.h.s8.bf16 %v475
    %v1292 = vunpack.c.h.s8.bf16 %v476
    %v1293 = vunpack.c.h.s8.bf16 %v477
    %v1294 = vunpack.c.h.s8.bf16 %v478
    %v1295 = vunpack.c.h.s8.bf16 %v479
    %v1296 = vunpack.c.h.s8.bf16 %v480
    %v1297 = vunpack.c.h.s8.bf16 %v481
    %v1298 = vunpack.c.h.s8.bf16 %v482
    %v1299 = vunpack.c.l.s8.bf16 %v483
    %v1300 = vunpack.c.l.s8.bf16 %v484
    %v1301 = vunpack.c.l.s8.bf16 %v485
    %v1302 = vunpack.c.l.s8.bf16 %v486
    %v1303 = vunpack.c.l.s8.bf16 %v487
    %v1304 = vunpack.c.l.s8.bf16 %v488
    %v1305 = vunpack.c.l.s8.bf16 %v489
    %v1306 = vunpack.c.l.s8.bf16 %v490
    %v1307 = vunpack.c.l.s8.bf16 %v491
    %v1308 = vunpack.c.l.s8.bf16 %v492
    %v1309 = vunpack.c.l.s8.bf16 %v493
    %v1310 = vunpack.c.l.s8.bf16 %v494
    %v1311 = vunpack.c.l.s8.bf16 %v495
    %v1312 = vunpack.c.l.s8.bf16 %v496
    %v1313 = vunpack.c.l.s8.bf16 %v497
    %v1314 = vunpack.c.l.s8.bf16 %v498
    %v1315 = vunpack.c.h.s8.bf16 %v483
    %v1316 = vunpack.c.h.s8.bf16 %v484
    %v1317 = vunpack.c.h.s8.bf16 %v485
    %v1318 = vunpack.c.h.s8.bf16 %v486
    %v1319 = vunpack.c.h.s8.bf16 %v487
    %v1320 = vunpack.c.h.s8.bf16 %v488
    %v1321 = vunpack.c.h.s8.bf16 %v489
    %v1322 = vunpack.c.h.s8.bf16 %v490
    %v1323 = vunpack.c.h.s8.bf16 %v491
    %v1324 = vunpack.c.h.s8.bf16 %v492
    %v1325 = vunpack.c.h.s8.bf16 %v493
    %v1326 = vunpack.c.h.s8.bf16 %v494
    %v1327 = vunpack.c.h.s8.bf16 %v495
    %v1328 = vunpack.c.h.s8.bf16 %v496
    %v1329 = vunpack.c.h.s8.bf16 %v497
    %v1330 = vunpack.c.h.s8.bf16 %v498
    %v1331 = vunpack.c.l.s8.bf16 %v499
    %v1332 = vunpack.c.l.s8.bf16 %v500
    %v1333 = vunpack.c.l.s8.bf16 %v501
    %v1334 = vunpack.c.l.s8.bf16 %v502
    %v1335 = vunpack.c.l.s8.bf16 %v503
    %v1336 = vunpack.c.l.s8.bf16 %v504
    %v1337 = vunpack.c.l.s8.bf16 %v505
    %v1338 = vunpack.c.l.s8.bf16 %v506
    %v1339 = vunpack.c.l.s8.bf16 %v507
    %v1340 = vunpack.c.l.s8.bf16 %v508
    %v1341 = vunpack.c.l.s8.bf16 %v509
    %v1342 = vunpack.c.l.s8.bf16 %v510
    %v1343 = vunpack.c.l.s8.bf16 %v511
    %v1344 = vunpack.c.l.s8.bf16 %v512
    %v1345 = vunpack.c.l.s8.bf16 %v513
    %v1346 = vunpack.c.l.s8.bf16 %v514
    %v1347 = vunpack.c.h.s8.bf16 %v499
    %v1348 = vunpack.c.h.s8.bf16 %v500
    %v1349 = vunpack.c.h.s8.bf16 %v501
    %v1350 = vunpack.c.h.s8.bf16 %v502
    %v1351 = vunpack.c.h.s8.bf16 %v503
    %v1352 = vunpack.c.h.s8.bf16 %v504
    %v1353 = vunpack.c.h.s8.bf16 %v505
    %v1354 = vunpack.c.h.s8.bf16 %v506
    %v1355 = vunpack.c.h.s8.bf16 %v507
    %v1356 = vunpack.c.h.s8.bf16 %v508
    %v1357 = vunpack.c.h.s8.bf16 %v509
    %v1358 = vunpack.c.h.s8.bf16 %v510
    %v1359 = vunpack.c.h.s8.bf16 %v511
    %v1360 = vunpack.c.h.s8.bf16 %v512
    %v1361 = vunpack.c.h.s8.bf16 %v513
    %v1362 = vunpack.c.h.s8.bf16 %v514
    %v1363 = vunpack.c.l.s8.bf16 %v515
    %v1364 = vunpack.c.l.s8.bf16 %v516
    %v1365 = vunpack.c.l.s8.bf16 %v517
    %v1366 = vunpack.c.l.s8.bf16 %v518
    %v1367 = vunpack.c.l.s8.bf16 %v519
    %v1368 = vunpack.c.l.s8.bf16 %v520
    %v1369 = vunpack.c.l.s8.bf16 %v521
    %v1370 = vunpack.c.l.s8.bf16 %v522
    %v1371 = vunpack.c.l.s8.bf16 %v523
    %v1372 = vunpack.c.l.s8.bf16 %v524
    %v1373 = vunpack.c.l.s8.bf16 %v525
    %v1374 = vunpack.c.l.s8.bf16 %v526
    %v1375 = vunpack.c.l.s8.bf16 %v527
    %v1376 = vunpack.c.l.s8.bf16 %v528
    %v1377 = vunpack.c.l.s8.bf16 %v529
    %v1378 = vunpack.c.l.s8.bf16 %v530
    %v1379 = vunpack.c.h.s8.bf16 %v515
    %v1380 = vunpack.c.h.s8.bf16 %v516
    %v1381 = vunpack.c.h.s8.bf16 %v517
    %v1382 = vunpack.c.h.s8.bf16 %v518
    %v1383 = vunpack.c.h.s8.bf16 %v519
    %v1384 = vunpack.c.h.s8.bf16 %v520
    %v1385 = vunpack.c.h.s8.bf16 %v521
    %v1386 = vunpack.c.h.s8.bf16 %v522
    %v1387 = vunpack.c.h.s8.bf16 %v523
    %v1388 = vunpack.c.h.s8.bf16 %v524
    %v1389 = vunpack.c.h.s8.bf16 %v525
    %v1390 = vunpack.c.h.s8.bf16 %v526
    %v1391 = vunpack.c.h.s8.bf16 %v527
    %v1392 = vunpack.c.h.s8.bf16 %v528
    %v1393 = vunpack.c.h.s8.bf16 %v529
    %v1394 = vunpack.c.h.s8.bf16 %v530
    %v1395 = vunpack.c.l.s8.bf16 %v531
    %v1396 = vunpack.c.l.s8.bf16 %v532
    %v1397 = vunpack.c.l.s8.bf16 %v533
    %v1398 = vunpack.c.l.s8.bf16 %v534
    %v1399 = vunpack.c.l.s8.bf16 %v535
    %v1400 = vunpack.c.l.s8.bf16 %v536
    %v1401 = vunpack.c.l.s8.bf16 %v537
    %v1402 = vunpack.c.l.s8.bf16 %v538
    %v1403 = vunpack.c.l.s8.bf16 %v539
    %v1404 = vunpack.c.l.s8.bf16 %v540
    %v1405 = vunpack.c.l.s8.bf16 %v541
    %v1406 = vunpack.c.l.s8.bf16 %v542
    %v1407 = vunpack.c.l.s8.bf16 %v543
    %v1408 = vunpack.c.l.s8.bf16 %v544
    %v1409 = vunpack.c.l.s8.bf16 %v545
    %v1410 = vunpack.c.l.s8.bf16 %v546
    %v1411 = vunpack.c.h.s8.bf16 %v531
    %v1412 = vunpack.c.h.s8.bf16 %v532
    %v1413 = vunpack.c.h.s8.bf16 %v533
    %v1414 = vunpack.c.h.s8.bf16 %v534
    %v1415 = vunpack.c.h.s8.bf16 %v535
    %v1416 = vunpack.c.h.s8.bf16 %v536
    %v1417 = vunpack.c.h.s8.bf16 %v537
    %v1418 = vunpack.c.h.s8.bf16 %v538
    %v1419 = vunpack.c.h.s8.bf16 %v539
    %v1420 = vunpack.c.h.s8.bf16 %v540
    %v1421 = vunpack.c.h.s8.bf16 %v541
    %v1422 = vunpack.c.h.s8.bf16 %v542
    %v1423 = vunpack.c.h.s8.bf16 %v543
    %v1424 = vunpack.c.h.s8.bf16 %v544
    %v1425 = vunpack.c.h.s8.bf16 %v545
    %v1426 = vunpack.c.h.s8.bf16 %v546
    %v1427 = vunpack.c.l.s8.bf16 %v547
    %v1428 = vunpack.c.l.s8.bf16 %v548
    %v1429 = vunpack.c.l.s8.bf16 %v549
    %v1430 = vunpack.c.l.s8.bf16 %v550
    %v1431 = vunpack.c.l.s8.bf16 %v551
    %v1432 = vunpack.c.l.s8.bf16 %v552
    %v1433 = vunpack.c.l.s8.bf16 %v553
    %v1434 = vunpack.c.l.s8.bf16 %v554
    %v1435 = vunpack.c.l.s8.bf16 %v555
    %v1436 = vunpack.c.l.s8.bf16 %v556
    %v1437 = vunpack.c.l.s8.bf16 %v557
    %v1438 = vunpack.c.l.s8.bf16 %v558
    %v1439 = vunpack.c.l.s8.bf16 %v559
    %v1440 = vunpack.c.l.s8.bf16 %v560
    %v1441 = vunpack.c.l.s8.bf16 %v561
    %v1442 = vunpack.c.l.s8.bf16 %v562
    %v1443 = vunpack.c.h.s8.bf16 %v547
    %v1444 = vunpack.c.h.s8.bf16 %v548
    %v1445 = vunpack.c.h.s8.bf16 %v549
    %v1446 = vunpack.c.h.s8.bf16 %v550
    %v1447 = vunpack.c.h.s8.bf16 %v551
    %v1448 = vunpack.c.h.s8.bf16 %v552
    %v1449 = vunpack.c.h.s8.bf16 %v553
    %v1450 = vunpack.c.h.s8.bf16 %v554
    %v1451 = vunpack.c.h.s8.bf16 %v555
    %v1452 = vunpack.c.h.s8.bf16 %v556
    %v1453 = vunpack.c.h.s8.bf16 %v557
    %v1454 = vunpack.c.h.s8.bf16 %v558
    %v1455 = vunpack.c.h.s8.bf16 %v559
    %v1456 = vunpack.c.h.s8.bf16 %v560
    %v1457 = vunpack.c.h.s8.bf16 %v561
    %v1458 = vunpack.c.h.s8.bf16 %v562
    %v1459 = vunpack.c.l.s8.bf16 %v563
    %v1460 = vunpack.c.l.s8.bf16 %v564
    %v1461 = vunpack.c.l.s8.bf16 %v565
    %v1462 = vunpack.c.l.s8.bf16 %v566
    %v1463 = vunpack.c.l.s8.bf16 %v567
    %v1464 = vunpack.c.l.s8.bf16 %v568
    %v1465 = vunpack.c.l.s8.bf16 %v569
    %v1466 = vunpack.c.l.s8.bf16 %v570
    %v1467 = vunpack.c.l.s8.bf16 %v571
    %v1468 = vunpack.c.l.s8.bf16 %v572
    %v1469 = vunpack.c.l.s8.bf16 %v573
    %v1470 = vunpack.c.l.s8.bf16 %v574
    %v1471 = vunpack.c.l.s8.bf16 %v575
    %v1472 = vunpack.c.l.s8.bf16 %v576
    %v1473 = vunpack.c.l.s8.bf16 %v577
    %v1474 = vunpack.c.l.s8.bf16 %v578
    %v1475 = vunpack.c.h.s8.bf16 %v563
    %v1476 = vunpack.c.h.s8.bf16 %v564
    %v1477 = vunpack.c.h.s8.bf16 %v565
    %v1478 = vunpack.c.h.s8.bf16 %v566
    %v1479 = vunpack.c.h.s8.bf16 %v567
    %v1480 = vunpack.c.h.s8.bf16 %v568
    %v1481 = vunpack.c.h.s8.bf16 %v569
    %v1482 = vunpack.c.h.s8.bf16 %v570
    %v1483 = vunpack.c.h.s8.bf16 %v571
    %v1484 = vunpack.c.h.s8.bf16 %v572
    %v1485 = vunpack.c.h.s8.bf16 %v573
    %v1486 = vunpack.c.h.s8.bf16 %v574
    %v1487 = vunpack.c.h.s8.bf16 %v575
    %v1488 = vunpack.c.h.s8.bf16 %v576
    %v1489 = vunpack.c.h.s8.bf16 %v577
    %v1490 = vunpack.c.h.s8.bf16 %v578
    %v1491 = vunpack.c.l.s8.bf16 %v579
    %v1492 = vunpack.c.l.s8.bf16 %v580
    %v1493 = vunpack.c.l.s8.bf16 %v581
    %v1494 = vunpack.c.l.s8.bf16 %v582
    %v1495 = vunpack.c.l.s8.bf16 %v583
    %v1496 = vunpack.c.l.s8.bf16 %v584
    %v1497 = vunpack.c.l.s8.bf16 %v585
    %v1498 = vunpack.c.l.s8.bf16 %v586
    %v1499 = vunpack.c.l.s8.bf16 %v587
    %v1500 = vunpack.c.l.s8.bf16 %v588
    %v1501 = vunpack.c.l.s8.bf16 %v589
    %v1502 = vunpack.c.l.s8.bf16 %v590
    %v1503 = vunpack.c.l.s8.bf16 %v591
    %v1504 = vunpack.c.l.s8.bf16 %v592
    %v1505 = vunpack.c.l.s8.bf16 %v593
    %v1506 = vunpack.c.l.s8.bf16 %v594
    %v1507 = vunpack.c.h.s8.bf16 %v579
    %v1508 = vunpack.c.h.s8.bf16 %v580
    %v1509 = vunpack.c.h.s8.bf16 %v581
    %v1510 = vunpack.c.h.s8.bf16 %v582
    %v1511 = vunpack.c.h.s8.bf16 %v583
    %v1512 = vunpack.c.h.s8.bf16 %v584
    %v1513 = vunpack.c.h.s8.bf16 %v585
    %v1514 = vunpack.c.h.s8.bf16 %v586
    %v1515 = vunpack.c.h.s8.bf16 %v587
    %v1516 = vunpack.c.h.s8.bf16 %v588
    %v1517 = vunpack.c.h.s8.bf16 %v589
    %v1518 = vunpack.c.h.s8.bf16 %v590
    %v1519 = vunpack.c.h.s8.bf16 %v591
    %v1520 = vunpack.c.h.s8.bf16 %v592
    %v1521 = vunpack.c.h.s8.bf16 %v593
    %v1522 = vunpack.c.h.s8.bf16 %v594
    %v1523 = vunpack.c.l.s8.bf16 %v595
    %v1524 = vunpack.c.l.s8.bf16 %v596
    %v1525 = vunpack.c.l.s8.bf16 %v597
    %v1526 = vunpack.c.l.s8.bf16 %v598
    %v1527 = vunpack.c.l.s8.bf16 %v599
    %v1528 = vunpack.c.l.s8.bf16 %v600
    %v1529 = vunpack.c.l.s8.bf16 %v601
    %v1530 = vunpack.c.l.s8.bf16 %v602
    %v1531 = vunpack.c.l.s8.bf16 %v603
    %v1532 = vunpack.c.l.s8.bf16 %v604
    %v1533 = vunpack.c.l.s8.bf16 %v605
    %v1534 = vunpack.c.l.s8.bf16 %v606
    %v1535 = vunpack.c.l.s8.bf16 %v607
    %v1536 = vunpack.c.l.s8.bf16 %v608
    %v1537 = vunpack.c.l.s8.bf16 %v609
    %v1538 = vunpack.c.l.s8.bf16 %v610
    %v1539 = vunpack.c.h.s8.bf16 %v595
    %v1540 = vunpack.c.h.s8.bf16 %v596
    %v1541 = vunpack.c.h.s8.bf16 %v597
    %v1542 = vunpack.c.h.s8.bf16 %v598
    %v1543 = vunpack.c.h.s8.bf16 %v599
    %v1544 = vunpack.c.h.s8.bf16 %v600
    %v1545 = vunpack.c.h.s8.bf16 %v601
    %v1546 = vunpack.c.h.s8.bf16 %v602
    %v1547 = vunpack.c.h.s8.bf16 %v603
    %v1548 = vunpack.c.h.s8.bf16 %v604
    %v1549 = vunpack.c.h.s8.bf16 %v605
    %v1550 = vunpack.c.h.s8.bf16 %v606
    %v1551 = vunpack.c.h.s8.bf16 %v607
    %v1552 = vunpack.c.h.s8.bf16 %v608
    %v1553 = vunpack.c.h.s8.bf16 %v609
    %v1554 = vunpack.c.h.s8.bf16 %v610
    %v1555 = vunpack.c.l.s8.bf16 %v611
    %v1556 = vunpack.c.l.s8.bf16 %v612
    %v1557 = vunpack.c.l.s8.bf16 %v613
    %v1558 = vunpack.c.l.s8.bf16 %v614
    %v1559 = vunpack.c.l.s8.bf16 %v615
    %v1560 = vunpack.c.l.s8.bf16 %v616
    %v1561 = vunpack.c.l.s8.bf16 %v617
    %v1562 = vunpack.c.l.s8.bf16 %v618
    %v1563 = vunpack.c.l.s8.bf16 %v619
    %v1564 = vunpack.c.l.s8.bf16 %v620
    %v1565 = vunpack.c.l.s8.bf16 %v621
    %v1566 = vunpack.c.l.s8.bf16 %v622
    %v1567 = vunpack.c.l.s8.bf16 %v623
    %v1568 = vunpack.c.l.s8.bf16 %v624
    %v1569 = vunpack.c.l.s8.bf16 %v625
    %v1570 = vunpack.c.l.s8.bf16 %v626
    %v1571 = vunpack.c.h.s8.bf16 %v611
    %v1572 = vunpack.c.h.s8.bf16 %v612
    %v1573 = vunpack.c.h.s8.bf16 %v613
    %v1574 = vunpack.c.h.s8.bf16 %v614
    %v1575 = vunpack.c.h.s8.bf16 %v615
    %v1576 = vunpack.c.h.s8.bf16 %v616
    %v1577 = vunpack.c.h.s8.bf16 %v617
    %v1578 = vunpack.c.h.s8.bf16 %v618
    %v1579 = vunpack.c.h.s8.bf16 %v619
    %v1580 = vunpack.c.h.s8.bf16 %v620
    %v1581 = vunpack.c.h.s8.bf16 %v621
    %v1582 = vunpack.c.h.s8.bf16 %v622
    %v1583 = vunpack.c.h.s8.bf16 %v623
    %v1584 = vunpack.c.h.s8.bf16 %v624
    %v1585 = vunpack.c.h.s8.bf16 %v625
    %v1586 = vunpack.c.h.s8.bf16 %v626
    %v1587 = vunpack.c.l.s8.bf16 %v627
    %v1588 = vunpack.c.l.s8.bf16 %v628
    %v1589 = vunpack.c.l.s8.bf16 %v629
    %v1590 = vunpack.c.l.s8.bf16 %v630
    %v1591 = vunpack.c.l.s8.bf16 %v631
    %v1592 = vunpack.c.l.s8.bf16 %v632
    %v1593 = vunpack.c.l.s8.bf16 %v633
    %v1594 = vunpack.c.l.s8.bf16 %v634
    %v1595 = vunpack.c.l.s8.bf16 %v635
    %v1596 = vunpack.c.l.s8.bf16 %v636
    %v1597 = vunpack.c.l.s8.bf16 %v637
    %v1598 = vunpack.c.l.s8.bf16 %v638
    %v1599 = vunpack.c.l.s8.bf16 %v639
    %v1600 = vunpack.c.l.s8.bf16 %v640
    %v1601 = vunpack.c.l.s8.bf16 %v641
    %v1602 = vunpack.c.l.s8.bf16 %v642
    %v1603 = vunpack.c.h.s8.bf16 %v627
    %v1604 = vunpack.c.h.s8.bf16 %v628
    %v1605 = vunpack.c.h.s8.bf16 %v629
    %v1606 = vunpack.c.h.s8.bf16 %v630
    %v1607 = vunpack.c.h.s8.bf16 %v631
    %v1608 = vunpack.c.h.s8.bf16 %v632
    %v1609 = vunpack.c.h.s8.bf16 %v633
    %v1610 = vunpack.c.h.s8.bf16 %v634
    %v1611 = vunpack.c.h.s8.bf16 %v635
    %v1612 = vunpack.c.h.s8.bf16 %v636
    %v1613 = vunpack.c.h.s8.bf16 %v637
    %v1614 = vunpack.c.h.s8.bf16 %v638
    %v1615 = vunpack.c.h.s8.bf16 %v639
    %v1616 = vunpack.c.h.s8.bf16 %v640
    %v1617 = vunpack.c.h.s8.bf16 %v641
    %v1618 = vunpack.c.h.s8.bf16 %v642
    %v1619 = vunpack.c.l.s8.bf16 %v643
    %v1620 = vunpack.c.l.s8.bf16 %v644
    %v1621 = vunpack.c.l.s8.bf16 %v645
    %v1622 = vunpack.c.l.s8.bf16 %v646
    %v1623 = vunpack.c.l.s8.bf16 %v647
    %v1624 = vunpack.c.l.s8.bf16 %v648
    %v1625 = vunpack.c.l.s8.bf16 %v649
    %v1626 = vunpack.c.l.s8.bf16 %v650
    %v1627 = vunpack.c.l.s8.bf16 %v651
    %v1628 = vunpack.c.l.s8.bf16 %v652
    %v1629 = vunpack.c.l.s8.bf16 %v653
    %v1630 = vunpack.c.l.s8.bf16 %v654
    %v1631 = vunpack.c.l.s8.bf16 %v655
    %v1632 = vunpack.c.l.s8.bf16 %v656
    %v1633 = vunpack.c.l.s8.bf16 %v657
    %v1634 = vunpack.c.l.s8.bf16 %v658
    %v1635 = vunpack.c.h.s8.bf16 %v643
    %v1636 = vunpack.c.h.s8.bf16 %v644
    %v1637 = vunpack.c.h.s8.bf16 %v645
    %v1638 = vunpack.c.h.s8.bf16 %v646
    %v1639 = vunpack.c.h.s8.bf16 %v647
    %v1640 = vunpack.c.h.s8.bf16 %v648
    %v1641 = vunpack.c.h.s8.bf16 %v649
    %v1642 = vunpack.c.h.s8.bf16 %v650
    %v1643 = vunpack.c.h.s8.bf16 %v651
    %v1644 = vunpack.c.h.s8.bf16 %v652
    %v1645 = vunpack.c.h.s8.bf16 %v653
    %v1646 = vunpack.c.h.s8.bf16 %v654
    %v1647 = vunpack.c.h.s8.bf16 %v655
    %v1648 = vunpack.c.h.s8.bf16 %v656
    %v1649 = vunpack.c.h.s8.bf16 %v657
    %v1650 = vunpack.c.h.s8.bf16 %v658
    %v1651 = vunpack.c.l.s8.bf16 %v659
    %v1652 = vunpack.c.l.s8.bf16 %v660
    %v1653 = vunpack.c.l.s8.bf16 %v661
    %v1654 = vunpack.c.l.s8.bf16 %v662
    %v1655 = vunpack.c.l.s8.bf16 %v663
    %v1656 = vunpack.c.l.s8.bf16 %v664
    %v1657 = vunpack.c.l.s8.bf16 %v665
    %v1658 = vunpack.c.l.s8.bf16 %v666
    %v1659 = vunpack.c.l.s8.bf16 %v667
    %v1660 = vunpack.c.l.s8.bf16 %v668
    %v1661 = vunpack.c.l.s8.bf16 %v669
    %v1662 = vunpack.c.l.s8.bf16 %v670
    %v1663 = vunpack.c.l.s8.bf16 %v671
    %v1664 = vunpack.c.l.s8.bf16 %v672
    %v1665 = vunpack.c.l.s8.bf16 %v673
    %v1666 = vunpack.c.l.s8.bf16 %v674
    %v1667 = vunpack.c.h.s8.bf16 %v659
    %v1668 = vunpack.c.h.s8.bf16 %v660
    %v1669 = vunpack.c.h.s8.bf16 %v661
    %v1670 = vunpack.c.h.s8.bf16 %v662
    %v1671 = vunpack.c.h.s8.bf16 %v663
    %v1672 = vunpack.c.h.s8.bf16 %v664
    %v1673 = vunpack.c.h.s8.bf16 %v665
    %v1674 = vunpack.c.h.s8.bf16 %v666
    %v1675 = vunpack.c.h.s8.bf16 %v667
    %v1676 = vunpack.c.h.s8.bf16 %v668
    %v1677 = vunpack.c.h.s8.bf16 %v669
    %v1678 = vunpack.c.h.s8.bf16 %v670
    %v1679 = vunpack.c.h.s8.bf16 %v671
    %v1680 = vunpack.c.h.s8.bf16 %v672
    %v1681 = vunpack.c.h.s8.bf16 %v673
    %v1682 = vunpack.c.h.s8.bf16 %v674
    %v1683 = vunpack.c.l.s8.bf16 %v675
    %v1684 = vunpack.c.l.s8.bf16 %v676
    %v1685 = vunpack.c.l.s8.bf16 %v677
    %v1686 = vunpack.c.l.s8.bf16 %v678
    %v1687 = vunpack.c.l.s8.bf16 %v679
    %v1688 = vunpack.c.l.s8.bf16 %v680
    %v1689 = vunpack.c.l.s8.bf16 %v681
    %v1690 = vunpack.c.l.s8.bf16 %v682
    %v1691 = vunpack.c.l.s8.bf16 %v683
    %v1692 = vunpack.c.l.s8.bf16 %v684
    %v1693 = vunpack.c.l.s8.bf16 %v685
    %v1694 = vunpack.c.l.s8.bf16 %v686
    %v1695 = vunpack.c.l.s8.bf16 %v687
    %v1696 = vunpack.c.l.s8.bf16 %v688
    %v1697 = vunpack.c.l.s8.bf16 %v689
    %v1698 = vunpack.c.l.s8.bf16 %v690
    %v1699 = vunpack.c.h.s8.bf16 %v675
    %v1700 = vunpack.c.h.s8.bf16 %v676
    %v1701 = vunpack.c.h.s8.bf16 %v677
    %v1702 = vunpack.c.h.s8.bf16 %v678
    %v1703 = vunpack.c.h.s8.bf16 %v679
    %v1704 = vunpack.c.h.s8.bf16 %v680
    %v1705 = vunpack.c.h.s8.bf16 %v681
    %v1706 = vunpack.c.h.s8.bf16 %v682
    %v1707 = vunpack.c.h.s8.bf16 %v683
    %v1708 = vunpack.c.h.s8.bf16 %v684
    %v1709 = vunpack.c.h.s8.bf16 %v685
    %v1710 = vunpack.c.h.s8.bf16 %v686
    %v1711 = vunpack.c.h.s8.bf16 %v687
    %v1712 = vunpack.c.h.s8.bf16 %v688
    %v1713 = vunpack.c.h.s8.bf16 %v689
    %v1714 = vunpack.c.h.s8.bf16 %v690
    %1715 = vmatprep.subr.bf16.mxu0 %v804
    %1716 = vmatpush1.bf16.msra.mxu0 %v803
    %1717 = vmatprep.subr.bf16.mxu0 %v788
    %1718 = vmatpush1.bf16.msra.mxu0 %v787
    %1719 = vmatprep.subr.bf16.mxu0 %v772
    %1720 = vmatpush1.bf16.msra.mxu0 %v771
    %1721 = vmatprep.subr.bf16.mxu0 %v756
    %1722 = vmatpush1.bf16.msra.mxu0 %v755
    %1723 = vmatprep.subr.bf16.mxu0 %v740
    %1724 = vmatpush1.bf16.msra.mxu0 %v739
    %1725 = vmatprep.subr.bf16.mxu0 %v724
    %1726 = vmatpush1.bf16.msra.mxu0 %v723
    %1727 = vmatprep.subr.bf16.mxu0 %v708
    %1728 = vmatpush1.bf16.msra.mxu0 %v707
    %1729 = vmatprep.subr.bf16.mxu0 %v692
    %1730 = vmatpush1.bf16.msra.mxu0 %v691
    %1731 = vmatprep.subr.bf16.mxu0 %v932
    %1732 = vmatpush2.bf16.msra.mxu0 %v931
    %1733 = vmatprep.subr.bf16.mxu0 %v916
    %1734 = vmatpush2.bf16.msra.mxu0 %v915
    %1735 = vmatprep.subr.bf16.mxu0 %v900
    %1736 = vmatpush2.bf16.msra.mxu0 %v899
    %1737 = vmatprep.subr.bf16.mxu0 %v884
    %1738 = vmatpush2.bf16.msra.mxu0 %v883
    %1739 = vmatprep.subr.bf16.mxu0 %v868
    %1740 = vmatpush2.bf16.msra.mxu0 %v867
    %1741 = vmatprep.subr.bf16.mxu0 %v852
    %1742 = vmatpush2.bf16.msra.mxu0 %v851
    %1743 = vmatprep.subr.bf16.mxu0 %v836
    %1744 = vmatpush2.bf16.msra.mxu0 %v835
    %1745 = vmatprep.subr.bf16.mxu0 %v820
    %1746 = vmatpush2.bf16.msra.mxu0 %v819
    %1747 = vmatprep.mubr.bf16.mxu0 %v172
    %1748 = vmatmul.mubr.bf16.gmra.mxu0 %v171
    %v1749 = vpop.f32.mrf.mxu0
    %v1750 = vadd.f32 0.0, %v1749
    %v1751 = vpop.f32.mrf.mxu0
    %v1752 = vadd.f32 0.0, %v1751
    %v1753 = vpop.f32.mrf.mxu0
    %v1754 = vpop.f32.mrf.mxu0
    %1755 = vdwg.mxu0
    %1756 = vmatprep.subr.bf16.mxu0 %v1060
    %1757 = vmatpush1.bf16.msra.mxu0 %v1059
    %1758 = vmatprep.subr.bf16.mxu0 %v1044
    %1759 = vmatpush1.bf16.msra.mxu0 %v1043
    %1760 = vmatprep.subr.bf16.mxu0 %v1028
    %1761 = vmatpush1.bf16.msra.mxu0 %v1027
    %1762 = vmatprep.subr.bf16.mxu0 %v1012
    %1763 = vmatpush1.bf16.msra.mxu0 %v1011
    %1764 = vmatprep.subr.bf16.mxu0 %v996
    %1765 = vmatpush1.bf16.msra.mxu0 %v995
    %1766 = vmatprep.subr.bf16.mxu0 %v980
    %1767 = vmatpush1.bf16.msra.mxu0 %v979
    %1768 = vmatprep.subr.bf16.mxu0 %v964
    %1769 = vmatpush1.bf16.msra.mxu0 %v963
    %1770 = vmatprep.subr.bf16.mxu0 %v948
    %1771 = vmatpush1.bf16.msra.mxu0 %v947
    %1772 = vmatprep.subr.bf16.mxu0 %v1188
    %1773 = vmatpush2.bf16.msra.mxu0 %v1187
    %1774 = vmatprep.subr.bf16.mxu0 %v1172
    %1775 = vmatpush2.bf16.msra.mxu0 %v1171
    %1776 = vmatprep.subr.bf16.mxu0 %v1156
    %1777 = vmatpush2.bf16.msra.mxu0 %v1155
    %1778 = vmatprep.subr.bf16.mxu0 %v1140
    %1779 = vmatpush2.bf16.msra.mxu0 %v1139
    %1780 = vmatprep.subr.bf16.mxu0 %v1124
    %1781 = vmatpush2.bf16.msra.mxu0 %v1123
    %1782 = vmatprep.subr.bf16.mxu0 %v1108
    %1783 = vmatpush2.bf16.msra.mxu0 %v1107
    %1784 = vmatprep.subr.bf16.mxu0 %v1092
    %1785 = vmatpush2.bf16.msra.mxu0 %v1091
    %1786 = vmatprep.subr.bf16.mxu0 %v1076
    %1787 = vmatpush2.bf16.msra.mxu0 %v1075
    %1788 = vmatprep.mubr.bf16.mxu0 %v174
    %1789 = vmatmul.mubr.bf16.gmra.mxu0 %v173
    %v1790 = vpop.f32.mrf.mxu0
    %v1791 = vadd.f32 %v1750, %v1790
    %v1792 = vpop.f32.mrf.mxu0
    %v1793 = vadd.f32 %v1752, %v1792
    %v1794 = vpop.f32.mrf.mxu0
    %v1795 = vpop.f32.mrf.mxu0
    %1796 = vdwg.mxu0
    %1797 = vmatprep.subr.bf16.mxu0 %v1316
    %1798 = vmatpush1.bf16.msra.mxu0 %v1315
    %1799 = vmatprep.subr.bf16.mxu0 %v1300
    %1800 = vmatpush1.bf16.msra.mxu0 %v1299
    %1801 = vmatprep.subr.bf16.mxu0 %v1284
    %1802 = vmatpush1.bf16.msra.mxu0 %v1283
    %1803 = vmatprep.subr.bf16.mxu0 %v1268
    %1804 = vmatpush1.bf16.msra.mxu0 %v1267
    %1805 = vmatprep.subr.bf16.mxu0 %v1252
    %1806 = vmatpush1.bf16.msra.mxu0 %v1251
    %1807 = vmatprep.subr.bf16.mxu0 %v1236
    %1808 = vmatpush1.bf16.msra.mxu0 %v1235
    %1809 = vmatprep.subr.bf16.mxu0 %v1220
    %1810 = vmatpush1.bf16.msra.mxu0 %v1219
    %1811 = vmatprep.subr.bf16.mxu0 %v1204
    %1812 = vmatpush1.bf16.msra.mxu0 %v1203
    %1813 = vmatprep.subr.bf16.mxu0 %v1444
    %1814 = vmatpush2.bf16.msra.mxu0 %v1443
    %1815 = vmatprep.subr.bf16.mxu0 %v1428
    %1816 = vmatpush2.bf16.msra.mxu0 %v1427
    %1817 = vmatprep.subr.bf16.mxu0 %v1412
    %1818 = vmatpush2.bf16.msra.mxu0 %v1411
    %1819 = vmatprep.subr.bf16.mxu0 %v1396
    %1820 = vmatpush2.bf16.msra.mxu0 %v1395
    %1821 = vmatprep.subr.bf16.mxu0 %v1380
    %1822 = vmatpush2.bf16.msra.mxu0 %v1379
    %1823 = vmatprep.subr.bf16.mxu0 %v1364
    %1824 = vmatpush2.bf16.msra.mxu0 %v1363
    %1825 = vmatprep.subr.bf16.mxu0 %v1348
    %1826 = vmatpush2.bf16.msra.mxu0 %v1347
    %1827 = vmatprep.subr.bf16.mxu0 %v1332
    %1828 = vmatpush2.bf16.msra.mxu0 %v1331
    %1829 = vmatprep.mubr.bf16.mxu0 %v176
    %1830 = vmatmul.mubr.bf16.gmra.mxu0 %v175
    %v1831 = vpop.f32.mrf.mxu0
    %v1832 = vadd.f32 %v1791, %v1831
    %v1833 = vpop.f32.mrf.mxu0
    %v1834 = vadd.f32 %v1793, %v1833
    %v1835 = vpop.f32.mrf.mxu0
    %v1836 = vpop.f32.mrf.mxu0
    %1837 = vdwg.mxu0
    %1838 = vmatprep.subr.bf16.mxu0 %v1572
    %1839 = vmatpush1.bf16.msra.mxu0 %v1571
    %1840 = vmatprep.subr.bf16.mxu0 %v1556
    %1841 = vmatpush1.bf16.msra.mxu0 %v1555
    %1842 = vmatprep.subr.bf16.mxu0 %v1540
    %1843 = vmatpush1.bf16.msra.mxu0 %v1539
    %1844 = vmatprep.subr.bf16.mxu0 %v1524
    %1845 = vmatpush1.bf16.msra.mxu0 %v1523
    %1846 = vmatprep.subr.bf16.mxu0 %v1508
    %1847 = vmatpush1.bf16.msra.mxu0 %v1507
    %1848 = vmatprep.subr.bf16.mxu0 %v1492
    %1849 = vmatpush1.bf16.msra.mxu0 %v1491
    %1850 = vmatprep.subr.bf16.mxu0 %v1476
    %1851 = vmatpush1.bf16.msra.mxu0 %v1475
    %1852 = vmatprep.subr.bf16.mxu0 %v1460
    %1853 = vmatpush1.bf16.msra.mxu0 %v1459
    %1854 = vmatprep.subr.bf16.mxu0 %v1700
    %1855 = vmatpush2.bf16.msra.mxu0 %v1699
    %1856 = vmatprep.subr.bf16.mxu0 %v1684
    %1857 = vmatpush2.bf16.msra.mxu0 %v1683
    %1858 = vmatprep.subr.bf16.mxu0 %v1668
    %1859 = vmatpush2.bf16.msra.mxu0 %v1667
    %1860 = vmatprep.subr.bf16.mxu0 %v1652
    %1861 = vmatpush2.bf16.msra.mxu0 %v1651
    %1862 = vmatprep.subr.bf16.mxu0 %v1636
    %1863 = vmatpush2.bf16.msra.mxu0 %v1635
    %1864 = vmatprep.subr.bf16.mxu0 %v1620
    %1865 = vmatpush2.bf16.msra.mxu0 %v1619
    %1866 = vmatprep.subr.bf16.mxu0 %v1604
    %1867 = vmatpush2.bf16.msra.mxu0 %v1603
    %1868 = vmatprep.subr.bf16.mxu0 %v1588
    %1869 = vmatpush2.bf16.msra.mxu0 %v1587
    %1870 = vmatprep.mubr.bf16.mxu0 %v178
    %1871 = vmatmul.mubr.bf16.gmra.mxu0 %v177
    %v1872 = vpop.f32.mrf.mxu0
    %v1873 = vadd.f32 %v1832, %v1872
    %v1874 = vpop.f32.mrf.mxu0
    %v1875 = vadd.f32 %v1834, %v1874
    %v1876 = vpop.f32.mrf.mxu0
    %v1877 = vpop.f32.mrf.mxu0
    %1878 = vdwg.mxu0
    %1879 = vmatprep.subr.bf16.mxu0 %v806
    %1880 = vmatpush1.bf16.msra.mxu0 %v805
    %1881 = vmatprep.subr.bf16.mxu0 %v790
    %1882 = vmatpush1.bf16.msra.mxu0 %v789
    %1883 = vmatprep.subr.bf16.mxu0 %v774
    %1884 = vmatpush1.bf16.msra.mxu0 %v773
    %1885 = vmatprep.subr.bf16.mxu0 %v758
    %1886 = vmatpush1.bf16.msra.mxu0 %v757
    %1887 = vmatprep.subr.bf16.mxu0 %v742
    %1888 = vmatpush1.bf16.msra.mxu0 %v741
    %1889 = vmatprep.subr.bf16.mxu0 %v726
    %1890 = vmatpush1.bf16.msra.mxu0 %v725
    %1891 = vmatprep.subr.bf16.mxu0 %v710
    %1892 = vmatpush1.bf16.msra.mxu0 %v709
    %1893 = vmatprep.subr.bf16.mxu0 %v694
    %1894 = vmatpush1.bf16.msra.mxu0 %v693
    %1895 = vmatprep.subr.bf16.mxu0 %v934
    %1896 = vmatpush2.bf16.msra.mxu0 %v933
    %1897 = vmatprep.subr.bf16.mxu0 %v918
    %1898 = vmatpush2.bf16.msra.mxu0 %v917
    %1899 = vmatprep.subr.bf16.mxu0 %v902
    %1900 = vmatpush2.bf16.msra.mxu0 %v901
    %1901 = vmatprep.subr.bf16.mxu0 %v886
    %1902 = vmatpush2.bf16.msra.mxu0 %v885
    %1903 = vmatprep.subr.bf16.mxu0 %v870
    %1904 = vmatpush2.bf16.msra.mxu0 %v869
    %1905 = vmatprep.subr.bf16.mxu0 %v854
    %1906 = vmatpush2.bf16.msra.mxu0 %v853
    %1907 = vmatprep.subr.bf16.mxu0 %v838
    %1908 = vmatpush2.bf16.msra.mxu0 %v837
    %1909 = vmatprep.subr.bf16.mxu0 %v822
    %1910 = vmatpush2.bf16.msra.mxu0 %v821
    %1911 = vmatprep.mubr.bf16.mxu0 %v172
    %1912 = vmatmul.mubr.bf16.gmra.mxu0 %v171
    %v1913 = vpop.f32.mrf.mxu0
    %v1914 = vadd.f32 0.0, %v1913
    %v1915 = vpop.f32.mrf.mxu0
    %v1916 = vadd.f32 0.0, %v1915
    %v1917 = vpop.f32.mrf.mxu0
    %v1918 = vpop.f32.mrf.mxu0
    %1919 = vdwg.mxu0
    %1920 = vmatprep.subr.bf16.mxu0 %v1062
    %1921 = vmatpush1.bf16.msra.mxu0 %v1061
    %1922 = vmatprep.subr.bf16.mxu0 %v1046
    %1923 = vmatpush1.bf16.msra.mxu0 %v1045
    %1924 = vmatprep.subr.bf16.mxu0 %v1030
    %1925 = vmatpush1.bf16.msra.mxu0 %v1029
    %1926 = vmatprep.subr.bf16.mxu0 %v1014
    %1927 = vmatpush1.bf16.msra.mxu0 %v1013
    %1928 = vmatprep.subr.bf16.mxu0 %v998
    %1929 = vmatpush1.bf16.msra.mxu0 %v997
    %1930 = vmatprep.subr.bf16.mxu0 %v982
    %1931 = vmatpush1.bf16.msra.mxu0 %v981
    %1932 = vmatprep.subr.bf16.mxu0 %v966
    %1933 = vmatpush1.bf16.msra.mxu0 %v965
    %1934 = vmatprep.subr.bf16.mxu0 %v950
    %1935 = vmatpush1.bf16.msra.mxu0 %v949
    %1936 = vmatprep.subr.bf16.mxu0 %v1190
    %1937 = vmatpush2.bf16.msra.mxu0 %v1189
    %1938 = vmatprep.subr.bf16.mxu0 %v1174
    %1939 = vmatpush2.bf16.msra.mxu0 %v1173
    %1940 = vmatprep.subr.bf16.mxu0 %v1158
    %1941 = vmatpush2.bf16.msra.mxu0 %v1157
    %1942 = vmatprep.subr.bf16.mxu0 %v1142
    %1943 = vmatpush2.bf16.msra.mxu0 %v1141
    %1944 = vmatprep.subr.bf16.mxu0 %v1126
    %1945 = vmatpush2.bf16.msra.mxu0 %v1125
    %1946 = vmatprep.subr.bf16.mxu0 %v1110
    %1947 = vmatpush2.bf16.msra.mxu0 %v1109
    %1948 = vmatprep.subr.bf16.mxu0 %v1094
    %1949 = vmatpush2.bf16.msra.mxu0 %v1093
    %1950 = vmatprep.subr.bf16.mxu0 %v1078
    %1951 = vmatpush2.bf16.msra.mxu0 %v1077
    %1952 = vmatprep.mubr.bf16.mxu0 %v174
    %1953 = vmatmul.mubr.bf16.gmra.mxu0 %v173
    %v1954 = vpop.f32.mrf.mxu0
    %v1955 = vadd.f32 %v1914, %v1954
    %v1956 = vpop.f32.mrf.mxu0
    %v1957 = vadd.f32 %v1916, %v1956
    %v1958 = vpop.f32.mrf.mxu0
    %v1959 = vpop.f32.mrf.mxu0
    %1960 = vdwg.mxu0
    %1961 = vmatprep.subr.bf16.mxu0 %v1318
    %1962 = vmatpush1.bf16.msra.mxu0 %v1317
    %1963 = vmatprep.subr.bf16.mxu0 %v1302
    %1964 = vmatpush1.bf16.msra.mxu0 %v1301
    %1965 = vmatprep.subr.bf16.mxu0 %v1286
    %1966 = vmatpush1.bf16.msra.mxu0 %v1285
    %1967 = vmatprep.subr.bf16.mxu0 %v1270
    %1968 = vmatpush1.bf16.msra.mxu0 %v1269
    %1969 = vmatprep.subr.bf16.mxu0 %v1254
    %1970 = vmatpush1.bf16.msra.mxu0 %v1253
    %1971 = vmatprep.subr.bf16.mxu0 %v1238
    %1972 = vmatpush1.bf16.msra.mxu0 %v1237
    %1973 = vmatprep.subr.bf16.mxu0 %v1222
    %1974 = vmatpush1.bf16.msra.mxu0 %v1221
    %1975 = vmatprep.subr.bf16.mxu0 %v1206
    %1976 = vmatpush1.bf16.msra.mxu0 %v1205
    %1977 = vmatprep.subr.bf16.mxu0 %v1446
    %1978 = vmatpush2.bf16.msra.mxu0 %v1445
    %1979 = vmatprep.subr.bf16.mxu0 %v1430
    %1980 = vmatpush2.bf16.msra.mxu0 %v1429
    %1981 = vmatprep.subr.bf16.mxu0 %v1414
    %1982 = vmatpush2.bf16.msra.mxu0 %v1413
    %1983 = vmatprep.subr.bf16.mxu0 %v1398
    %1984 = vmatpush2.bf16.msra.mxu0 %v1397
    %1985 = vmatprep.subr.bf16.mxu0 %v1382
    %1986 = vmatpush2.bf16.msra.mxu0 %v1381
    %1987 = vmatprep.subr.bf16.mxu0 %v1366
    %1988 = vmatpush2.bf16.msra.mxu0 %v1365
    %1989 = vmatprep.subr.bf16.mxu0 %v1350
    %1990 = vmatpush2.bf16.msra.mxu0 %v1349
    %1991 = vmatprep.subr.bf16.mxu0 %v1334
    %1992 = vmatpush2.bf16.msra.mxu0 %v1333
    %1993 = vmatprep.mubr.bf16.mxu0 %v176
    %1994 = vmatmul.mubr.bf16.gmra.mxu0 %v175
    %v1995 = vpop.f32.mrf.mxu0
    %v1996 = vadd.f32 %v1955, %v1995
    %v1997 = vpop.f32.mrf.mxu0
    %v1998 = vadd.f32 %v1957, %v1997
    %v1999 = vpop.f32.mrf.mxu0
    %v2000 = vpop.f32.mrf.mxu0
    %2001 = vdwg.mxu0
    %2002 = vmatprep.subr.bf16.mxu0 %v1574
    %2003 = vmatpush1.bf16.msra.mxu0 %v1573
    %2004 = vmatprep.subr.bf16.mxu0 %v1558
    %2005 = vmatpush1.bf16.msra.mxu0 %v1557
    %2006 = vmatprep.subr.bf16.mxu0 %v1542
    %2007 = vmatpush1.bf16.msra.mxu0 %v1541
    %2008 = vmatprep.subr.bf16.mxu0 %v1526
    %2009 = vmatpush1.bf16.msra.mxu0 %v1525
    %2010 = vmatprep.subr.bf16.mxu0 %v1510
    %2011 = vmatpush1.bf16.msra.mxu0 %v1509
    %2012 = vmatprep.subr.bf16.mxu0 %v1494
    %2013 = vmatpush1.bf16.msra.mxu0 %v1493
    %2014 = vmatprep.subr.bf16.mxu0 %v1478
    %2015 = vmatpush1.bf16.msra.mxu0 %v1477
    %2016 = vmatprep.subr.bf16.mxu0 %v1462
    %2017 = vmatpush1.bf16.msra.mxu0 %v1461
    %2018 = vmatprep.subr.bf16.mxu0 %v1702
    %2019 = vmatpush2.bf16.msra.mxu0 %v1701
    %2020 = vmatprep.subr.bf16.mxu0 %v1686
    %2021 = vmatpush2.bf16.msra.mxu0 %v1685
    %2022 = vmatprep.subr.bf16.mxu0 %v1670
    %2023 = vmatpush2.bf16.msra.mxu0 %v1669
    %2024 = vmatprep.subr.bf16.mxu0 %v1654
    %2025 = vmatpush2.bf16.msra.mxu0 %v1653
    %2026 = vmatprep.subr.bf16.mxu0 %v1638
    %2027 = vmatpush2.bf16.msra.mxu0 %v1637
    %2028 = vmatprep.subr.bf16.mxu0 %v1622
    %2029 = vmatpush2.bf16.msra.mxu0 %v1621
    %2030 = vmatprep.subr.bf16.mxu0 %v1606
    %2031 = vmatpush2.bf16.msra.mxu0 %v1605
    %2032 = vmatprep.subr.bf16.mxu0 %v1590
    %2033 = vmatpush2.bf16.msra.mxu0 %v1589
    %2034 = vmatprep.mubr.bf16.mxu0 %v178
    %2035 = vmatmul.mubr.bf16.gmra.mxu0 %v177
    %v2036 = vpop.f32.mrf.mxu0
    %v2037 = vadd.f32 %v1996, %v2036
    %v2038 = vpop.f32.mrf.mxu0
    %v2039 = vadd.f32 %v1998, %v2038
    %v2040 = vpop.f32.mrf.mxu0
    %v2041 = vpop.f32.mrf.mxu0
    %2042 = vdwg.mxu0
    %2043 = vmatprep.subr.bf16.mxu0 %v808
    %2044 = vmatpush1.bf16.msra.mxu0 %v807
    %2045 = vmatprep.subr.bf16.mxu0 %v792
    %2046 = vmatpush1.bf16.msra.mxu0 %v791
    %2047 = vmatprep.subr.bf16.mxu0 %v776
    %2048 = vmatpush1.bf16.msra.mxu0 %v775
    %2049 = vmatprep.subr.bf16.mxu0 %v760
    %2050 = vmatpush1.bf16.msra.mxu0 %v759
    %2051 = vmatprep.subr.bf16.mxu0 %v744
    %2052 = vmatpush1.bf16.msra.mxu0 %v743
    %2053 = vmatprep.subr.bf16.mxu0 %v728
    %2054 = vmatpush1.bf16.msra.mxu0 %v727
    %2055 = vmatprep.subr.bf16.mxu0 %v712
    %2056 = vmatpush1.bf16.msra.mxu0 %v711
    %2057 = vmatprep.subr.bf16.mxu0 %v696
    %2058 = vmatpush1.bf16.msra.mxu0 %v695
    %2059 = vmatprep.subr.bf16.mxu0 %v936
    %2060 = vmatpush2.bf16.msra.mxu0 %v935
    %2061 = vmatprep.subr.bf16.mxu0 %v920
    %2062 = vmatpush2.bf16.msra.mxu0 %v919
    %2063 = vmatprep.subr.bf16.mxu0 %v904
    %2064 = vmatpush2.bf16.msra.mxu0 %v903
    %2065 = vmatprep.subr.bf16.mxu0 %v888
    %2066 = vmatpush2.bf16.msra.mxu0 %v887
    %2067 = vmatprep.subr.bf16.mxu0 %v872
    %2068 = vmatpush2.bf16.msra.mxu0 %v871
    %2069 = vmatprep.subr.bf16.mxu0 %v856
    %2070 = vmatpush2.bf16.msra.mxu0 %v855
    %2071 = vmatprep.subr.bf16.mxu0 %v840
    %2072 = vmatpush2.bf16.msra.mxu0 %v839
    %2073 = vmatprep.subr.bf16.mxu0 %v824
    %2074 = vmatpush2.bf16.msra.mxu0 %v823
    %2075 = vmatprep.mubr.bf16.mxu0 %v172
    %2076 = vmatmul.mubr.bf16.gmra.mxu0 %v171
    %v2077 = vpop.f32.mrf.mxu0
    %v2078 = vadd.f32 0.0, %v2077
    %v2079 = vpop.f32.mrf.mxu0
    %v2080 = vadd.f32 0.0, %v2079
    %v2081 = vpop.f32.mrf.mxu0
    %v2082 = vpop.f32.mrf.mxu0
    %2083 = vdwg.mxu0
    %2084 = vmatprep.subr.bf16.mxu0 %v1064
    %2085 = vmatpush1.bf16.msra.mxu0 %v1063
    %2086 = vmatprep.subr.bf16.mxu0 %v1048
    %2087 = vmatpush1.bf16.msra.mxu0 %v1047
    %2088 = vmatprep.subr.bf16.mxu0 %v1032
    %2089 = vmatpush1.bf16.msra.mxu0 %v1031
    %2090 = vmatprep.subr.bf16.mxu0 %v1016
    %2091 = vmatpush1.bf16.msra.mxu0 %v1015
    %2092 = vmatprep.subr.bf16.mxu0 %v1000
    %2093 = vmatpush1.bf16.msra.mxu0 %v999
    %2094 = vmatprep.subr.bf16.mxu0 %v984
    %2095 = vmatpush1.bf16.msra.mxu0 %v983
    %2096 = vmatprep.subr.bf16.mxu0 %v968
    %2097 = vmatpush1.bf16.msra.mxu0 %v967
    %2098 = vmatprep.subr.bf16.mxu0 %v952
    %2099 = vmatpush1.bf16.msra.mxu0 %v951
    %2100 = vmatprep.subr.bf16.mxu0 %v1192
    %2101 = vmatpush2.bf16.msra.mxu0 %v1191
    %2102 = vmatprep.subr.bf16.mxu0 %v1176
    %2103 = vmatpush2.bf16.msra.mxu0 %v1175
    %2104 = vmatprep.subr.bf16.mxu0 %v1160
    %2105 = vmatpush2.bf16.msra.mxu0 %v1159
    %2106 = vmatprep.subr.bf16.mxu0 %v1144
    %2107 = vmatpush2.bf16.msra.mxu0 %v1143
    %2108 = vmatprep.subr.bf16.mxu0 %v1128
    %2109 = vmatpush2.bf16.msra.mxu0 %v1127
    %2110 = vmatprep.subr.bf16.mxu0 %v1112
    %2111 = vmatpush2.bf16.msra.mxu0 %v1111
    %2112 = vmatprep.subr.bf16.mxu0 %v1096
    %2113 = vmatpush2.bf16.msra.mxu0 %v1095
    %2114 = vmatprep.subr.bf16.mxu0 %v1080
    %2115 = vmatpush2.bf16.msra.mxu0 %v1079
    %2116 = vmatprep.mubr.bf16.mxu0 %v174
    %2117 = vmatmul.mubr.bf16.gmra.mxu0 %v173
    %v2118 = vpop.f32.mrf.mxu0
    %v2119 = vadd.f32 %v2078, %v2118
    %v2120 = vpop.f32.mrf.mxu0
    %v2121 = vadd.f32 %v2080, %v2120
    %v2122 = vpop.f32.mrf.mxu0
    %v2123 = vpop.f32.mrf.mxu0
    %2124 = vdwg.mxu0
    %2125 = vmatprep.subr.bf16.mxu0 %v1320
    %2126 = vmatpush1.bf16.msra.mxu0 %v1319
    %2127 = vmatprep.subr.bf16.mxu0 %v1304
    %2128 = vmatpush1.bf16.msra.mxu0 %v1303
    %2129 = vmatprep.subr.bf16.mxu0 %v1288
    %2130 = vmatpush1.bf16.msra.mxu0 %v1287
    %2131 = vmatprep.subr.bf16.mxu0 %v1272
    %2132 = vmatpush1.bf16.msra.mxu0 %v1271
    %2133 = vmatprep.subr.bf16.mxu0 %v1256
    %2134 = vmatpush1.bf16.msra.mxu0 %v1255
    %2135 = vmatprep.subr.bf16.mxu0 %v1240
    %2136 = vmatpush1.bf16.msra.mxu0 %v1239
    %2137 = vmatprep.subr.bf16.mxu0 %v1224
    %2138 = vmatpush1.bf16.msra.mxu0 %v1223
    %2139 = vmatprep.subr.bf16.mxu0 %v1208
    %2140 = vmatpush1.bf16.msra.mxu0 %v1207
    %2141 = vmatprep.subr.bf16.mxu0 %v1448
    %2142 = vmatpush2.bf16.msra.mxu0 %v1447
    %2143 = vmatprep.subr.bf16.mxu0 %v1432
    %2144 = vmatpush2.bf16.msra.mxu0 %v1431
    %2145 = vmatprep.subr.bf16.mxu0 %v1416
    %2146 = vmatpush2.bf16.msra.mxu0 %v1415
    %2147 = vmatprep.subr.bf16.mxu0 %v1400
    %2148 = vmatpush2.bf16.msra.mxu0 %v1399
    %2149 = vmatprep.subr.bf16.mxu0 %v1384
    %2150 = vmatpush2.bf16.msra.mxu0 %v1383
    %2151 = vmatprep.subr.bf16.mxu0 %v1368
    %2152 = vmatpush2.bf16.msra.mxu0 %v1367
    %2153 = vmatprep.subr.bf16.mxu0 %v1352
    %2154 = vmatpush2.bf16.msra.mxu0 %v1351
    %2155 = vmatprep.subr.bf16.mxu0 %v1336
    %2156 = vmatpush2.bf16.msra.mxu0 %v1335
    %2157 = vmatprep.mubr.bf16.mxu0 %v176
    %2158 = vmatmul.mubr.bf16.gmra.mxu0 %v175
    %v2159 = vpop.f32.mrf.mxu0
    %v2160 = vadd.f32 %v2119, %v2159
    %v2161 = vpop.f32.mrf.mxu0
    %v2162 = vadd.f32 %v2121, %v2161
    %v2163 = vpop.f32.mrf.mxu0
    %v2164 = vpop.f32.mrf.mxu0
    %2165 = vdwg.mxu0
    %2166 = vmatprep.subr.bf16.mxu0 %v1576
    %2167 = vmatpush1.bf16.msra.mxu0 %v1575
    %2168 = vmatprep.subr.bf16.mxu0 %v1560
    %2169 = vmatpush1.bf16.msra.mxu0 %v1559
    %2170 = vmatprep.subr.bf16.mxu0 %v1544
    %2171 = vmatpush1.bf16.msra.mxu0 %v1543
    %2172 = vmatprep.subr.bf16.mxu0 %v1528
    %2173 = vmatpush1.bf16.msra.mxu0 %v1527
    %2174 = vmatprep.subr.bf16.mxu0 %v1512
    %2175 = vmatpush1.bf16.msra.mxu0 %v1511
    %2176 = vmatprep.subr.bf16.mxu0 %v1496
    %2177 = vmatpush1.bf16.msra.mxu0 %v1495
    %2178 = vmatprep.subr.bf16.mxu0 %v1480
    %2179 = vmatpush1.bf16.msra.mxu0 %v1479
    %2180 = vmatprep.subr.bf16.mxu0 %v1464
    %2181 = vmatpush1.bf16.msra.mxu0 %v1463
    %2182 = vmatprep.subr.bf16.mxu0 %v1704
    %2183 = vmatpush2.bf16.msra.mxu0 %v1703
    %2184 = vmatprep.subr.bf16.mxu0 %v1688
    %2185 = vmatpush2.bf16.msra.mxu0 %v1687
    %2186 = vmatprep.subr.bf16.mxu0 %v1672
    %2187 = vmatpush2.bf16.msra.mxu0 %v1671
    %2188 = vmatprep.subr.bf16.mxu0 %v1656
    %2189 = vmatpush2.bf16.msra.mxu0 %v1655
    %2190 = vmatprep.subr.bf16.mxu0 %v1640
    %2191 = vmatpush2.bf16.msra.mxu0 %v1639
    %2192 = vmatprep.subr.bf16.mxu0 %v1624
    %2193 = vmatpush2.bf16.msra.mxu0 %v1623
    %2194 = vmatprep.subr.bf16.mxu0 %v1608
    %2195 = vmatpush2.bf16.msra.mxu0 %v1607
    %2196 = vmatprep.subr.bf16.mxu0 %v1592
    %2197 = vmatpush2.bf16.msra.mxu0 %v1591
    %2198 = vmatprep.mubr.bf16.mxu0 %v178
    %2199 = vmatmul.mubr.bf16.gmra.mxu0 %v177
    %v2200 = vpop.f32.mrf.mxu0
    %v2201 = vadd.f32 %v2160, %v2200
    %v2202 = vpop.f32.mrf.mxu0
    %v2203 = vadd.f32 %v2162, %v2202
    %v2204 = vpop.f32.mrf.mxu0
    %v2205 = vpop.f32.mrf.mxu0
    %2206 = vdwg.mxu0
    %2207 = vmatprep.subr.bf16.mxu0 %v810
    %2208 = vmatpush1.bf16.msra.mxu0 %v809
    %2209 = vmatprep.subr.bf16.mxu0 %v794
    %2210 = vmatpush1.bf16.msra.mxu0 %v793
    %2211 = vmatprep.subr.bf16.mxu0 %v778
    %2212 = vmatpush1.bf16.msra.mxu0 %v777
    %2213 = vmatprep.subr.bf16.mxu0 %v762
    %2214 = vmatpush1.bf16.msra.mxu0 %v761
    %2215 = vmatprep.subr.bf16.mxu0 %v746
    %2216 = vmatpush1.bf16.msra.mxu0 %v745
    %2217 = vmatprep.subr.bf16.mxu0 %v730
    %2218 = vmatpush1.bf16.msra.mxu0 %v729
    %2219 = vmatprep.subr.bf16.mxu0 %v714
    %2220 = vmatpush1.bf16.msra.mxu0 %v713
    %2221 = vmatprep.subr.bf16.mxu0 %v698
    %2222 = vmatpush1.bf16.msra.mxu0 %v697
    %2223 = vmatprep.subr.bf16.mxu0 %v938
    %2224 = vmatpush2.bf16.msra.mxu0 %v937
    %2225 = vmatprep.subr.bf16.mxu0 %v922
    %2226 = vmatpush2.bf16.msra.mxu0 %v921
    %2227 = vmatprep.subr.bf16.mxu0 %v906
    %2228 = vmatpush2.bf16.msra.mxu0 %v905
    %2229 = vmatprep.subr.bf16.mxu0 %v890
    %2230 = vmatpush2.bf16.msra.mxu0 %v889
    %2231 = vmatprep.subr.bf16.mxu0 %v874
    %2232 = vmatpush2.bf16.msra.mxu0 %v873
    %2233 = vmatprep.subr.bf16.mxu0 %v858
    %2234 = vmatpush2.bf16.msra.mxu0 %v857
    %2235 = vmatprep.subr.bf16.mxu0 %v842
    %2236 = vmatpush2.bf16.msra.mxu0 %v841
    %2237 = vmatprep.subr.bf16.mxu0 %v826
    %2238 = vmatpush2.bf16.msra.mxu0 %v825
    %2239 = vmatprep.mubr.bf16.mxu0 %v172
    %2240 = vmatmul.mubr.bf16.gmra.mxu0 %v171
    %v2241 = vpop.f32.mrf.mxu0
    %v2242 = vadd.f32 0.0, %v2241
    %v2243 = vpop.f32.mrf.mxu0
    %v2244 = vadd.f32 0.0, %v2243
    %v2245 = vpop.f32.mrf.mxu0
    %v2246 = vpop.f32.mrf.mxu0
    %2247 = vdwg.mxu0
    %2248 = vmatprep.subr.bf16.mxu0 %v1066
    %2249 = vmatpush1.bf16.msra.mxu0 %v1065
    %2250 = vmatprep.subr.bf16.mxu0 %v1050
    %2251 = vmatpush1.bf16.msra.mxu0 %v1049
    %2252 = vmatprep.subr.bf16.mxu0 %v1034
    %2253 = vmatpush1.bf16.msra.mxu0 %v1033
    %2254 = vmatprep.subr.bf16.mxu0 %v1018
    %2255 = vmatpush1.bf16.msra.mxu0 %v1017
    %2256 = vmatprep.subr.bf16.mxu0 %v1002
    %2257 = vmatpush1.bf16.msra.mxu0 %v1001
    %2258 = vmatprep.subr.bf16.mxu0 %v986
    %2259 = vmatpush1.bf16.msra.mxu0 %v985
    %2260 = vmatprep.subr.bf16.mxu0 %v970
    %2261 = vmatpush1.bf16.msra.mxu0 %v969
    %2262 = vmatprep.subr.bf16.mxu0 %v954
    %2263 = vmatpush1.bf16.msra.mxu0 %v953
    %2264 = vmatprep.subr.bf16.mxu0 %v1194
    %2265 = vmatpush2.bf16.msra.mxu0 %v1193
    %2266 = vmatprep.subr.bf16.mxu0 %v1178
    %2267 = vmatpush2.bf16.msra.mxu0 %v1177
    %2268 = vmatprep.subr.bf16.mxu0 %v1162
    %2269 = vmatpush2.bf16.msra.mxu0 %v1161
    %2270 = vmatprep.subr.bf16.mxu0 %v1146
    %2271 = vmatpush2.bf16.msra.mxu0 %v1145
    %2272 = vmatprep.subr.bf16.mxu0 %v1130
    %2273 = vmatpush2.bf16.msra.mxu0 %v1129
    %2274 = vmatprep.subr.bf16.mxu0 %v1114
    %2275 = vmatpush2.bf16.msra.mxu0 %v1113
    %2276 = vmatprep.subr.bf16.mxu0 %v1098
    %2277 = vmatpush2.bf16.msra.mxu0 %v1097
    %2278 = vmatprep.subr.bf16.mxu0 %v1082
    %2279 = vmatpush2.bf16.msra.mxu0 %v1081
    %2280 = vmatprep.mubr.bf16.mxu0 %v174
    %2281 = vmatmul.mubr.bf16.gmra.mxu0 %v173
    %v2282 = vpop.f32.mrf.mxu0
    %v2283 = vadd.f32 %v2242, %v2282
    %v2284 = vpop.f32.mrf.mxu0
    %v2285 = vadd.f32 %v2244, %v2284
    %v2286 = vpop.f32.mrf.mxu0
    %v2287 = vpop.f32.mrf.mxu0
    %2288 = vdwg.mxu0
    %2289 = vmatprep.subr.bf16.mxu0 %v1322
    %2290 = vmatpush1.bf16.msra.mxu0 %v1321
    %2291 = vmatprep.subr.bf16.mxu0 %v1306
    %2292 = vmatpush1.bf16.msra.mxu0 %v1305
    %2293 = vmatprep.subr.bf16.mxu0 %v1290
    %2294 = vmatpush1.bf16.msra.mxu0 %v1289
    %2295 = vmatprep.subr.bf16.mxu0 %v1274
    %2296 = vmatpush1.bf16.msra.mxu0 %v1273
    %2297 = vmatprep.subr.bf16.mxu0 %v1258
    %2298 = vmatpush1.bf16.msra.mxu0 %v1257
    %2299 = vmatprep.subr.bf16.mxu0 %v1242
    %2300 = vmatpush1.bf16.msra.mxu0 %v1241
    %2301 = vmatprep.subr.bf16.mxu0 %v1226
    %2302 = vmatpush1.bf16.msra.mxu0 %v1225
    %2303 = vmatprep.subr.bf16.mxu0 %v1210
    %2304 = vmatpush1.bf16.msra.mxu0 %v1209
    %2305 = vmatprep.subr.bf16.mxu0 %v1450
    %2306 = vmatpush2.bf16.msra.mxu0 %v1449
    %2307 = vmatprep.subr.bf16.mxu0 %v1434
    %2308 = vmatpush2.bf16.msra.mxu0 %v1433
    %2309 = vmatprep.subr.bf16.mxu0 %v1418
    %2310 = vmatpush2.bf16.msra.mxu0 %v1417
    %2311 = vmatprep.subr.bf16.mxu0 %v1402
    %2312 = vmatpush2.bf16.msra.mxu0 %v1401
    %2313 = vmatprep.subr.bf16.mxu0 %v1386
    %2314 = vmatpush2.bf16.msra.mxu0 %v1385
    %2315 = vmatprep.subr.bf16.mxu0 %v1370
    %2316 = vmatpush2.bf16.msra.mxu0 %v1369
    %2317 = vmatprep.subr.bf16.mxu0 %v1354
    %2318 = vmatpush2.bf16.msra.mxu0 %v1353
    %2319 = vmatprep.subr.bf16.mxu0 %v1338
    %2320 = vmatpush2.bf16.msra.mxu0 %v1337
    %2321 = vmatprep.mubr.bf16.mxu0 %v176
    %2322 = vmatmul.mubr.bf16.gmra.mxu0 %v175
    %v2323 = vpop.f32.mrf.mxu0
    %v2324 = vadd.f32 %v2283, %v2323
    %v2325 = vpop.f32.mrf.mxu0
    %v2326 = vadd.f32 %v2285, %v2325
    %v2327 = vpop.f32.mrf.mxu0
    %v2328 = vpop.f32.mrf.mxu0
    %2329 = vdwg.mxu0
    %2330 = vmatprep.subr.bf16.mxu0 %v1578
    %2331 = vmatpush1.bf16.msra.mxu0 %v1577
    %2332 = vmatprep.subr.bf16.mxu0 %v1562
    %2333 = vmatpush1.bf16.msra.mxu0 %v1561
    %2334 = vmatprep.subr.bf16.mxu0 %v1546
    %2335 = vmatpush1.bf16.msra.mxu0 %v1545
    %2336 = vmatprep.subr.bf16.mxu0 %v1530
    %2337 = vmatpush1.bf16.msra.mxu0 %v1529
    %2338 = vmatprep.subr.bf16.mxu0 %v1514
    %2339 = vmatpush1.bf16.msra.mxu0 %v1513
    %2340 = vmatprep.subr.bf16.mxu0 %v1498
    %2341 = vmatpush1.bf16.msra.mxu0 %v1497
    %2342 = vmatprep.subr.bf16.mxu0 %v1482
    %2343 = vmatpush1.bf16.msra.mxu0 %v1481
    %2344 = vmatprep.subr.bf16.mxu0 %v1466
    %2345 = vmatpush1.bf16.msra.mxu0 %v1465
    %2346 = vmatprep.subr.bf16.mxu0 %v1706
    %2347 = vmatpush2.bf16.msra.mxu0 %v1705
    %2348 = vmatprep.subr.bf16.mxu0 %v1690
    %2349 = vmatpush2.bf16.msra.mxu0 %v1689
    %2350 = vmatprep.subr.bf16.mxu0 %v1674
    %2351 = vmatpush2.bf16.msra.mxu0 %v1673
    %2352 = vmatprep.subr.bf16.mxu0 %v1658
    %2353 = vmatpush2.bf16.msra.mxu0 %v1657
    %2354 = vmatprep.subr.bf16.mxu0 %v1642
    %2355 = vmatpush2.bf16.msra.mxu0 %v1641
    %2356 = vmatprep.subr.bf16.mxu0 %v1626
    %2357 = vmatpush2.bf16.msra.mxu0 %v1625
    %2358 = vmatprep.subr.bf16.mxu0 %v1610
    %2359 = vmatpush2.bf16.msra.mxu0 %v1609
    %2360 = vmatprep.subr.bf16.mxu0 %v1594
    %2361 = vmatpush2.bf16.msra.mxu0 %v1593
    %2362 = vmatprep.mubr.bf16.mxu0 %v178
    %2363 = vmatmul.mubr.bf16.gmra.mxu0 %v177
    %v2364 = vpop.f32.mrf.mxu0
    %v2365 = vadd.f32 %v2324, %v2364
    %v2366 = vpop.f32.mrf.mxu0
    %v2367 = vadd.f32 %v2326, %v2366
    %v2368 = vpop.f32.mrf.mxu0
    %v2369 = vpop.f32.mrf.mxu0
    %2370 = vdwg.mxu0
    %2371 = vmatprep.subr.bf16.mxu0 %v812
    %2372 = vmatpush1.bf16.msra.mxu0 %v811
    %2373 = vmatprep.subr.bf16.mxu0 %v796
    %2374 = vmatpush1.bf16.msra.mxu0 %v795
    %2375 = vmatprep.subr.bf16.mxu0 %v780
    %2376 = vmatpush1.bf16.msra.mxu0 %v779
    %2377 = vmatprep.subr.bf16.mxu0 %v764
    %2378 = vmatpush1.bf16.msra.mxu0 %v763
    %2379 = vmatprep.subr.bf16.mxu0 %v748
    %2380 = vmatpush1.bf16.msra.mxu0 %v747
    %2381 = vmatprep.subr.bf16.mxu0 %v732
    %2382 = vmatpush1.bf16.msra.mxu0 %v731
    %2383 = vmatprep.subr.bf16.mxu0 %v716
    %2384 = vmatpush1.bf16.msra.mxu0 %v715
    %2385 = vmatprep.subr.bf16.mxu0 %v700
    %2386 = vmatpush1.bf16.msra.mxu0 %v699
    %2387 = vmatprep.subr.bf16.mxu0 %v940
    %2388 = vmatpush2.bf16.msra.mxu0 %v939
    %2389 = vmatprep.subr.bf16.mxu0 %v924
    %2390 = vmatpush2.bf16.msra.mxu0 %v923
    %2391 = vmatprep.subr.bf16.mxu0 %v908
    %2392 = vmatpush2.bf16.msra.mxu0 %v907
    %2393 = vmatprep.subr.bf16.mxu0 %v892
    %2394 = vmatpush2.bf16.msra.mxu0 %v891
    %2395 = vmatprep.subr.bf16.mxu0 %v876
    %2396 = vmatpush2.bf16.msra.mxu0 %v875
    %2397 = vmatprep.subr.bf16.mxu0 %v860
    %2398 = vmatpush2.bf16.msra.mxu0 %v859
    %2399 = vmatprep.subr.bf16.mxu0 %v844
    %2400 = vmatpush2.bf16.msra.mxu0 %v843
    %2401 = vmatprep.subr.bf16.mxu0 %v828
    %2402 = vmatpush2.bf16.msra.mxu0 %v827
    %2403 = vmatprep.mubr.bf16.mxu0 %v172
    %2404 = vmatmul.mubr.bf16.gmra.mxu0 %v171
    %v2405 = vpop.f32.mrf.mxu0
    %v2406 = vadd.f32 0.0, %v2405
    %v2407 = vpop.f32.mrf.mxu0
    %v2408 = vadd.f32 0.0, %v2407
    %v2409 = vpop.f32.mrf.mxu0
    %v2410 = vpop.f32.mrf.mxu0
    %2411 = vdwg.mxu0
    %2412 = vmatprep.subr.bf16.mxu0 %v1068
    %2413 = vmatpush1.bf16.msra.mxu0 %v1067
    %2414 = vmatprep.subr.bf16.mxu0 %v1052
    %2415 = vmatpush1.bf16.msra.mxu0 %v1051
    %2416 = vmatprep.subr.bf16.mxu0 %v1036
    %2417 = vmatpush1.bf16.msra.mxu0 %v1035
    %2418 = vmatprep.subr.bf16.mxu0 %v1020
    %2419 = vmatpush1.bf16.msra.mxu0 %v1019
    %2420 = vmatprep.subr.bf16.mxu0 %v1004
    %2421 = vmatpush1.bf16.msra.mxu0 %v1003
    %2422 = vmatprep.subr.bf16.mxu0 %v988
    %2423 = vmatpush1.bf16.msra.mxu0 %v987
    %2424 = vmatprep.subr.bf16.mxu0 %v972
    %2425 = vmatpush1.bf16.msra.mxu0 %v971
    %2426 = vmatprep.subr.bf16.mxu0 %v956
    %2427 = vmatpush1.bf16.msra.mxu0 %v955
    %2428 = vmatprep.subr.bf16.mxu0 %v1196
    %2429 = vmatpush2.bf16.msra.mxu0 %v1195
    %2430 = vmatprep.subr.bf16.mxu0 %v1180
    %2431 = vmatpush2.bf16.msra.mxu0 %v1179
    %2432 = vmatprep.subr.bf16.mxu0 %v1164
    %2433 = vmatpush2.bf16.msra.mxu0 %v1163
    %2434 = vmatprep.subr.bf16.mxu0 %v1148
    %2435 = vmatpush2.bf16.msra.mxu0 %v1147
    %2436 = vmatprep.subr.bf16.mxu0 %v1132
    %2437 = vmatpush2.bf16.msra.mxu0 %v1131
    %2438 = vmatprep.subr.bf16.mxu0 %v1116
    %2439 = vmatpush2.bf16.msra.mxu0 %v1115
    %2440 = vmatprep.subr.bf16.mxu0 %v1100
    %2441 = vmatpush2.bf16.msra.mxu0 %v1099
    %2442 = vmatprep.subr.bf16.mxu0 %v1084
    %2443 = vmatpush2.bf16.msra.mxu0 %v1083
    %2444 = vmatprep.mubr.bf16.mxu0 %v174
    %2445 = vmatmul.mubr.bf16.gmra.mxu0 %v173
    %v2446 = vpop.f32.mrf.mxu0
    %v2447 = vadd.f32 %v2406, %v2446
    %v2448 = vpop.f32.mrf.mxu0
    %v2449 = vadd.f32 %v2408, %v2448
    %v2450 = vpop.f32.mrf.mxu0
    %v2451 = vpop.f32.mrf.mxu0
    %2452 = vdwg.mxu0
    %2453 = vmatprep.subr.bf16.mxu0 %v1324
    %2454 = vmatpush1.bf16.msra.mxu0 %v1323
    %2455 = vmatprep.subr.bf16.mxu0 %v1308
    %2456 = vmatpush1.bf16.msra.mxu0 %v1307
    %2457 = vmatprep.subr.bf16.mxu0 %v1292
    %2458 = vmatpush1.bf16.msra.mxu0 %v1291
    %2459 = vmatprep.subr.bf16.mxu0 %v1276
    %2460 = vmatpush1.bf16.msra.mxu0 %v1275
    %2461 = vmatprep.subr.bf16.mxu0 %v1260
    %2462 = vmatpush1.bf16.msra.mxu0 %v1259
    %2463 = vmatprep.subr.bf16.mxu0 %v1244
    %2464 = vmatpush1.bf16.msra.mxu0 %v1243
    %2465 = vmatprep.subr.bf16.mxu0 %v1228
    %2466 = vmatpush1.bf16.msra.mxu0 %v1227
    %2467 = vmatprep.subr.bf16.mxu0 %v1212
    %2468 = vmatpush1.bf16.msra.mxu0 %v1211
    %2469 = vmatprep.subr.bf16.mxu0 %v1452
    %2470 = vmatpush2.bf16.msra.mxu0 %v1451
    %2471 = vmatprep.subr.bf16.mxu0 %v1436
    %2472 = vmatpush2.bf16.msra.mxu0 %v1435
    %2473 = vmatprep.subr.bf16.mxu0 %v1420
    %2474 = vmatpush2.bf16.msra.mxu0 %v1419
    %2475 = vmatprep.subr.bf16.mxu0 %v1404
    %2476 = vmatpush2.bf16.msra.mxu0 %v1403
    %2477 = vmatprep.subr.bf16.mxu0 %v1388
    %2478 = vmatpush2.bf16.msra.mxu0 %v1387
    %2479 = vmatprep.subr.bf16.mxu0 %v1372
    %2480 = vmatpush2.bf16.msra.mxu0 %v1371
    %2481 = vmatprep.subr.bf16.mxu0 %v1356
    %2482 = vmatpush2.bf16.msra.mxu0 %v1355
    %2483 = vmatprep.subr.bf16.mxu0 %v1340
    %2484 = vmatpush2.bf16.msra.mxu0 %v1339
    %2485 = vmatprep.mubr.bf16.mxu0 %v176
    %2486 = vmatmul.mubr.bf16.gmra.mxu0 %v175
    %v2487 = vpop.f32.mrf.mxu0
    %v2488 = vadd.f32 %v2447, %v2487
    %v2489 = vpop.f32.mrf.mxu0
    %v2490 = vadd.f32 %v2449, %v2489
    %v2491 = vpop.f32.mrf.mxu0
    %v2492 = vpop.f32.mrf.mxu0
    %2493 = vdwg.mxu0
    %2494 = vmatprep.subr.bf16.mxu0 %v1580
    %2495 = vmatpush1.bf16.msra.mxu0 %v1579
    %2496 = vmatprep.subr.bf16.mxu0 %v1564
    %2497 = vmatpush1.bf16.msra.mxu0 %v1563
    %2498 = vmatprep.subr.bf16.mxu0 %v1548
    %2499 = vmatpush1.bf16.msra.mxu0 %v1547
    %2500 = vmatprep.subr.bf16.mxu0 %v1532
    %2501 = vmatpush1.bf16.msra.mxu0 %v1531
    %2502 = vmatprep.subr.bf16.mxu0 %v1516
    %2503 = vmatpush1.bf16.msra.mxu0 %v1515
    %2504 = vmatprep.subr.bf16.mxu0 %v1500
    %2505 = vmatpush1.bf16.msra.mxu0 %v1499
    %2506 = vmatprep.subr.bf16.mxu0 %v1484
    %2507 = vmatpush1.bf16.msra.mxu0 %v1483
    %2508 = vmatprep.subr.bf16.mxu0 %v1468
    %2509 = vmatpush1.bf16.msra.mxu0 %v1467
    %2510 = vmatprep.subr.bf16.mxu0 %v1708
    %2511 = vmatpush2.bf16.msra.mxu0 %v1707
    %2512 = vmatprep.subr.bf16.mxu0 %v1692
    %2513 = vmatpush2.bf16.msra.mxu0 %v1691
    %2514 = vmatprep.subr.bf16.mxu0 %v1676
    %2515 = vmatpush2.bf16.msra.mxu0 %v1675
    %2516 = vmatprep.subr.bf16.mxu0 %v1660
    %2517 = vmatpush2.bf16.msra.mxu0 %v1659
    %2518 = vmatprep.subr.bf16.mxu0 %v1644
    %2519 = vmatpush2.bf16.msra.mxu0 %v1643
    %2520 = vmatprep.subr.bf16.mxu0 %v1628
    %2521 = vmatpush2.bf16.msra.mxu0 %v1627
    %2522 = vmatprep.subr.bf16.mxu0 %v1612
    %2523 = vmatpush2.bf16.msra.mxu0 %v1611
    %2524 = vmatprep.subr.bf16.mxu0 %v1596
    %2525 = vmatpush2.bf16.msra.mxu0 %v1595
    %2526 = vmatprep.mubr.bf16.mxu0 %v178
    %2527 = vmatmul.mubr.bf16.gmra.mxu0 %v177
    %v2528 = vpop.f32.mrf.mxu0
    %v2529 = vadd.f32 %v2488, %v2528
    %v2530 = vpop.f32.mrf.mxu0
    %v2531 = vadd.f32 %v2490, %v2530
    %v2532 = vpop.f32.mrf.mxu0
    %v2533 = vpop.f32.mrf.mxu0
    %2534 = vdwg.mxu0
    %2535 = vmatprep.subr.bf16.mxu0 %v814
    %2536 = vmatpush1.bf16.msra.mxu0 %v813
    %2537 = vmatprep.subr.bf16.mxu0 %v798
    %2538 = vmatpush1.bf16.msra.mxu0 %v797
    %2539 = vmatprep.subr.bf16.mxu0 %v782
    %2540 = vmatpush1.bf16.msra.mxu0 %v781
    %2541 = vmatprep.subr.bf16.mxu0 %v766
    %2542 = vmatpush1.bf16.msra.mxu0 %v765
    %2543 = vmatprep.subr.bf16.mxu0 %v750
    %2544 = vmatpush1.bf16.msra.mxu0 %v749
    %2545 = vmatprep.subr.bf16.mxu0 %v734
    %2546 = vmatpush1.bf16.msra.mxu0 %v733
    %2547 = vmatprep.subr.bf16.mxu0 %v718
    %2548 = vmatpush1.bf16.msra.mxu0 %v717
    %2549 = vmatprep.subr.bf16.mxu0 %v702
    %2550 = vmatpush1.bf16.msra.mxu0 %v701
    %2551 = vmatprep.subr.bf16.mxu0 %v942
    %2552 = vmatpush2.bf16.msra.mxu0 %v941
    %2553 = vmatprep.subr.bf16.mxu0 %v926
    %2554 = vmatpush2.bf16.msra.mxu0 %v925
    %2555 = vmatprep.subr.bf16.mxu0 %v910
    %2556 = vmatpush2.bf16.msra.mxu0 %v909
    %2557 = vmatprep.subr.bf16.mxu0 %v894
    %2558 = vmatpush2.bf16.msra.mxu0 %v893
    %2559 = vmatprep.subr.bf16.mxu0 %v878
    %2560 = vmatpush2.bf16.msra.mxu0 %v877
    %2561 = vmatprep.subr.bf16.mxu0 %v862
    %2562 = vmatpush2.bf16.msra.mxu0 %v861
    %2563 = vmatprep.subr.bf16.mxu0 %v846
    %2564 = vmatpush2.bf16.msra.mxu0 %v845
    %2565 = vmatprep.subr.bf16.mxu0 %v830
    %2566 = vmatpush2.bf16.msra.mxu0 %v829
    %2567 = vmatprep.mubr.bf16.mxu0 %v172
    %2568 = vmatmul.mubr.bf16.gmra.mxu0 %v171
    %v2569 = vpop.f32.mrf.mxu0
    %v2570 = vadd.f32 0.0, %v2569
    %v2571 = vpop.f32.mrf.mxu0
    %v2572 = vadd.f32 0.0, %v2571
    %v2573 = vpop.f32.mrf.mxu0
    %v2574 = vpop.f32.mrf.mxu0
    %2575 = vdwg.mxu0
    %2576 = vmatprep.subr.bf16.mxu0 %v1070
    %2577 = vmatpush1.bf16.msra.mxu0 %v1069
    %2578 = vmatprep.subr.bf16.mxu0 %v1054
    %2579 = vmatpush1.bf16.msra.mxu0 %v1053
    %2580 = vmatprep.subr.bf16.mxu0 %v1038
    %2581 = vmatpush1.bf16.msra.mxu0 %v1037
    %2582 = vmatprep.subr.bf16.mxu0 %v1022
    %2583 = vmatpush1.bf16.msra.mxu0 %v1021
    %2584 = vmatprep.subr.bf16.mxu0 %v1006
    %2585 = vmatpush1.bf16.msra.mxu0 %v1005
    %2586 = vmatprep.subr.bf16.mxu0 %v990
    %2587 = vmatpush1.bf16.msra.mxu0 %v989
    %2588 = vmatprep.subr.bf16.mxu0 %v974
    %2589 = vmatpush1.bf16.msra.mxu0 %v973
    %2590 = vmatprep.subr.bf16.mxu0 %v958
    %2591 = vmatpush1.bf16.msra.mxu0 %v957
    %2592 = vmatprep.subr.bf16.mxu0 %v1198
    %2593 = vmatpush2.bf16.msra.mxu0 %v1197
    %2594 = vmatprep.subr.bf16.mxu0 %v1182
    %2595 = vmatpush2.bf16.msra.mxu0 %v1181
    %2596 = vmatprep.subr.bf16.mxu0 %v1166
    %2597 = vmatpush2.bf16.msra.mxu0 %v1165
    %2598 = vmatprep.subr.bf16.mxu0 %v1150
    %2599 = vmatpush2.bf16.msra.mxu0 %v1149
    %2600 = vmatprep.subr.bf16.mxu0 %v1134
    %2601 = vmatpush2.bf16.msra.mxu0 %v1133
    %2602 = vmatprep.subr.bf16.mxu0 %v1118
    %2603 = vmatpush2.bf16.msra.mxu0 %v1117
    %2604 = vmatprep.subr.bf16.mxu0 %v1102
    %2605 = vmatpush2.bf16.msra.mxu0 %v1101
    %2606 = vmatprep.subr.bf16.mxu0 %v1086
    %2607 = vmatpush2.bf16.msra.mxu0 %v1085
    %2608 = vmatprep.mubr.bf16.mxu0 %v174
    %2609 = vmatmul.mubr.bf16.gmra.mxu0 %v173
    %v2610 = vpop.f32.mrf.mxu0
    %v2611 = vadd.f32 %v2570, %v2610
    %v2612 = vpop.f32.mrf.mxu0
    %v2613 = vadd.f32 %v2572, %v2612
    %v2614 = vpop.f32.mrf.mxu0
    %v2615 = vpop.f32.mrf.mxu0
    %2616 = vdwg.mxu0
    %2617 = vmatprep.subr.bf16.mxu0 %v1326
    %2618 = vmatpush1.bf16.msra.mxu0 %v1325
    %2619 = vmatprep.subr.bf16.mxu0 %v1310
    %2620 = vmatpush1.bf16.msra.mxu0 %v1309
    %2621 = vmatprep.subr.bf16.mxu0 %v1294
    %2622 = vmatpush1.bf16.msra.mxu0 %v1293
    %2623 = vmatprep.subr.bf16.mxu0 %v1278
    %2624 = vmatpush1.bf16.msra.mxu0 %v1277
    %2625 = vmatprep.subr.bf16.mxu0 %v1262
    %2626 = vmatpush1.bf16.msra.mxu0 %v1261
    %2627 = vmatprep.subr.bf16.mxu0 %v1246
    %2628 = vmatpush1.bf16.msra.mxu0 %v1245
    %2629 = vmatprep.subr.bf16.mxu0 %v1230
    %2630 = vmatpush1.bf16.msra.mxu0 %v1229
    %2631 = vmatprep.subr.bf16.mxu0 %v1214
    %2632 = vmatpush1.bf16.msra.mxu0 %v1213
    %2633 = vmatprep.subr.bf16.mxu0 %v1454
    %2634 = vmatpush2.bf16.msra.mxu0 %v1453
    %2635 = vmatprep.subr.bf16.mxu0 %v1438
    %2636 = vmatpush2.bf16.msra.mxu0 %v1437
    %2637 = vmatprep.subr.bf16.mxu0 %v1422
    %2638 = vmatpush2.bf16.msra.mxu0 %v1421
    %2639 = vmatprep.subr.bf16.mxu0 %v1406
    %2640 = vmatpush2.bf16.msra.mxu0 %v1405
    %2641 = vmatprep.subr.bf16.mxu0 %v1390
    %2642 = vmatpush2.bf16.msra.mxu0 %v1389
    %2643 = vmatprep.subr.bf16.mxu0 %v1374
    %2644 = vmatpush2.bf16.msra.mxu0 %v1373
    %2645 = vmatprep.subr.bf16.mxu0 %v1358
    %2646 = vmatpush2.bf16.msra.mxu0 %v1357
    %2647 = vmatprep.subr.bf16.mxu0 %v1342
    %2648 = vmatpush2.bf16.msra.mxu0 %v1341
    %2649 = vmatprep.mubr.bf16.mxu0 %v176
    %2650 = vmatmul.mubr.bf16.gmra.mxu0 %v175
    %v2651 = vpop.f32.mrf.mxu0
    %v2652 = vadd.f32 %v2611, %v2651
    %v2653 = vpop.f32.mrf.mxu0
    %v2654 = vadd.f32 %v2613, %v2653
    %v2655 = vpop.f32.mrf.mxu0
    %v2656 = vpop.f32.mrf.mxu0
    %2657 = vdwg.mxu0
    %2658 = vmatprep.subr.bf16.mxu0 %v1582
    %2659 = vmatpush1.bf16.msra.mxu0 %v1581
    %2660 = vmatprep.subr.bf16.mxu0 %v1566
    %2661 = vmatpush1.bf16.msra.mxu0 %v1565
    %2662 = vmatprep.subr.bf16.mxu0 %v1550
    %2663 = vmatpush1.bf16.msra.mxu0 %v1549
    %2664 = vmatprep.subr.bf16.mxu0 %v1534
    %2665 = vmatpush1.bf16.msra.mxu0 %v1533
    %2666 = vmatprep.subr.bf16.mxu0 %v1518
    %2667 = vmatpush1.bf16.msra.mxu0 %v1517
    %2668 = vmatprep.subr.bf16.mxu0 %v1502
    %2669 = vmatpush1.bf16.msra.mxu0 %v1501
    %2670 = vmatprep.subr.bf16.mxu0 %v1486
    %2671 = vmatpush1.bf16.msra.mxu0 %v1485
    %2672 = vmatprep.subr.bf16.mxu0 %v1470
    %2673 = vmatpush1.bf16.msra.mxu0 %v1469
    %2674 = vmatprep.subr.bf16.mxu0 %v1710
    %2675 = vmatpush2.bf16.msra.mxu0 %v1709
    %2676 = vmatprep.subr.bf16.mxu0 %v1694
    %2677 = vmatpush2.bf16.msra.mxu0 %v1693
    %2678 = vmatprep.subr.bf16.mxu0 %v1678
    %2679 = vmatpush2.bf16.msra.mxu0 %v1677
    %2680 = vmatprep.subr.bf16.mxu0 %v1662
    %2681 = vmatpush2.bf16.msra.mxu0 %v1661
    %2682 = vmatprep.subr.bf16.mxu0 %v1646
    %2683 = vmatpush2.bf16.msra.mxu0 %v1645
    %2684 = vmatprep.subr.bf16.mxu0 %v1630
    %2685 = vmatpush2.bf16.msra.mxu0 %v1629
    %2686 = vmatprep.subr.bf16.mxu0 %v1614
    %2687 = vmatpush2.bf16.msra.mxu0 %v1613
    %2688 = vmatprep.subr.bf16.mxu0 %v1598
    %2689 = vmatpush2.bf16.msra.mxu0 %v1597
    %2690 = vmatprep.mubr.bf16.mxu0 %v178
    %2691 = vmatmul.mubr.bf16.gmra.mxu0 %v177
    %v2692 = vpop.f32.mrf.mxu0
    %v2693 = vadd.f32 %v2652, %v2692
    %v2694 = vpop.f32.mrf.mxu0
    %v2695 = vadd.f32 %v2654, %v2694
    %v2696 = vpop.f32.mrf.mxu0
    %v2697 = vpop.f32.mrf.mxu0
    %2698 = vdwg.mxu0
    %2699 = vmatprep.subr.bf16.mxu0 %v816
    %2700 = vmatpush1.bf16.msra.mxu0 %v815
    %2701 = vmatprep.subr.bf16.mxu0 %v800
    %2702 = vmatpush1.bf16.msra.mxu0 %v799
    %2703 = vmatprep.subr.bf16.mxu0 %v784
    %2704 = vmatpush1.bf16.msra.mxu0 %v783
    %2705 = vmatprep.subr.bf16.mxu0 %v768
    %2706 = vmatpush1.bf16.msra.mxu0 %v767
    %2707 = vmatprep.subr.bf16.mxu0 %v752
    %2708 = vmatpush1.bf16.msra.mxu0 %v751
    %2709 = vmatprep.subr.bf16.mxu0 %v736
    %2710 = vmatpush1.bf16.msra.mxu0 %v735
    %2711 = vmatprep.subr.bf16.mxu0 %v720
    %2712 = vmatpush1.bf16.msra.mxu0 %v719
    %2713 = vmatprep.subr.bf16.mxu0 %v704
    %2714 = vmatpush1.bf16.msra.mxu0 %v703
    %2715 = vmatprep.subr.bf16.mxu0 %v944
    %2716 = vmatpush2.bf16.msra.mxu0 %v943
    %2717 = vmatprep.subr.bf16.mxu0 %v928
    %2718 = vmatpush2.bf16.msra.mxu0 %v927
    %2719 = vmatprep.subr.bf16.mxu0 %v912
    %2720 = vmatpush2.bf16.msra.mxu0 %v911
    %2721 = vmatprep.subr.bf16.mxu0 %v896
    %2722 = vmatpush2.bf16.msra.mxu0 %v895
    %2723 = vmatprep.subr.bf16.mxu0 %v880
    %2724 = vmatpush2.bf16.msra.mxu0 %v879
    %2725 = vmatprep.subr.bf16.mxu0 %v864
    %2726 = vmatpush2.bf16.msra.mxu0 %v863
    %2727 = vmatprep.subr.bf16.mxu0 %v848
    %2728 = vmatpush2.bf16.msra.mxu0 %v847
    %2729 = vmatprep.subr.bf16.mxu0 %v832
    %2730 = vmatpush2.bf16.msra.mxu0 %v831
    %2731 = vmatprep.mubr.bf16.mxu0 %v172
    %2732 = vmatmul.mubr.bf16.gmra.mxu0 %v171
    %v2733 = vpop.f32.mrf.mxu0
    %v2734 = vadd.f32 0.0, %v2733
    %v2735 = vpop.f32.mrf.mxu0
    %v2736 = vadd.f32 0.0, %v2735
    %v2737 = vpop.f32.mrf.mxu0
    %v2738 = vpop.f32.mrf.mxu0
    %2739 = vdwg.mxu0
    %2740 = vmatprep.subr.bf16.mxu0 %v1072
    %2741 = vmatpush1.bf16.msra.mxu0 %v1071
    %2742 = vmatprep.subr.bf16.mxu0 %v1056
    %2743 = vmatpush1.bf16.msra.mxu0 %v1055
    %2744 = vmatprep.subr.bf16.mxu0 %v1040
    %2745 = vmatpush1.bf16.msra.mxu0 %v1039
    %2746 = vmatprep.subr.bf16.mxu0 %v1024
    %2747 = vmatpush1.bf16.msra.mxu0 %v1023
    %2748 = vmatprep.subr.bf16.mxu0 %v1008
    %2749 = vmatpush1.bf16.msra.mxu0 %v1007
    %2750 = vmatprep.subr.bf16.mxu0 %v992
    %2751 = vmatpush1.bf16.msra.mxu0 %v991
    %2752 = vmatprep.subr.bf16.mxu0 %v976
    %2753 = vmatpush1.bf16.msra.mxu0 %v975
    %2754 = vmatprep.subr.bf16.mxu0 %v960
    %2755 = vmatpush1.bf16.msra.mxu0 %v959
    %2756 = vmatprep.subr.bf16.mxu0 %v1200
    %2757 = vmatpush2.bf16.msra.mxu0 %v1199
    %2758 = vmatprep.subr.bf16.mxu0 %v1184
    %2759 = vmatpush2.bf16.msra.mxu0 %v1183
    %2760 = vmatprep.subr.bf16.mxu0 %v1168
    %2761 = vmatpush2.bf16.msra.mxu0 %v1167
    %2762 = vmatprep.subr.bf16.mxu0 %v1152
    %2763 = vmatpush2.bf16.msra.mxu0 %v1151
    %2764 = vmatprep.subr.bf16.mxu0 %v1136
    %2765 = vmatpush2.bf16.msra.mxu0 %v1135
    %2766 = vmatprep.subr.bf16.mxu0 %v1120
    %2767 = vmatpush2.bf16.msra.mxu0 %v1119
    %2768 = vmatprep.subr.bf16.mxu0 %v1104
    %2769 = vmatpush2.bf16.msra.mxu0 %v1103
    %2770 = vmatprep.subr.bf16.mxu0 %v1088
    %2771 = vmatpush2.bf16.msra.mxu0 %v1087
    %2772 = vmatprep.mubr.bf16.mxu0 %v174
    %2773 = vmatmul.mubr.bf16.gmra.mxu0 %v173
    %v2774 = vpop.f32.mrf.mxu0
    %v2775 = vadd.f32 %v2734, %v2774
    %v2776 = vpop.f32.mrf.mxu0
    %v2777 = vadd.f32 %v2736, %v2776
    %v2778 = vpop.f32.mrf.mxu0
    %v2779 = vpop.f32.mrf.mxu0
    %2780 = vdwg.mxu0
    %2781 = vmatprep.subr.bf16.mxu0 %v1328
    %2782 = vmatpush1.bf16.msra.mxu0 %v1327
    %2783 = vmatprep.subr.bf16.mxu0 %v1312
    %2784 = vmatpush1.bf16.msra.mxu0 %v1311
    %2785 = vmatprep.subr.bf16.mxu0 %v1296
    %2786 = vmatpush1.bf16.msra.mxu0 %v1295
    %2787 = vmatprep.subr.bf16.mxu0 %v1280
    %2788 = vmatpush1.bf16.msra.mxu0 %v1279
    %2789 = vmatprep.subr.bf16.mxu0 %v1264
    %2790 = vmatpush1.bf16.msra.mxu0 %v1263
    %2791 = vmatprep.subr.bf16.mxu0 %v1248
    %2792 = vmatpush1.bf16.msra.mxu0 %v1247
    %2793 = vmatprep.subr.bf16.mxu0 %v1232
    %2794 = vmatpush1.bf16.msra.mxu0 %v1231
    %2795 = vmatprep.subr.bf16.mxu0 %v1216
    %2796 = vmatpush1.bf16.msra.mxu0 %v1215
    %2797 = vmatprep.subr.bf16.mxu0 %v1456
    %2798 = vmatpush2.bf16.msra.mxu0 %v1455
    %2799 = vmatprep.subr.bf16.mxu0 %v1440
    %2800 = vmatpush2.bf16.msra.mxu0 %v1439
    %2801 = vmatprep.subr.bf16.mxu0 %v1424
    %2802 = vmatpush2.bf16.msra.mxu0 %v1423
    %2803 = vmatprep.subr.bf16.mxu0 %v1408
    %2804 = vmatpush2.bf16.msra.mxu0 %v1407
    %2805 = vmatprep.subr.bf16.mxu0 %v1392
    %2806 = vmatpush2.bf16.msra.mxu0 %v1391
    %2807 = vmatprep.subr.bf16.mxu0 %v1376
    %2808 = vmatpush2.bf16.msra.mxu0 %v1375
    %2809 = vmatprep.subr.bf16.mxu0 %v1360
    %2810 = vmatpush2.bf16.msra.mxu0 %v1359
    %2811 = vmatprep.subr.bf16.mxu0 %v1344
    %2812 = vmatpush2.bf16.msra.mxu0 %v1343
    %2813 = vmatprep.mubr.bf16.mxu0 %v176
    %2814 = vmatmul.mubr.bf16.gmra.mxu0 %v175
    %v2815 = vpop.f32.mrf.mxu0
    %v2816 = vadd.f32 %v2775, %v2815
    %v2817 = vpop.f32.mrf.mxu0
    %v2818 = vadd.f32 %v2777, %v2817
    %v2819 = vpop.f32.mrf.mxu0
    %v2820 = vpop.f32.mrf.mxu0
    %2821 = vdwg.mxu0
    %2822 = vmatprep.subr.bf16.mxu0 %v1584
    %2823 = vmatpush1.bf16.msra.mxu0 %v1583
    %2824 = vmatprep.subr.bf16.mxu0 %v1568
    %2825 = vmatpush1.bf16.msra.mxu0 %v1567
    %2826 = vmatprep.subr.bf16.mxu0 %v1552
    %2827 = vmatpush1.bf16.msra.mxu0 %v1551
    %2828 = vmatprep.subr.bf16.mxu0 %v1536
    %2829 = vmatpush1.bf16.msra.mxu0 %v1535
    %2830 = vmatprep.subr.bf16.mxu0 %v1520
    %2831 = vmatpush1.bf16.msra.mxu0 %v1519
    %2832 = vmatprep.subr.bf16.mxu0 %v1504
    %2833 = vmatpush1.bf16.msra.mxu0 %v1503
    %2834 = vmatprep.subr.bf16.mxu0 %v1488
    %2835 = vmatpush1.bf16.msra.mxu0 %v1487
    %2836 = vmatprep.subr.bf16.mxu0 %v1472
    %2837 = vmatpush1.bf16.msra.mxu0 %v1471
    %2838 = vmatprep.subr.bf16.mxu0 %v1712
    %2839 = vmatpush2.bf16.msra.mxu0 %v1711
    %2840 = vmatprep.subr.bf16.mxu0 %v1696
    %2841 = vmatpush2.bf16.msra.mxu0 %v1695
    %2842 = vmatprep.subr.bf16.mxu0 %v1680
    %2843 = vmatpush2.bf16.msra.mxu0 %v1679
    %2844 = vmatprep.subr.bf16.mxu0 %v1664
    %2845 = vmatpush2.bf16.msra.mxu0 %v1663
    %2846 = vmatprep.subr.bf16.mxu0 %v1648
    %2847 = vmatpush2.bf16.msra.mxu0 %v1647
    %2848 = vmatprep.subr.bf16.mxu0 %v1632
    %2849 = vmatpush2.bf16.msra.mxu0 %v1631
    %2850 = vmatprep.subr.bf16.mxu0 %v1616
    %2851 = vmatpush2.bf16.msra.mxu0 %v1615
    %2852 = vmatprep.subr.bf16.mxu0 %v1600
    %2853 = vmatpush2.bf16.msra.mxu0 %v1599
    %2854 = vmatprep.mubr.bf16.mxu0 %v178
    %2855 = vmatmul.mubr.bf16.gmra.mxu0 %v177
    %v2856 = vpop.f32.mrf.mxu0
    %v2857 = vadd.f32 %v2816, %v2856
    %v2858 = vpop.f32.mrf.mxu0
    %v2859 = vadd.f32 %v2818, %v2858
    %v2860 = vpop.f32.mrf.mxu0
    %v2861 = vpop.f32.mrf.mxu0
    %2862 = vdwg.mxu0
    %2863 = vmatprep.subr.bf16.mxu0 %v818
    %2864 = vmatpush1.bf16.msra.mxu0 %v817
    %2865 = vmatprep.subr.bf16.mxu0 %v802
    %2866 = vmatpush1.bf16.msra.mxu0 %v801
    %2867 = vmatprep.subr.bf16.mxu0 %v786
    %2868 = vmatpush1.bf16.msra.mxu0 %v785
    %2869 = vmatprep.subr.bf16.mxu0 %v770
    %2870 = vmatpush1.bf16.msra.mxu0 %v769
    %2871 = vmatprep.subr.bf16.mxu0 %v754
    %2872 = vmatpush1.bf16.msra.mxu0 %v753
    %2873 = vmatprep.subr.bf16.mxu0 %v738
    %2874 = vmatpush1.bf16.msra.mxu0 %v737
    %2875 = vmatprep.subr.bf16.mxu0 %v722
    %2876 = vmatpush1.bf16.msra.mxu0 %v721
    %2877 = vmatprep.subr.bf16.mxu0 %v706
    %2878 = vmatpush1.bf16.msra.mxu0 %v705
    %2879 = vmatprep.subr.bf16.mxu0 %v946
    %2880 = vmatpush2.bf16.msra.mxu0 %v945
    %2881 = vmatprep.subr.bf16.mxu0 %v930
    %2882 = vmatpush2.bf16.msra.mxu0 %v929
    %2883 = vmatprep.subr.bf16.mxu0 %v914
    %2884 = vmatpush2.bf16.msra.mxu0 %v913
    %2885 = vmatprep.subr.bf16.mxu0 %v898
    %2886 = vmatpush2.bf16.msra.mxu0 %v897
    %2887 = vmatprep.subr.bf16.mxu0 %v882
    %2888 = vmatpush2.bf16.msra.mxu0 %v881
    %2889 = vmatprep.subr.bf16.mxu0 %v866
    %2890 = vmatpush2.bf16.msra.mxu0 %v865
    %2891 = vmatprep.subr.bf16.mxu0 %v850
    %2892 = vmatpush2.bf16.msra.mxu0 %v849
    %2893 = vmatprep.subr.bf16.mxu0 %v834
    %2894 = vmatpush2.bf16.msra.mxu0 %v833
    %2895 = vmatprep.mubr.bf16.mxu0 %v172
    %2896 = vmatmul.mubr.bf16.gmra.mxu0 %v171
    %v2897 = vpop.f32.mrf.mxu0
    %v2898 = vadd.f32 0.0, %v2897
    %v2899 = vpop.f32.mrf.mxu0
    %v2900 = vadd.f32 0.0, %v2899
    %v2901 = vpop.f32.mrf.mxu0
    %v2902 = vpop.f32.mrf.mxu0
    %2903 = vdwg.mxu0
    %2904 = vmatprep.subr.bf16.mxu0 %v1074
    %2905 = vmatpush1.bf16.msra.mxu0 %v1073
    %2906 = vmatprep.subr.bf16.mxu0 %v1058
    %2907 = vmatpush1.bf16.msra.mxu0 %v1057
    %2908 = vmatprep.subr.bf16.mxu0 %v1042
    %2909 = vmatpush1.bf16.msra.mxu0 %v1041
    %2910 = vmatprep.subr.bf16.mxu0 %v1026
    %2911 = vmatpush1.bf16.msra.mxu0 %v1025
    %2912 = vmatprep.subr.bf16.mxu0 %v1010
    %2913 = vmatpush1.bf16.msra.mxu0 %v1009
    %2914 = vmatprep.subr.bf16.mxu0 %v994
    %2915 = vmatpush1.bf16.msra.mxu0 %v993
    %2916 = vmatprep.subr.bf16.mxu0 %v978
    %2917 = vmatpush1.bf16.msra.mxu0 %v977
    %2918 = vmatprep.subr.bf16.mxu0 %v962
    %2919 = vmatpush1.bf16.msra.mxu0 %v961
    %2920 = vmatprep.subr.bf16.mxu0 %v1202
    %2921 = vmatpush2.bf16.msra.mxu0 %v1201
    %2922 = vmatprep.subr.bf16.mxu0 %v1186
    %2923 = vmatpush2.bf16.msra.mxu0 %v1185
    %2924 = vmatprep.subr.bf16.mxu0 %v1170
    %2925 = vmatpush2.bf16.msra.mxu0 %v1169
    %2926 = vmatprep.subr.bf16.mxu0 %v1154
    %2927 = vmatpush2.bf16.msra.mxu0 %v1153
    %2928 = vmatprep.subr.bf16.mxu0 %v1138
    %2929 = vmatpush2.bf16.msra.mxu0 %v1137
    %2930 = vmatprep.subr.bf16.mxu0 %v1122
    %2931 = vmatpush2.bf16.msra.mxu0 %v1121
    %2932 = vmatprep.subr.bf16.mxu0 %v1106
    %2933 = vmatpush2.bf16.msra.mxu0 %v1105
    %2934 = vmatprep.subr.bf16.mxu0 %v1090
    %2935 = vmatpush2.bf16.msra.mxu0 %v1089
    %2936 = vmatprep.mubr.bf16.mxu0 %v174
    %2937 = vmatmul.mubr.bf16.gmra.mxu0 %v173
    %v2938 = vpop.f32.mrf.mxu0
    %v2939 = vadd.f32 %v2898, %v2938
    %v2940 = vpop.f32.mrf.mxu0
    %v2941 = vadd.f32 %v2900, %v2940
    %v2942 = vpop.f32.mrf.mxu0
    %v2943 = vpop.f32.mrf.mxu0
    %2944 = vdwg.mxu0
    %2945 = vmatprep.subr.bf16.mxu0 %v1330
    %2946 = vmatpush1.bf16.msra.mxu0 %v1329
    %2947 = vmatprep.subr.bf16.mxu0 %v1314
    %2948 = vmatpush1.bf16.msra.mxu0 %v1313
    %2949 = vmatprep.subr.bf16.mxu0 %v1298
    %2950 = vmatpush1.bf16.msra.mxu0 %v1297
    %2951 = vmatprep.subr.bf16.mxu0 %v1282
    %2952 = vmatpush1.bf16.msra.mxu0 %v1281
    %2953 = vmatprep.subr.bf16.mxu0 %v1266
    %2954 = vmatpush1.bf16.msra.mxu0 %v1265
    %2955 = vmatprep.subr.bf16.mxu0 %v1250
    %2956 = vmatpush1.bf16.msra.mxu0 %v1249
    %2957 = vmatprep.subr.bf16.mxu0 %v1234
    %2958 = vmatpush1.bf16.msra.mxu0 %v1233
    %2959 = vmatprep.subr.bf16.mxu0 %v1218
    %2960 = vmatpush1.bf16.msra.mxu0 %v1217
    %2961 = vmatprep.subr.bf16.mxu0 %v1458
    %2962 = vmatpush2.bf16.msra.mxu0 %v1457
    %2963 = vmatprep.subr.bf16.mxu0 %v1442
    %2964 = vmatpush2.bf16.msra.mxu0 %v1441
    %2965 = vmatprep.subr.bf16.mxu0 %v1426
    %2966 = vmatpush2.bf16.msra.mxu0 %v1425
    %2967 = vmatprep.subr.bf16.mxu0 %v1410
    %2968 = vmatpush2.bf16.msra.mxu0 %v1409
    %2969 = vmatprep.subr.bf16.mxu0 %v1394
    %2970 = vmatpush2.bf16.msra.mxu0 %v1393
    %2971 = vmatprep.subr.bf16.mxu0 %v1378
    %2972 = vmatpush2.bf16.msra.mxu0 %v1377
    %2973 = vmatprep.subr.bf16.mxu0 %v1362
    %2974 = vmatpush2.bf16.msra.mxu0 %v1361
    %2975 = vmatprep.subr.bf16.mxu0 %v1346
    %2976 = vmatpush2.bf16.msra.mxu0 %v1345
    %2977 = vmatprep.mubr.bf16.mxu0 %v176
    %2978 = vmatmul.mubr.bf16.gmra.mxu0 %v175
    %v2979 = vpop.f32.mrf.mxu0
    %v2980 = vadd.f32 %v2939, %v2979
    %v2981 = vpop.f32.mrf.mxu0
    %v2982 = vadd.f32 %v2941, %v2981
    %v2983 = vpop.f32.mrf.mxu0
    %v2984 = vpop.f32.mrf.mxu0
    %2985 = vdwg.mxu0
    %2986 = vmatprep.subr.bf16.mxu0 %v1586
    %2987 = vmatpush1.bf16.msra.mxu0 %v1585
    %2988 = vmatprep.subr.bf16.mxu0 %v1570
    %2989 = vmatpush1.bf16.msra.mxu0 %v1569
    %2990 = vmatprep.subr.bf16.mxu0 %v1554
    %2991 = vmatpush1.bf16.msra.mxu0 %v1553
    %2992 = vmatprep.subr.bf16.mxu0 %v1538
    %2993 = vmatpush1.bf16.msra.mxu0 %v1537
    %2994 = vmatprep.subr.bf16.mxu0 %v1522
    %2995 = vmatpush1.bf16.msra.mxu0 %v1521
    %2996 = vmatprep.subr.bf16.mxu0 %v1506
    %2997 = vmatpush1.bf16.msra.mxu0 %v1505
    %2998 = vmatprep.subr.bf16.mxu0 %v1490
    %2999 = vmatpush1.bf16.msra.mxu0 %v1489
    %3000 = vmatprep.subr.bf16.mxu0 %v1474
    %3001 = vmatpush1.bf16.msra.mxu0 %v1473
    %3002 = vmatprep.subr.bf16.mxu0 %v1714
    %3003 = vmatpush2.bf16.msra.mxu0 %v1713
    %3004 = vmatprep.subr.bf16.mxu0 %v1698
    %3005 = vmatpush2.bf16.msra.mxu0 %v1697
    %3006 = vmatprep.subr.bf16.mxu0 %v1682
    %3007 = vmatpush2.bf16.msra.mxu0 %v1681
    %3008 = vmatprep.subr.bf16.mxu0 %v1666
    %3009 = vmatpush2.bf16.msra.mxu0 %v1665
    %3010 = vmatprep.subr.bf16.mxu0 %v1650
    %3011 = vmatpush2.bf16.msra.mxu0 %v1649
    %3012 = vmatprep.subr.bf16.mxu0 %v1634
    %3013 = vmatpush2.bf16.msra.mxu0 %v1633
    %3014 = vmatprep.subr.bf16.mxu0 %v1618
    %3015 = vmatpush2.bf16.msra.mxu0 %v1617
    %3016 = vmatprep.subr.bf16.mxu0 %v1602
    %3017 = vmatpush2.bf16.msra.mxu0 %v1601
    %3018 = vmatprep.mubr.bf16.mxu0 %v178
    %3019 = vmatmul.mubr.bf16.gmra.mxu0 %v177
    %v3020 = vpop.f32.mrf.mxu0
    %v3021 = vadd.f32 %v2980, %v3020
    %v3022 = vpop.f32.mrf.mxu0
    %v3023 = vadd.f32 %v2982, %v3022
    %v3024 = vpop.f32.mrf.mxu0
    %v3025 = vpop.f32.mrf.mxu0
    %3026 = vdwg.mxu0
    %v3027 = vld [vmem:[#allocation4] sm:$0xff]
    %v3028 = vld [vmem:[#allocation4 + $0x8] sm:$0xff]
    %v3031 = vlaneseq
    %v3032 = vshrl.u32 %v3031, 7
    %v3033 = vsub.s32 0, %v3032
    %v3034 = vrot.slane %v3027, %v3033
    %v3035 = vlaneseq
    %v3036 = vshrl.u32 %v3035, 7
    %v3037 = vsub.s32 1, %v3036
    %v3038 = vrot.slane %v3027, %v3037
    %v3039 = vlaneseq
    %v3040 = vshrl.u32 %v3039, 7
    %v3041 = vsub.s32 2, %v3040
    %v3042 = vrot.slane %v3027, %v3041
    %v3043 = vlaneseq
    %v3044 = vshrl.u32 %v3043, 7
    %v3045 = vsub.s32 3, %v3044
    %v3046 = vrot.slane %v3027, %v3045
    %v3047 = vlaneseq
    %v3048 = vshrl.u32 %v3047, 7
    %v3049 = vsub.s32 4, %v3048
    %v3050 = vrot.slane %v3027, %v3049
    %v3051 = vlaneseq
    %v3052 = vshrl.u32 %v3051, 7
    %v3053 = vsub.s32 5, %v3052
    %v3054 = vrot.slane %v3027, %v3053
    %v3055 = vlaneseq
    %v3056 = vshrl.u32 %v3055, 7
    %v3057 = vsub.s32 6, %v3056
    %v3058 = vrot.slane %v3027, %v3057
    %v3059 = vlaneseq
    %v3060 = vshrl.u32 %v3059, 7
    %v3061 = vsub.s32 7, %v3060
    %v3062 = vrot.slane %v3027, %v3061
    %v3063 = vlaneseq
    %v3064 = vshrl.u32 %v3063, 7
    %v3065 = vsub.s32 0, %v3064
    %v3066 = vrot.slane %v3028, %v3065
    %v3067 = vlaneseq
    %v3068 = vshrl.u32 %v3067, 7
    %v3069 = vsub.s32 1, %v3068
    %v3070 = vrot.slane %v3028, %v3069
    %v3071 = vlaneseq
    %v3072 = vshrl.u32 %v3071, 7
    %v3073 = vsub.s32 2, %v3072
    %v3074 = vrot.slane %v3028, %v3073
    %v3075 = vlaneseq
    %v3076 = vshrl.u32 %v3075, 7
    %v3077 = vsub.s32 3, %v3076
    %v3078 = vrot.slane %v3028, %v3077
    %v3079 = vlaneseq
    %v3080 = vshrl.u32 %v3079, 7
    %v3081 = vsub.s32 4, %v3080
    %v3082 = vrot.slane %v3028, %v3081
    %v3083 = vlaneseq
    %v3084 = vshrl.u32 %v3083, 7
    %v3085 = vsub.s32 5, %v3084
    %v3086 = vrot.slane %v3028, %v3085
    %v3087 = vlaneseq
    %v3088 = vshrl.u32 %v3087, 7
    %v3089 = vsub.s32 6, %v3088
    %v3090 = vrot.slane %v3028, %v3089
    %v3091 = vlaneseq
    %v3092 = vshrl.u32 %v3091, 7
    %v3093 = vsub.s32 7, %v3092
    %v3094 = vrot.slane %v3028, %v3093
    %v3111 = vmul.f32 %v1873, %v3034
    %v3112 = vmul.f32 %v1875, %v3038
    %v3113 = vmul.f32 %v2037, %v3042
    %v3114 = vmul.f32 %v2039, %v3046
    %v3115 = vmul.f32 %v2201, %v3050
    %v3116 = vmul.f32 %v2203, %v3054
    %v3117 = vmul.f32 %v2365, %v3058
    %v3118 = vmul.f32 %v2367, %v3062
    %v3119 = vmul.f32 %v2529, %v3066
    %v3120 = vmul.f32 %v2531, %v3070
    %v3121 = vmul.f32 %v2693, %v3074
    %v3122 = vmul.f32 %v2695, %v3078
    %v3123 = vmul.f32 %v2857, %v3082
    %v3124 = vmul.f32 %v2859, %v3086
    %v3125 = vmul.f32 %v3021, %v3090
    %v3126 = vmul.f32 %v3023, %v3094
    %v3127 = vld [vmem:[#allocation6] sm:$0xff]
    %v3128 = vld [vmem:[#allocation6 + $0x8] sm:$0xff]
    %v3131 = vlaneseq
    %v3132 = vshrl.u32 %v3131, 7
    %v3133 = vsub.s32 0, %v3132
    %v3134 = vrot.slane %v3127, %v3133
    %v3135 = vlaneseq
    %v3136 = vshrl.u32 %v3135, 7
    %v3137 = vsub.s32 1, %v3136
    %v3138 = vrot.slane %v3127, %v3137
    %v3139 = vlaneseq
    %v3140 = vshrl.u32 %v3139, 7
    %v3141 = vsub.s32 2, %v3140
    %v3142 = vrot.slane %v3127, %v3141
    %v3143 = vlaneseq
    %v3144 = vshrl.u32 %v3143, 7
    %v3145 = vsub.s32 3, %v3144
    %v3146 = vrot.slane %v3127, %v3145
    %v3147 = vlaneseq
    %v3148 = vshrl.u32 %v3147, 7
    %v3149 = vsub.s32 4, %v3148
    %v3150 = vrot.slane %v3127, %v3149
    %v3151 = vlaneseq
    %v3152 = vshrl.u32 %v3151, 7
    %v3153 = vsub.s32 5, %v3152
    %v3154 = vrot.slane %v3127, %v3153
    %v3155 = vlaneseq
    %v3156 = vshrl.u32 %v3155, 7
    %v3157 = vsub.s32 6, %v3156
    %v3158 = vrot.slane %v3127, %v3157
    %v3159 = vlaneseq
    %v3160 = vshrl.u32 %v3159, 7
    %v3161 = vsub.s32 7, %v3160
    %v3162 = vrot.slane %v3127, %v3161
    %v3163 = vlaneseq
    %v3164 = vshrl.u32 %v3163, 7
    %v3165 = vsub.s32 0, %v3164
    %v3166 = vrot.slane %v3128, %v3165
    %v3167 = vlaneseq
    %v3168 = vshrl.u32 %v3167, 7
    %v3169 = vsub.s32 1, %v3168
    %v3170 = vrot.slane %v3128, %v3169
    %v3171 = vlaneseq
    %v3172 = vshrl.u32 %v3171, 7
    %v3173 = vsub.s32 2, %v3172
    %v3174 = vrot.slane %v3128, %v3173
    %v3175 = vlaneseq
    %v3176 = vshrl.u32 %v3175, 7
    %v3177 = vsub.s32 3, %v3176
    %v3178 = vrot.slane %v3128, %v3177
    %v3179 = vlaneseq
    %v3180 = vshrl.u32 %v3179, 7
    %v3181 = vsub.s32 4, %v3180
    %v3182 = vrot.slane %v3128, %v3181
    %v3183 = vlaneseq
    %v3184 = vshrl.u32 %v3183, 7
    %v3185 = vsub.s32 5, %v3184
    %v3186 = vrot.slane %v3128, %v3185
    %v3187 = vlaneseq
    %v3188 = vshrl.u32 %v3187, 7
    %v3189 = vsub.s32 6, %v3188
    %v3190 = vrot.slane %v3128, %v3189
    %v3191 = vlaneseq
    %v3192 = vshrl.u32 %v3191, 7
    %v3193 = vsub.s32 7, %v3192
    %v3194 = vrot.slane %v3128, %v3193
    %v3211 = vadd.f32 %v3111, %v3134
    %v3212 = vadd.f32 %v3112, %v3138
    %v3213 = vadd.f32 %v3113, %v3142
    %v3214 = vadd.f32 %v3114, %v3146
    %v3215 = vadd.f32 %v3115, %v3150
    %v3216 = vadd.f32 %v3116, %v3154
    %v3217 = vadd.f32 %v3117, %v3158
    %v3218 = vadd.f32 %v3118, %v3162
    %v3219 = vadd.f32 %v3119, %v3166
    %v3220 = vadd.f32 %v3120, %v3170
    %v3221 = vadd.f32 %v3121, %v3174
    %v3222 = vadd.f32 %v3122, %v3178
    %v3223 = vadd.f32 %v3123, %v3182
    %v3224 = vadd.f32 %v3124, %v3186
    %v3225 = vadd.f32 %v3125, %v3190
    %v3226 = vadd.f32 %v3126, %v3194
    %v3227 = vmax.f32 %v3211, 0.0
    %v3228 = vmax.f32 %v3212, 0.0
    %v3229 = vmax.f32 %v3213, 0.0
    %v3230 = vmax.f32 %v3214, 0.0
    %v3231 = vmax.f32 %v3215, 0.0
    %v3232 = vmax.f32 %v3216, 0.0
    %v3233 = vmax.f32 %v3217, 0.0
    %v3234 = vmax.f32 %v3218, 0.0
    %v3235 = vmax.f32 %v3219, 0.0
    %v3236 = vmax.f32 %v3220, 0.0
    %v3237 = vmax.f32 %v3221, 0.0
    %v3238 = vmax.f32 %v3222, 0.0
    %v3239 = vmax.f32 %v3223, 0.0
    %v3240 = vmax.f32 %v3224, 0.0
    %v3241 = vmax.f32 %v3225, 0.0
    %v3242 = vmax.f32 %v3226, 0.0
    %v3243 = vld [vmem:[#allocation7] sm:$0xff]
    %v3244 = vld [vmem:[#allocation7 + $0x8] sm:$0xff]
    %v3245 = vld [vmem:[#allocation7 + $0x10] sm:$0xff]
    %v3246 = vld [vmem:[#allocation7 + $0x18] sm:$0xff]
    %v3247 = vld [vmem:[#allocation7 + $0x20] sm:$0xff]
    %v3248 = vld [vmem:[#allocation7 + $0x28] sm:$0xff]
    %v3249 = vld [vmem:[#allocation7 + $0x30] sm:$0xff]
    %v3250 = vld [vmem:[#allocation7 + $0x38] sm:$0xff]
    %v3251 = vld [vmem:[#allocation7 + $0x40] sm:$0xff]
    %v3252 = vld [vmem:[#allocation7 + $0x48] sm:$0xff]
    %v3253 = vld [vmem:[#allocation7 + $0x50] sm:$0xff]
    %v3254 = vld [vmem:[#allocation7 + $0x58] sm:$0xff]
    %v3255 = vld [vmem:[#allocation7 + $0x60] sm:$0xff]
    %v3256 = vld [vmem:[#allocation7 + $0x68] sm:$0xff]
    %v3257 = vld [vmem:[#allocation7 + $0x70] sm:$0xff]
    %v3258 = vld [vmem:[#allocation7 + $0x78] sm:$0xff]
    %v3259 = vld [vmem:[#allocation7 + $0x80] sm:$0xff]
    %v3260 = vld [vmem:[#allocation7 + $0x88] sm:$0xff]
    %v3261 = vld [vmem:[#allocation7 + $0x90] sm:$0xff]
    %v3262 = vld [vmem:[#allocation7 + $0x98] sm:$0xff]
    %v3263 = vld [vmem:[#allocation7 + $0xa0] sm:$0xff]
    %v3264 = vld [vmem:[#allocation7 + $0xa8] sm:$0xff]
    %v3265 = vld [vmem:[#allocation7 + $0xb0] sm:$0xff]
    %v3266 = vld [vmem:[#allocation7 + $0xb8] sm:$0xff]
    %v3267 = vld [vmem:[#allocation7 + $0xc0] sm:$0xff]
    %v3268 = vld [vmem:[#allocation7 + $0xc8] sm:$0xff]
    %v3269 = vld [vmem:[#allocation7 + $0xd0] sm:$0xff]
    %v3270 = vld [vmem:[#allocation7 + $0xd8] sm:$0xff]
    %v3271 = vld [vmem:[#allocation7 + $0xe0] sm:$0xff]
    %v3272 = vld [vmem:[#allocation7 + $0xe8] sm:$0xff]
    %v3273 = vld [vmem:[#allocation7 + $0xf0] sm:$0xff]
    %v3274 = vld [vmem:[#allocation7 + $0xf8] sm:$0xff]
    %v3275 = vld [vmem:[#allocation7 + $0x100] sm:$0xff]
    %v3276 = vld [vmem:[#allocation7 + $0x108] sm:$0xff]
    %v3277 = vld [vmem:[#allocation7 + $0x110] sm:$0xff]
    %v3278 = vld [vmem:[#allocation7 + $0x118] sm:$0xff]
    %v3279 = vld [vmem:[#allocation7 + $0x120] sm:$0xff]
    %v3280 = vld [vmem:[#allocation7 + $0x128] sm:$0xff]
    %v3281 = vld [vmem:[#allocation7 + $0x130] sm:$0xff]
    %v3282 = vld [vmem:[#allocation7 + $0x138] sm:$0xff]
    %v3283 = vld [vmem:[#allocation7 + $0x140] sm:$0xff]
    %v3284 = vld [vmem:[#allocation7 + $0x148] sm:$0xff]
    %v3285 = vld [vmem:[#allocation7 + $0x150] sm:$0xff]
    %v3286 = vld [vmem:[#allocation7 + $0x158] sm:$0xff]
    %v3287 = vld [vmem:[#allocation7 + $0x160] sm:$0xff]
    %v3288 = vld [vmem:[#allocation7 + $0x168] sm:$0xff]
    %v3289 = vld [vmem:[#allocation7 + $0x170] sm:$0xff]
    %v3290 = vld [vmem:[#allocation7 + $0x178] sm:$0xff]
    %v3291 = vld [vmem:[#allocation7 + $0x180] sm:$0xff]
    %v3292 = vld [vmem:[#allocation7 + $0x188] sm:$0xff]
    %v3293 = vld [vmem:[#allocation7 + $0x190] sm:$0xff]
    %v3294 = vld [vmem:[#allocation7 + $0x198] sm:$0xff]
    %v3295 = vld [vmem:[#allocation7 + $0x1a0] sm:$0xff]
    %v3296 = vld [vmem:[#allocation7 + $0x1a8] sm:$0xff]
    %v3297 = vld [vmem:[#allocation7 + $0x1b0] sm:$0xff]
    %v3298 = vld [vmem:[#allocation7 + $0x1b8] sm:$0xff]
    %v3299 = vld [vmem:[#allocation7 + $0x1c0] sm:$0xff]
    %v3300 = vld [vmem:[#allocation7 + $0x1c8] sm:$0xff]
    %v3301 = vld [vmem:[#allocation7 + $0x1d0] sm:$0xff]
    %v3302 = vld [vmem:[#allocation7 + $0x1d8] sm:$0xff]
    %v3303 = vld [vmem:[#allocation7 + $0x1e0] sm:$0xff]
    %v3304 = vld [vmem:[#allocation7 + $0x1e8] sm:$0xff]
    %v3305 = vld [vmem:[#allocation7 + $0x1f0] sm:$0xff]
    %v3306 = vld [vmem:[#allocation7 + $0x1f8] sm:$0xff]
    %v3307 = vld [vmem:[#allocation7 + $0x200] sm:$0xff]
    %v3308 = vld [vmem:[#allocation7 + $0x208] sm:$0xff]
    %v3309 = vld [vmem:[#allocation7 + $0x210] sm:$0xff]
    %v3310 = vld [vmem:[#allocation7 + $0x218] sm:$0xff]
    %v3311 = vld [vmem:[#allocation7 + $0x220] sm:$0xff]
    %v3312 = vld [vmem:[#allocation7 + $0x228] sm:$0xff]
    %v3313 = vld [vmem:[#allocation7 + $0x230] sm:$0xff]
    %v3314 = vld [vmem:[#allocation7 + $0x238] sm:$0xff]
    %v3315 = vld [vmem:[#allocation7 + $0x240] sm:$0xff]
    %v3316 = vld [vmem:[#allocation7 + $0x248] sm:$0xff]
    %v3317 = vld [vmem:[#allocation7 + $0x250] sm:$0xff]
    %v3318 = vld [vmem:[#allocation7 + $0x258] sm:$0xff]
    %v3319 = vld [vmem:[#allocation7 + $0x260] sm:$0xff]
    %v3320 = vld [vmem:[#allocation7 + $0x268] sm:$0xff]
    %v3321 = vld [vmem:[#allocation7 + $0x270] sm:$0xff]
    %v3322 = vld [vmem:[#allocation7 + $0x278] sm:$0xff]
    %v3323 = vld [vmem:[#allocation7 + $0x280] sm:$0xff]
    %v3324 = vld [vmem:[#allocation7 + $0x288] sm:$0xff]
    %v3325 = vld [vmem:[#allocation7 + $0x290] sm:$0xff]
    %v3326 = vld [vmem:[#allocation7 + $0x298] sm:$0xff]
    %v3327 = vld [vmem:[#allocation7 + $0x2a0] sm:$0xff]
    %v3328 = vld [vmem:[#allocation7 + $0x2a8] sm:$0xff]
    %v3329 = vld [vmem:[#allocation7 + $0x2b0] sm:$0xff]
    %v3330 = vld [vmem:[#allocation7 + $0x2b8] sm:$0xff]
    %v3331 = vld [vmem:[#allocation7 + $0x2c0] sm:$0xff]
    %v3332 = vld [vmem:[#allocation7 + $0x2c8] sm:$0xff]
    %v3333 = vld [vmem:[#allocation7 + $0x2d0] sm:$0xff]
    %v3334 = vld [vmem:[#allocation7 + $0x2d8] sm:$0xff]
    %v3335 = vld [vmem:[#allocation7 + $0x2e0] sm:$0xff]
    %v3336 = vld [vmem:[#allocation7 + $0x2e8] sm:$0xff]
    %v3337 = vld [vmem:[#allocation7 + $0x2f0] sm:$0xff]
    %v3338 = vld [vmem:[#allocation7 + $0x2f8] sm:$0xff]
    %v3339 = vld [vmem:[#allocation7 + $0x300] sm:$0xff]
    %v3340 = vld [vmem:[#allocation7 + $0x308] sm:$0xff]
    %v3341 = vld [vmem:[#allocation7 + $0x310] sm:$0xff]
    %v3342 = vld [vmem:[#allocation7 + $0x318] sm:$0xff]
    %v3343 = vld [vmem:[#allocation7 + $0x320] sm:$0xff]
    %v3344 = vld [vmem:[#allocation7 + $0x328] sm:$0xff]
    %v3345 = vld [vmem:[#allocation7 + $0x330] sm:$0xff]
    %v3346 = vld [vmem:[#allocation7 + $0x338] sm:$0xff]
    %v3347 = vld [vmem:[#allocation7 + $0x340] sm:$0xff]
    %v3348 = vld [vmem:[#allocation7 + $0x348] sm:$0xff]
    %v3349 = vld [vmem:[#allocation7 + $0x350] sm:$0xff]
    %v3350 = vld [vmem:[#allocation7 + $0x358] sm:$0xff]
    %v3351 = vld [vmem:[#allocation7 + $0x360] sm:$0xff]
    %v3352 = vld [vmem:[#allocation7 + $0x368] sm:$0xff]
    %v3353 = vld [vmem:[#allocation7 + $0x370] sm:$0xff]
    %v3354 = vld [vmem:[#allocation7 + $0x378] sm:$0xff]
    %v3355 = vld [vmem:[#allocation7 + $0x380] sm:$0xff]
    %v3356 = vld [vmem:[#allocation7 + $0x388] sm:$0xff]
    %v3357 = vld [vmem:[#allocation7 + $0x390] sm:$0xff]
    %v3358 = vld [vmem:[#allocation7 + $0x398] sm:$0xff]
    %v3359 = vld [vmem:[#allocation7 + $0x3a0] sm:$0xff]
    %v3360 = vld [vmem:[#allocation7 + $0x3a8] sm:$0xff]
    %v3361 = vld [vmem:[#allocation7 + $0x3b0] sm:$0xff]
    %v3362 = vld [vmem:[#allocation7 + $0x3b8] sm:$0xff]
    %v3363 = vld [vmem:[#allocation7 + $0x3c0] sm:$0xff]
    %v3364 = vld [vmem:[#allocation7 + $0x3c8] sm:$0xff]
    %v3365 = vld [vmem:[#allocation7 + $0x3d0] sm:$0xff]
    %v3366 = vld [vmem:[#allocation7 + $0x3d8] sm:$0xff]
    %v3367 = vld [vmem:[#allocation7 + $0x3e0] sm:$0xff]
    %v3368 = vld [vmem:[#allocation7 + $0x3e8] sm:$0xff]
    %v3369 = vld [vmem:[#allocation7 + $0x3f0] sm:$0xff]
    %v3370 = vld [vmem:[#allocation7 + $0x3f8] sm:$0xff]
    %v3371 = vld [vmem:[#allocation7 + $0x400] sm:$0xff]
    %v3372 = vld [vmem:[#allocation7 + $0x408] sm:$0xff]
    %v3373 = vld [vmem:[#allocation7 + $0x410] sm:$0xff]
    %v3374 = vld [vmem:[#allocation7 + $0x418] sm:$0xff]
    %v3375 = vld [vmem:[#allocation7 + $0x420] sm:$0xff]
    %v3376 = vld [vmem:[#allocation7 + $0x428] sm:$0xff]
    %v3377 = vld [vmem:[#allocation7 + $0x430] sm:$0xff]
    %v3378 = vld [vmem:[#allocation7 + $0x438] sm:$0xff]
    %v3379 = vld [vmem:[#allocation7 + $0x440] sm:$0xff]
    %v3380 = vld [vmem:[#allocation7 + $0x448] sm:$0xff]
    %v3381 = vld [vmem:[#allocation7 + $0x450] sm:$0xff]
    %v3382 = vld [vmem:[#allocation7 + $0x458] sm:$0xff]
    %v3383 = vld [vmem:[#allocation7 + $0x460] sm:$0xff]
    %v3384 = vld [vmem:[#allocation7 + $0x468] sm:$0xff]
    %v3385 = vld [vmem:[#allocation7 + $0x470] sm:$0xff]
    %v3386 = vld [vmem:[#allocation7 + $0x478] sm:$0xff]
    %v3387 = vld [vmem:[#allocation7 + $0x480] sm:$0xff]
    %v3388 = vld [vmem:[#allocation7 + $0x488] sm:$0xff]
    %v3389 = vld [vmem:[#allocation7 + $0x490] sm:$0xff]
    %v3390 = vld [vmem:[#allocation7 + $0x498] sm:$0xff]
    %v3391 = vld [vmem:[#allocation7 + $0x4a0] sm:$0xff]
    %v3392 = vld [vmem:[#allocation7 + $0x4a8] sm:$0xff]
    %v3393 = vld [vmem:[#allocation7 + $0x4b0] sm:$0xff]
    %v3394 = vld [vmem:[#allocation7 + $0x4b8] sm:$0xff]
    %v3395 = vld [vmem:[#allocation7 + $0x4c0] sm:$0xff]
    %v3396 = vld [vmem:[#allocation7 + $0x4c8] sm:$0xff]
    %v3397 = vld [vmem:[#allocation7 + $0x4d0] sm:$0xff]
    %v3398 = vld [vmem:[#allocation7 + $0x4d8] sm:$0xff]
    %v3399 = vld [vmem:[#allocation7 + $0x4e0] sm:$0xff]
    %v3400 = vld [vmem:[#allocation7 + $0x4e8] sm:$0xff]
    %v3401 = vld [vmem:[#allocation7 + $0x4f0] sm:$0xff]
    %v3402 = vld [vmem:[#allocation7 + $0x4f8] sm:$0xff]
    %v3403 = vld [vmem:[#allocation7 + $0x500] sm:$0xff]
    %v3404 = vld [vmem:[#allocation7 + $0x508] sm:$0xff]
    %v3405 = vld [vmem:[#allocation7 + $0x510] sm:$0xff]
    %v3406 = vld [vmem:[#allocation7 + $0x518] sm:$0xff]
    %v3407 = vld [vmem:[#allocation7 + $0x520] sm:$0xff]
    %v3408 = vld [vmem:[#allocation7 + $0x528] sm:$0xff]
    %v3409 = vld [vmem:[#allocation7 + $0x530] sm:$0xff]
    %v3410 = vld [vmem:[#allocation7 + $0x538] sm:$0xff]
    %v3411 = vld [vmem:[#allocation7 + $0x540] sm:$0xff]
    %v3412 = vld [vmem:[#allocation7 + $0x548] sm:$0xff]
    %v3413 = vld [vmem:[#allocation7 + $0x550] sm:$0xff]
    %v3414 = vld [vmem:[#allocation7 + $0x558] sm:$0xff]
    %v3415 = vld [vmem:[#allocation7 + $0x560] sm:$0xff]
    %v3416 = vld [vmem:[#allocation7 + $0x568] sm:$0xff]
    %v3417 = vld [vmem:[#allocation7 + $0x570] sm:$0xff]
    %v3418 = vld [vmem:[#allocation7 + $0x578] sm:$0xff]
    %v3419 = vld [vmem:[#allocation7 + $0x580] sm:$0xff]
    %v3420 = vld [vmem:[#allocation7 + $0x588] sm:$0xff]
    %v3421 = vld [vmem:[#allocation7 + $0x590] sm:$0xff]
    %v3422 = vld [vmem:[#allocation7 + $0x598] sm:$0xff]
    %v3423 = vld [vmem:[#allocation7 + $0x5a0] sm:$0xff]
    %v3424 = vld [vmem:[#allocation7 + $0x5a8] sm:$0xff]
    %v3425 = vld [vmem:[#allocation7 + $0x5b0] sm:$0xff]
    %v3426 = vld [vmem:[#allocation7 + $0x5b8] sm:$0xff]
    %v3427 = vld [vmem:[#allocation7 + $0x5c0] sm:$0xff]
    %v3428 = vld [vmem:[#allocation7 + $0x5c8] sm:$0xff]
    %v3429 = vld [vmem:[#allocation7 + $0x5d0] sm:$0xff]
    %v3430 = vld [vmem:[#allocation7 + $0x5d8] sm:$0xff]
    %v3431 = vld [vmem:[#allocation7 + $0x5e0] sm:$0xff]
    %v3432 = vld [vmem:[#allocation7 + $0x5e8] sm:$0xff]
    %v3433 = vld [vmem:[#allocation7 + $0x5f0] sm:$0xff]
    %v3434 = vld [vmem:[#allocation7 + $0x5f8] sm:$0xff]
    %v3435 = vld [vmem:[#allocation7 + $0x600] sm:$0xff]
    %v3436 = vld [vmem:[#allocation7 + $0x608] sm:$0xff]
    %v3437 = vld [vmem:[#allocation7 + $0x610] sm:$0xff]
    %v3438 = vld [vmem:[#allocation7 + $0x618] sm:$0xff]
    %v3439 = vld [vmem:[#allocation7 + $0x620] sm:$0xff]
    %v3440 = vld [vmem:[#allocation7 + $0x628] sm:$0xff]
    %v3441 = vld [vmem:[#allocation7 + $0x630] sm:$0xff]
    %v3442 = vld [vmem:[#allocation7 + $0x638] sm:$0xff]
    %v3443 = vld [vmem:[#allocation7 + $0x640] sm:$0xff]
    %v3444 = vld [vmem:[#allocation7 + $0x648] sm:$0xff]
    %v3445 = vld [vmem:[#allocation7 + $0x650] sm:$0xff]
    %v3446 = vld [vmem:[#allocation7 + $0x658] sm:$0xff]
    %v3447 = vld [vmem:[#allocation7 + $0x660] sm:$0xff]
    %v3448 = vld [vmem:[#allocation7 + $0x668] sm:$0xff]
    %v3449 = vld [vmem:[#allocation7 + $0x670] sm:$0xff]
    %v3450 = vld [vmem:[#allocation7 + $0x678] sm:$0xff]
    %v3451 = vld [vmem:[#allocation7 + $0x680] sm:$0xff]
    %v3452 = vld [vmem:[#allocation7 + $0x688] sm:$0xff]
    %v3453 = vld [vmem:[#allocation7 + $0x690] sm:$0xff]
    %v3454 = vld [vmem:[#allocation7 + $0x698] sm:$0xff]
    %v3455 = vld [vmem:[#allocation7 + $0x6a0] sm:$0xff]
    %v3456 = vld [vmem:[#allocation7 + $0x6a8] sm:$0xff]
    %v3457 = vld [vmem:[#allocation7 + $0x6b0] sm:$0xff]
    %v3458 = vld [vmem:[#allocation7 + $0x6b8] sm:$0xff]
    %v3459 = vld [vmem:[#allocation7 + $0x6c0] sm:$0xff]
    %v3460 = vld [vmem:[#allocation7 + $0x6c8] sm:$0xff]
    %v3461 = vld [vmem:[#allocation7 + $0x6d0] sm:$0xff]
    %v3462 = vld [vmem:[#allocation7 + $0x6d8] sm:$0xff]
    %v3463 = vld [vmem:[#allocation7 + $0x6e0] sm:$0xff]
    %v3464 = vld [vmem:[#allocation7 + $0x6e8] sm:$0xff]
    %v3465 = vld [vmem:[#allocation7 + $0x6f0] sm:$0xff]
    %v3466 = vld [vmem:[#allocation7 + $0x6f8] sm:$0xff]
    %v3467 = vld [vmem:[#allocation7 + $0x700] sm:$0xff]
    %v3468 = vld [vmem:[#allocation7 + $0x708] sm:$0xff]
    %v3469 = vld [vmem:[#allocation7 + $0x710] sm:$0xff]
    %v3470 = vld [vmem:[#allocation7 + $0x718] sm:$0xff]
    %v3471 = vld [vmem:[#allocation7 + $0x720] sm:$0xff]
    %v3472 = vld [vmem:[#allocation7 + $0x728] sm:$0xff]
    %v3473 = vld [vmem:[#allocation7 + $0x730] sm:$0xff]
    %v3474 = vld [vmem:[#allocation7 + $0x738] sm:$0xff]
    %v3475 = vld [vmem:[#allocation7 + $0x740] sm:$0xff]
    %v3476 = vld [vmem:[#allocation7 + $0x748] sm:$0xff]
    %v3477 = vld [vmem:[#allocation7 + $0x750] sm:$0xff]
    %v3478 = vld [vmem:[#allocation7 + $0x758] sm:$0xff]
    %v3479 = vld [vmem:[#allocation7 + $0x760] sm:$0xff]
    %v3480 = vld [vmem:[#allocation7 + $0x768] sm:$0xff]
    %v3481 = vld [vmem:[#allocation7 + $0x770] sm:$0xff]
    %v3482 = vld [vmem:[#allocation7 + $0x778] sm:$0xff]
    %v3483 = vld [vmem:[#allocation7 + $0x780] sm:$0xff]
    %v3484 = vld [vmem:[#allocation7 + $0x788] sm:$0xff]
    %v3485 = vld [vmem:[#allocation7 + $0x790] sm:$0xff]
    %v3486 = vld [vmem:[#allocation7 + $0x798] sm:$0xff]
    %v3487 = vld [vmem:[#allocation7 + $0x7a0] sm:$0xff]
    %v3488 = vld [vmem:[#allocation7 + $0x7a8] sm:$0xff]
    %v3489 = vld [vmem:[#allocation7 + $0x7b0] sm:$0xff]
    %v3490 = vld [vmem:[#allocation7 + $0x7b8] sm:$0xff]
    %v3491 = vld [vmem:[#allocation7 + $0x7c0] sm:$0xff]
    %v3492 = vld [vmem:[#allocation7 + $0x7c8] sm:$0xff]
    %v3493 = vld [vmem:[#allocation7 + $0x7d0] sm:$0xff]
    %v3494 = vld [vmem:[#allocation7 + $0x7d8] sm:$0xff]
    %v3495 = vld [vmem:[#allocation7 + $0x7e0] sm:$0xff]
    %v3496 = vld [vmem:[#allocation7 + $0x7e8] sm:$0xff]
    %v3497 = vld [vmem:[#allocation7 + $0x7f0] sm:$0xff]
    %v3498 = vld [vmem:[#allocation7 + $0x7f8] sm:$0xff]
    %v3499 = vunpack.c.l.s8.bf16 %v3243
    %v3500 = vunpack.c.l.s8.bf16 %v3244
    %v3501 = vunpack.c.l.s8.bf16 %v3245
    %v3502 = vunpack.c.l.s8.bf16 %v3246
    %v3503 = vunpack.c.h.s8.bf16 %v3243
    %v3504 = vunpack.c.h.s8.bf16 %v3244
    %v3505 = vunpack.c.h.s8.bf16 %v3245
    %v3506 = vunpack.c.h.s8.bf16 %v3246
    %v3507 = vunpack.c.l.s8.bf16 %v3247
    %v3508 = vunpack.c.l.s8.bf16 %v3248
    %v3509 = vunpack.c.l.s8.bf16 %v3249
    %v3510 = vunpack.c.l.s8.bf16 %v3250
    %v3511 = vunpack.c.h.s8.bf16 %v3247
    %v3512 = vunpack.c.h.s8.bf16 %v3248
    %v3513 = vunpack.c.h.s8.bf16 %v3249
    %v3514 = vunpack.c.h.s8.bf16 %v3250
    %v3515 = vunpack.c.l.s8.bf16 %v3251
    %v3516 = vunpack.c.l.s8.bf16 %v3252
    %v3517 = vunpack.c.l.s8.bf16 %v3253
    %v3518 = vunpack.c.l.s8.bf16 %v3254
    %v3519 = vunpack.c.h.s8.bf16 %v3251
    %v3520 = vunpack.c.h.s8.bf16 %v3252
    %v3521 = vunpack.c.h.s8.bf16 %v3253
    %v3522 = vunpack.c.h.s8.bf16 %v3254
    %v3523 = vunpack.c.l.s8.bf16 %v3255
    %v3524 = vunpack.c.l.s8.bf16 %v3256
    %v3525 = vunpack.c.l.s8.bf16 %v3257
    %v3526 = vunpack.c.l.s8.bf16 %v3258
    %v3527 = vunpack.c.h.s8.bf16 %v3255
    %v3528 = vunpack.c.h.s8.bf16 %v3256
    %v3529 = vunpack.c.h.s8.bf16 %v3257
    %v3530 = vunpack.c.h.s8.bf16 %v3258
    %v3531 = vunpack.c.l.s8.bf16 %v3259
    %v3532 = vunpack.c.l.s8.bf16 %v3260
    %v3533 = vunpack.c.l.s8.bf16 %v3261
    %v3534 = vunpack.c.l.s8.bf16 %v3262
    %v3535 = vunpack.c.h.s8.bf16 %v3259
    %v3536 = vunpack.c.h.s8.bf16 %v3260
    %v3537 = vunpack.c.h.s8.bf16 %v3261
    %v3538 = vunpack.c.h.s8.bf16 %v3262
    %v3539 = vunpack.c.l.s8.bf16 %v3263
    %v3540 = vunpack.c.l.s8.bf16 %v3264
    %v3541 = vunpack.c.l.s8.bf16 %v3265
    %v3542 = vunpack.c.l.s8.bf16 %v3266
    %v3543 = vunpack.c.h.s8.bf16 %v3263
    %v3544 = vunpack.c.h.s8.bf16 %v3264
    %v3545 = vunpack.c.h.s8.bf16 %v3265
    %v3546 = vunpack.c.h.s8.bf16 %v3266
    %v3547 = vunpack.c.l.s8.bf16 %v3267
    %v3548 = vunpack.c.l.s8.bf16 %v3268
    %v3549 = vunpack.c.l.s8.bf16 %v3269
    %v3550 = vunpack.c.l.s8.bf16 %v3270
    %v3551 = vunpack.c.h.s8.bf16 %v3267
    %v3552 = vunpack.c.h.s8.bf16 %v3268
    %v3553 = vunpack.c.h.s8.bf16 %v3269
    %v3554 = vunpack.c.h.s8.bf16 %v3270
    %v3555 = vunpack.c.l.s8.bf16 %v3271
    %v3556 = vunpack.c.l.s8.bf16 %v3272
    %v3557 = vunpack.c.l.s8.bf16 %v3273
    %v3558 = vunpack.c.l.s8.bf16 %v3274
    %v3559 = vunpack.c.h.s8.bf16 %v3271
    %v3560 = vunpack.c.h.s8.bf16 %v3272
    %v3561 = vunpack.c.h.s8.bf16 %v3273
    %v3562 = vunpack.c.h.s8.bf16 %v3274
    %v3563 = vunpack.c.l.s8.bf16 %v3275
    %v3564 = vunpack.c.l.s8.bf16 %v3276
    %v3565 = vunpack.c.l.s8.bf16 %v3277
    %v3566 = vunpack.c.l.s8.bf16 %v3278
    %v3567 = vunpack.c.h.s8.bf16 %v3275
    %v3568 = vunpack.c.h.s8.bf16 %v3276
    %v3569 = vunpack.c.h.s8.bf16 %v3277
    %v3570 = vunpack.c.h.s8.bf16 %v3278
    %v3571 = vunpack.c.l.s8.bf16 %v3279
    %v3572 = vunpack.c.l.s8.bf16 %v3280
    %v3573 = vunpack.c.l.s8.bf16 %v3281
    %v3574 = vunpack.c.l.s8.bf16 %v3282
    %v3575 = vunpack.c.h.s8.bf16 %v3279
    %v3576 = vunpack.c.h.s8.bf16 %v3280
    %v3577 = vunpack.c.h.s8.bf16 %v3281
    %v3578 = vunpack.c.h.s8.bf16 %v3282
    %v3579 = vunpack.c.l.s8.bf16 %v3283
    %v3580 = vunpack.c.l.s8.bf16 %v3284
    %v3581 = vunpack.c.l.s8.bf16 %v3285
    %v3582 = vunpack.c.l.s8.bf16 %v3286
    %v3583 = vunpack.c.h.s8.bf16 %v3283
    %v3584 = vunpack.c.h.s8.bf16 %v3284
    %v3585 = vunpack.c.h.s8.bf16 %v3285
    %v3586 = vunpack.c.h.s8.bf16 %v3286
    %v3587 = vunpack.c.l.s8.bf16 %v3287
    %v3588 = vunpack.c.l.s8.bf16 %v3288
    %v3589 = vunpack.c.l.s8.bf16 %v3289
    %v3590 = vunpack.c.l.s8.bf16 %v3290
    %v3591 = vunpack.c.h.s8.bf16 %v3287
    %v3592 = vunpack.c.h.s8.bf16 %v3288
    %v3593 = vunpack.c.h.s8.bf16 %v3289
    %v3594 = vunpack.c.h.s8.bf16 %v3290
    %v3595 = vunpack.c.l.s8.bf16 %v3291
    %v3596 = vunpack.c.l.s8.bf16 %v3292
    %v3597 = vunpack.c.l.s8.bf16 %v3293
    %v3598 = vunpack.c.l.s8.bf16 %v3294
    %v3599 = vunpack.c.h.s8.bf16 %v3291
    %v3600 = vunpack.c.h.s8.bf16 %v3292
    %v3601 = vunpack.c.h.s8.bf16 %v3293
    %v3602 = vunpack.c.h.s8.bf16 %v3294
    %v3603 = vunpack.c.l.s8.bf16 %v3295
    %v3604 = vunpack.c.l.s8.bf16 %v3296
    %v3605 = vunpack.c.l.s8.bf16 %v3297
    %v3606 = vunpack.c.l.s8.bf16 %v3298
    %v3607 = vunpack.c.h.s8.bf16 %v3295
    %v3608 = vunpack.c.h.s8.bf16 %v3296
    %v3609 = vunpack.c.h.s8.bf16 %v3297
    %v3610 = vunpack.c.h.s8.bf16 %v3298
    %v3611 = vunpack.c.l.s8.bf16 %v3299
    %v3612 = vunpack.c.l.s8.bf16 %v3300
    %v3613 = vunpack.c.l.s8.bf16 %v3301
    %v3614 = vunpack.c.l.s8.bf16 %v3302
    %v3615 = vunpack.c.h.s8.bf16 %v3299
    %v3616 = vunpack.c.h.s8.bf16 %v3300
    %v3617 = vunpack.c.h.s8.bf16 %v3301
    %v3618 = vunpack.c.h.s8.bf16 %v3302
    %v3619 = vunpack.c.l.s8.bf16 %v3303
    %v3620 = vunpack.c.l.s8.bf16 %v3304
    %v3621 = vunpack.c.l.s8.bf16 %v3305
    %v3622 = vunpack.c.l.s8.bf16 %v3306
    %v3623 = vunpack.c.h.s8.bf16 %v3303
    %v3624 = vunpack.c.h.s8.bf16 %v3304
    %v3625 = vunpack.c.h.s8.bf16 %v3305
    %v3626 = vunpack.c.h.s8.bf16 %v3306
    %v3627 = vunpack.c.l.s8.bf16 %v3307
    %v3628 = vunpack.c.l.s8.bf16 %v3308
    %v3629 = vunpack.c.l.s8.bf16 %v3309
    %v3630 = vunpack.c.l.s8.bf16 %v3310
    %v3631 = vunpack.c.h.s8.bf16 %v3307
    %v3632 = vunpack.c.h.s8.bf16 %v3308
    %v3633 = vunpack.c.h.s8.bf16 %v3309
    %v3634 = vunpack.c.h.s8.bf16 %v3310
    %v3635 = vunpack.c.l.s8.bf16 %v3311
    %v3636 = vunpack.c.l.s8.bf16 %v3312
    %v3637 = vunpack.c.l.s8.bf16 %v3313
    %v3638 = vunpack.c.l.s8.bf16 %v3314
    %v3639 = vunpack.c.h.s8.bf16 %v3311
    %v3640 = vunpack.c.h.s8.bf16 %v3312
    %v3641 = vunpack.c.h.s8.bf16 %v3313
    %v3642 = vunpack.c.h.s8.bf16 %v3314
    %v3643 = vunpack.c.l.s8.bf16 %v3315
    %v3644 = vunpack.c.l.s8.bf16 %v3316
    %v3645 = vunpack.c.l.s8.bf16 %v3317
    %v3646 = vunpack.c.l.s8.bf16 %v3318
    %v3647 = vunpack.c.h.s8.bf16 %v3315
    %v3648 = vunpack.c.h.s8.bf16 %v3316
    %v3649 = vunpack.c.h.s8.bf16 %v3317
    %v3650 = vunpack.c.h.s8.bf16 %v3318
    %v3651 = vunpack.c.l.s8.bf16 %v3319
    %v3652 = vunpack.c.l.s8.bf16 %v3320
    %v3653 = vunpack.c.l.s8.bf16 %v3321
    %v3654 = vunpack.c.l.s8.bf16 %v3322
    %v3655 = vunpack.c.h.s8.bf16 %v3319
    %v3656 = vunpack.c.h.s8.bf16 %v3320
    %v3657 = vunpack.c.h.s8.bf16 %v3321
    %v3658 = vunpack.c.h.s8.bf16 %v3322
    %v3659 = vunpack.c.l.s8.bf16 %v3323
    %v3660 = vunpack.c.l.s8.bf16 %v3324
    %v3661 = vunpack.c.l.s8.bf16 %v3325
    %v3662 = vunpack.c.l.s8.bf16 %v3326
    %v3663 = vunpack.c.h.s8.bf16 %v3323
    %v3664 = vunpack.c.h.s8.bf16 %v3324
    %v3665 = vunpack.c.h.s8.bf16 %v3325
    %v3666 = vunpack.c.h.s8.bf16 %v3326
    %v3667 = vunpack.c.l.s8.bf16 %v3327
    %v3668 = vunpack.c.l.s8.bf16 %v3328
    %v3669 = vunpack.c.l.s8.bf16 %v3329
    %v3670 = vunpack.c.l.s8.bf16 %v3330
    %v3671 = vunpack.c.h.s8.bf16 %v3327
    %v3672 = vunpack.c.h.s8.bf16 %v3328
    %v3673 = vunpack.c.h.s8.bf16 %v3329
    %v3674 = vunpack.c.h.s8.bf16 %v3330
    %v3675 = vunpack.c.l.s8.bf16 %v3331
    %v3676 = vunpack.c.l.s8.bf16 %v3332
    %v3677 = vunpack.c.l.s8.bf16 %v3333
    %v3678 = vunpack.c.l.s8.bf16 %v3334
    %v3679 = vunpack.c.h.s8.bf16 %v3331
    %v3680 = vunpack.c.h.s8.bf16 %v3332
    %v3681 = vunpack.c.h.s8.bf16 %v3333
    %v3682 = vunpack.c.h.s8.bf16 %v3334
    %v3683 = vunpack.c.l.s8.bf16 %v3335
    %v3684 = vunpack.c.l.s8.bf16 %v3336
    %v3685 = vunpack.c.l.s8.bf16 %v3337
    %v3686 = vunpack.c.l.s8.bf16 %v3338
    %v3687 = vunpack.c.h.s8.bf16 %v3335
    %v3688 = vunpack.c.h.s8.bf16 %v3336
    %v3689 = vunpack.c.h.s8.bf16 %v3337
    %v3690 = vunpack.c.h.s8.bf16 %v3338
    %v3691 = vunpack.c.l.s8.bf16 %v3339
    %v3692 = vunpack.c.l.s8.bf16 %v3340
    %v3693 = vunpack.c.l.s8.bf16 %v3341
    %v3694 = vunpack.c.l.s8.bf16 %v3342
    %v3695 = vunpack.c.h.s8.bf16 %v3339
    %v3696 = vunpack.c.h.s8.bf16 %v3340
    %v3697 = vunpack.c.h.s8.bf16 %v3341
    %v3698 = vunpack.c.h.s8.bf16 %v3342
    %v3699 = vunpack.c.l.s8.bf16 %v3343
    %v3700 = vunpack.c.l.s8.bf16 %v3344
    %v3701 = vunpack.c.l.s8.bf16 %v3345
    %v3702 = vunpack.c.l.s8.bf16 %v3346
    %v3703 = vunpack.c.h.s8.bf16 %v3343
    %v3704 = vunpack.c.h.s8.bf16 %v3344
    %v3705 = vunpack.c.h.s8.bf16 %v3345
    %v3706 = vunpack.c.h.s8.bf16 %v3346
    %v3707 = vunpack.c.l.s8.bf16 %v3347
    %v3708 = vunpack.c.l.s8.bf16 %v3348
    %v3709 = vunpack.c.l.s8.bf16 %v3349
    %v3710 = vunpack.c.l.s8.bf16 %v3350
    %v3711 = vunpack.c.h.s8.bf16 %v3347
    %v3712 = vunpack.c.h.s8.bf16 %v3348
    %v3713 = vunpack.c.h.s8.bf16 %v3349
    %v3714 = vunpack.c.h.s8.bf16 %v3350
    %v3715 = vunpack.c.l.s8.bf16 %v3351
    %v3716 = vunpack.c.l.s8.bf16 %v3352
    %v3717 = vunpack.c.l.s8.bf16 %v3353
    %v3718 = vunpack.c.l.s8.bf16 %v3354
    %v3719 = vunpack.c.h.s8.bf16 %v3351
    %v3720 = vunpack.c.h.s8.bf16 %v3352
    %v3721 = vunpack.c.h.s8.bf16 %v3353
    %v3722 = vunpack.c.h.s8.bf16 %v3354
    %v3723 = vunpack.c.l.s8.bf16 %v3355
    %v3724 = vunpack.c.l.s8.bf16 %v3356
    %v3725 = vunpack.c.l.s8.bf16 %v3357
    %v3726 = vunpack.c.l.s8.bf16 %v3358
    %v3727 = vunpack.c.h.s8.bf16 %v3355
    %v3728 = vunpack.c.h.s8.bf16 %v3356
    %v3729 = vunpack.c.h.s8.bf16 %v3357
    %v3730 = vunpack.c.h.s8.bf16 %v3358
    %v3731 = vunpack.c.l.s8.bf16 %v3359
    %v3732 = vunpack.c.l.s8.bf16 %v3360
    %v3733 = vunpack.c.l.s8.bf16 %v3361
    %v3734 = vunpack.c.l.s8.bf16 %v3362
    %v3735 = vunpack.c.h.s8.bf16 %v3359
    %v3736 = vunpack.c.h.s8.bf16 %v3360
    %v3737 = vunpack.c.h.s8.bf16 %v3361
    %v3738 = vunpack.c.h.s8.bf16 %v3362
    %v3739 = vunpack.c.l.s8.bf16 %v3363
    %v3740 = vunpack.c.l.s8.bf16 %v3364
    %v3741 = vunpack.c.l.s8.bf16 %v3365
    %v3742 = vunpack.c.l.s8.bf16 %v3366
    %v3743 = vunpack.c.h.s8.bf16 %v3363
    %v3744 = vunpack.c.h.s8.bf16 %v3364
    %v3745 = vunpack.c.h.s8.bf16 %v3365
    %v3746 = vunpack.c.h.s8.bf16 %v3366
    %v3747 = vunpack.c.l.s8.bf16 %v3367
    %v3748 = vunpack.c.l.s8.bf16 %v3368
    %v3749 = vunpack.c.l.s8.bf16 %v3369
    %v3750 = vunpack.c.l.s8.bf16 %v3370
    %v3751 = vunpack.c.h.s8.bf16 %v3367
    %v3752 = vunpack.c.h.s8.bf16 %v3368
    %v3753 = vunpack.c.h.s8.bf16 %v3369
    %v3754 = vunpack.c.h.s8.bf16 %v3370
    %v3755 = vunpack.c.l.s8.bf16 %v3371
    %v3756 = vunpack.c.l.s8.bf16 %v3372
    %v3757 = vunpack.c.l.s8.bf16 %v3373
    %v3758 = vunpack.c.l.s8.bf16 %v3374
    %v3759 = vunpack.c.h.s8.bf16 %v3371
    %v3760 = vunpack.c.h.s8.bf16 %v3372
    %v3761 = vunpack.c.h.s8.bf16 %v3373
    %v3762 = vunpack.c.h.s8.bf16 %v3374
    %v3763 = vunpack.c.l.s8.bf16 %v3375
    %v3764 = vunpack.c.l.s8.bf16 %v3376
    %v3765 = vunpack.c.l.s8.bf16 %v3377
    %v3766 = vunpack.c.l.s8.bf16 %v3378
    %v3767 = vunpack.c.h.s8.bf16 %v3375
    %v3768 = vunpack.c.h.s8.bf16 %v3376
    %v3769 = vunpack.c.h.s8.bf16 %v3377
    %v3770 = vunpack.c.h.s8.bf16 %v3378
    %v3771 = vunpack.c.l.s8.bf16 %v3379
    %v3772 = vunpack.c.l.s8.bf16 %v3380
    %v3773 = vunpack.c.l.s8.bf16 %v3381
    %v3774 = vunpack.c.l.s8.bf16 %v3382
    %v3775 = vunpack.c.h.s8.bf16 %v3379
    %v3776 = vunpack.c.h.s8.bf16 %v3380
    %v3777 = vunpack.c.h.s8.bf16 %v3381
    %v3778 = vunpack.c.h.s8.bf16 %v3382
    %v3779 = vunpack.c.l.s8.bf16 %v3383
    %v3780 = vunpack.c.l.s8.bf16 %v3384
    %v3781 = vunpack.c.l.s8.bf16 %v3385
    %v3782 = vunpack.c.l.s8.bf16 %v3386
    %v3783 = vunpack.c.h.s8.bf16 %v3383
    %v3784 = vunpack.c.h.s8.bf16 %v3384
    %v3785 = vunpack.c.h.s8.bf16 %v3385
    %v3786 = vunpack.c.h.s8.bf16 %v3386
    %v3787 = vunpack.c.l.s8.bf16 %v3387
    %v3788 = vunpack.c.l.s8.bf16 %v3388
    %v3789 = vunpack.c.l.s8.bf16 %v3389
    %v3790 = vunpack.c.l.s8.bf16 %v3390
    %v3791 = vunpack.c.h.s8.bf16 %v3387
    %v3792 = vunpack.c.h.s8.bf16 %v3388
    %v3793 = vunpack.c.h.s8.bf16 %v3389
    %v3794 = vunpack.c.h.s8.bf16 %v3390
    %v3795 = vunpack.c.l.s8.bf16 %v3391
    %v3796 = vunpack.c.l.s8.bf16 %v3392
    %v3797 = vunpack.c.l.s8.bf16 %v3393
    %v3798 = vunpack.c.l.s8.bf16 %v3394
    %v3799 = vunpack.c.h.s8.bf16 %v3391
    %v3800 = vunpack.c.h.s8.bf16 %v3392
    %v3801 = vunpack.c.h.s8.bf16 %v3393
    %v3802 = vunpack.c.h.s8.bf16 %v3394
    %v3803 = vunpack.c.l.s8.bf16 %v3395
    %v3804 = vunpack.c.l.s8.bf16 %v3396
    %v3805 = vunpack.c.l.s8.bf16 %v3397
    %v3806 = vunpack.c.l.s8.bf16 %v3398
    %v3807 = vunpack.c.h.s8.bf16 %v3395
    %v3808 = vunpack.c.h.s8.bf16 %v3396
    %v3809 = vunpack.c.h.s8.bf16 %v3397
    %v3810 = vunpack.c.h.s8.bf16 %v3398
    %v3811 = vunpack.c.l.s8.bf16 %v3399
    %v3812 = vunpack.c.l.s8.bf16 %v3400
    %v3813 = vunpack.c.l.s8.bf16 %v3401
    %v3814 = vunpack.c.l.s8.bf16 %v3402
    %v3815 = vunpack.c.h.s8.bf16 %v3399
    %v3816 = vunpack.c.h.s8.bf16 %v3400
    %v3817 = vunpack.c.h.s8.bf16 %v3401
    %v3818 = vunpack.c.h.s8.bf16 %v3402
    %v3819 = vunpack.c.l.s8.bf16 %v3403
    %v3820 = vunpack.c.l.s8.bf16 %v3404
    %v3821 = vunpack.c.l.s8.bf16 %v3405
    %v3822 = vunpack.c.l.s8.bf16 %v3406
    %v3823 = vunpack.c.h.s8.bf16 %v3403
    %v3824 = vunpack.c.h.s8.bf16 %v3404
    %v3825 = vunpack.c.h.s8.bf16 %v3405
    %v3826 = vunpack.c.h.s8.bf16 %v3406
    %v3827 = vunpack.c.l.s8.bf16 %v3407
    %v3828 = vunpack.c.l.s8.bf16 %v3408
    %v3829 = vunpack.c.l.s8.bf16 %v3409
    %v3830 = vunpack.c.l.s8.bf16 %v3410
    %v3831 = vunpack.c.h.s8.bf16 %v3407
    %v3832 = vunpack.c.h.s8.bf16 %v3408
    %v3833 = vunpack.c.h.s8.bf16 %v3409
    %v3834 = vunpack.c.h.s8.bf16 %v3410
    %v3835 = vunpack.c.l.s8.bf16 %v3411
    %v3836 = vunpack.c.l.s8.bf16 %v3412
    %v3837 = vunpack.c.l.s8.bf16 %v3413
    %v3838 = vunpack.c.l.s8.bf16 %v3414
    %v3839 = vunpack.c.h.s8.bf16 %v3411
    %v3840 = vunpack.c.h.s8.bf16 %v3412
    %v3841 = vunpack.c.h.s8.bf16 %v3413
    %v3842 = vunpack.c.h.s8.bf16 %v3414
    %v3843 = vunpack.c.l.s8.bf16 %v3415
    %v3844 = vunpack.c.l.s8.bf16 %v3416
    %v3845 = vunpack.c.l.s8.bf16 %v3417
    %v3846 = vunpack.c.l.s8.bf16 %v3418
    %v3847 = vunpack.c.h.s8.bf16 %v3415
    %v3848 = vunpack.c.h.s8.bf16 %v3416
    %v3849 = vunpack.c.h.s8.bf16 %v3417
    %v3850 = vunpack.c.h.s8.bf16 %v3418
    %v3851 = vunpack.c.l.s8.bf16 %v3419
    %v3852 = vunpack.c.l.s8.bf16 %v3420
    %v3853 = vunpack.c.l.s8.bf16 %v3421
    %v3854 = vunpack.c.l.s8.bf16 %v3422
    %v3855 = vunpack.c.h.s8.bf16 %v3419
    %v3856 = vunpack.c.h.s8.bf16 %v3420
    %v3857 = vunpack.c.h.s8.bf16 %v3421
    %v3858 = vunpack.c.h.s8.bf16 %v3422
    %v3859 = vunpack.c.l.s8.bf16 %v3423
    %v3860 = vunpack.c.l.s8.bf16 %v3424
    %v3861 = vunpack.c.l.s8.bf16 %v3425
    %v3862 = vunpack.c.l.s8.bf16 %v3426
    %v3863 = vunpack.c.h.s8.bf16 %v3423
    %v3864 = vunpack.c.h.s8.bf16 %v3424
    %v3865 = vunpack.c.h.s8.bf16 %v3425
    %v3866 = vunpack.c.h.s8.bf16 %v3426
    %v3867 = vunpack.c.l.s8.bf16 %v3427
    %v3868 = vunpack.c.l.s8.bf16 %v3428
    %v3869 = vunpack.c.l.s8.bf16 %v3429
    %v3870 = vunpack.c.l.s8.bf16 %v3430
    %v3871 = vunpack.c.h.s8.bf16 %v3427
    %v3872 = vunpack.c.h.s8.bf16 %v3428
    %v3873 = vunpack.c.h.s8.bf16 %v3429
    %v3874 = vunpack.c.h.s8.bf16 %v3430
    %v3875 = vunpack.c.l.s8.bf16 %v3431
    %v3876 = vunpack.c.l.s8.bf16 %v3432
    %v3877 = vunpack.c.l.s8.bf16 %v3433
    %v3878 = vunpack.c.l.s8.bf16 %v3434
    %v3879 = vunpack.c.h.s8.bf16 %v3431
    %v3880 = vunpack.c.h.s8.bf16 %v3432
    %v3881 = vunpack.c.h.s8.bf16 %v3433
    %v3882 = vunpack.c.h.s8.bf16 %v3434
    %v3883 = vunpack.c.l.s8.bf16 %v3435
    %v3884 = vunpack.c.l.s8.bf16 %v3436
    %v3885 = vunpack.c.l.s8.bf16 %v3437
    %v3886 = vunpack.c.l.s8.bf16 %v3438
    %v3887 = vunpack.c.h.s8.bf16 %v3435
    %v3888 = vunpack.c.h.s8.bf16 %v3436
    %v3889 = vunpack.c.h.s8.bf16 %v3437
    %v3890 = vunpack.c.h.s8.bf16 %v3438
    %v3891 = vunpack.c.l.s8.bf16 %v3439
    %v3892 = vunpack.c.l.s8.bf16 %v3440
    %v3893 = vunpack.c.l.s8.bf16 %v3441
    %v3894 = vunpack.c.l.s8.bf16 %v3442
    %v3895 = vunpack.c.h.s8.bf16 %v3439
    %v3896 = vunpack.c.h.s8.bf16 %v3440
    %v3897 = vunpack.c.h.s8.bf16 %v3441
    %v3898 = vunpack.c.h.s8.bf16 %v3442
    %v3899 = vunpack.c.l.s8.bf16 %v3443
    %v3900 = vunpack.c.l.s8.bf16 %v3444
    %v3901 = vunpack.c.l.s8.bf16 %v3445
    %v3902 = vunpack.c.l.s8.bf16 %v3446
    %v3903 = vunpack.c.h.s8.bf16 %v3443
    %v3904 = vunpack.c.h.s8.bf16 %v3444
    %v3905 = vunpack.c.h.s8.bf16 %v3445
    %v3906 = vunpack.c.h.s8.bf16 %v3446
    %v3907 = vunpack.c.l.s8.bf16 %v3447
    %v3908 = vunpack.c.l.s8.bf16 %v3448
    %v3909 = vunpack.c.l.s8.bf16 %v3449
    %v3910 = vunpack.c.l.s8.bf16 %v3450
    %v3911 = vunpack.c.h.s8.bf16 %v3447
    %v3912 = vunpack.c.h.s8.bf16 %v3448
    %v3913 = vunpack.c.h.s8.bf16 %v3449
    %v3914 = vunpack.c.h.s8.bf16 %v3450
    %v3915 = vunpack.c.l.s8.bf16 %v3451
    %v3916 = vunpack.c.l.s8.bf16 %v3452
    %v3917 = vunpack.c.l.s8.bf16 %v3453
    %v3918 = vunpack.c.l.s8.bf16 %v3454
    %v3919 = vunpack.c.h.s8.bf16 %v3451
    %v3920 = vunpack.c.h.s8.bf16 %v3452
    %v3921 = vunpack.c.h.s8.bf16 %v3453
    %v3922 = vunpack.c.h.s8.bf16 %v3454
    %v3923 = vunpack.c.l.s8.bf16 %v3455
    %v3924 = vunpack.c.l.s8.bf16 %v3456
    %v3925 = vunpack.c.l.s8.bf16 %v3457
    %v3926 = vunpack.c.l.s8.bf16 %v3458
    %v3927 = vunpack.c.h.s8.bf16 %v3455
    %v3928 = vunpack.c.h.s8.bf16 %v3456
    %v3929 = vunpack.c.h.s8.bf16 %v3457
    %v3930 = vunpack.c.h.s8.bf16 %v3458
    %v3931 = vunpack.c.l.s8.bf16 %v3459
    %v3932 = vunpack.c.l.s8.bf16 %v3460
    %v3933 = vunpack.c.l.s8.bf16 %v3461
    %v3934 = vunpack.c.l.s8.bf16 %v3462
    %v3935 = vunpack.c.h.s8.bf16 %v3459
    %v3936 = vunpack.c.h.s8.bf16 %v3460
    %v3937 = vunpack.c.h.s8.bf16 %v3461
    %v3938 = vunpack.c.h.s8.bf16 %v3462
    %v3939 = vunpack.c.l.s8.bf16 %v3463
    %v3940 = vunpack.c.l.s8.bf16 %v3464
    %v3941 = vunpack.c.l.s8.bf16 %v3465
    %v3942 = vunpack.c.l.s8.bf16 %v3466
    %v3943 = vunpack.c.h.s8.bf16 %v3463
    %v3944 = vunpack.c.h.s8.bf16 %v3464
    %v3945 = vunpack.c.h.s8.bf16 %v3465
    %v3946 = vunpack.c.h.s8.bf16 %v3466
    %v3947 = vunpack.c.l.s8.bf16 %v3467
    %v3948 = vunpack.c.l.s8.bf16 %v3468
    %v3949 = vunpack.c.l.s8.bf16 %v3469
    %v3950 = vunpack.c.l.s8.bf16 %v3470
    %v3951 = vunpack.c.h.s8.bf16 %v3467
    %v3952 = vunpack.c.h.s8.bf16 %v3468
    %v3953 = vunpack.c.h.s8.bf16 %v3469
    %v3954 = vunpack.c.h.s8.bf16 %v3470
    %v3955 = vunpack.c.l.s8.bf16 %v3471
    %v3956 = vunpack.c.l.s8.bf16 %v3472
    %v3957 = vunpack.c.l.s8.bf16 %v3473
    %v3958 = vunpack.c.l.s8.bf16 %v3474
    %v3959 = vunpack.c.h.s8.bf16 %v3471
    %v3960 = vunpack.c.h.s8.bf16 %v3472
    %v3961 = vunpack.c.h.s8.bf16 %v3473
    %v3962 = vunpack.c.h.s8.bf16 %v3474
    %v3963 = vunpack.c.l.s8.bf16 %v3475
    %v3964 = vunpack.c.l.s8.bf16 %v3476
    %v3965 = vunpack.c.l.s8.bf16 %v3477
    %v3966 = vunpack.c.l.s8.bf16 %v3478
    %v3967 = vunpack.c.h.s8.bf16 %v3475
    %v3968 = vunpack.c.h.s8.bf16 %v3476
    %v3969 = vunpack.c.h.s8.bf16 %v3477
    %v3970 = vunpack.c.h.s8.bf16 %v3478
    %v3971 = vunpack.c.l.s8.bf16 %v3479
    %v3972 = vunpack.c.l.s8.bf16 %v3480
    %v3973 = vunpack.c.l.s8.bf16 %v3481
    %v3974 = vunpack.c.l.s8.bf16 %v3482
    %v3975 = vunpack.c.h.s8.bf16 %v3479
    %v3976 = vunpack.c.h.s8.bf16 %v3480
    %v3977 = vunpack.c.h.s8.bf16 %v3481
    %v3978 = vunpack.c.h.s8.bf16 %v3482
    %v3979 = vunpack.c.l.s8.bf16 %v3483
    %v3980 = vunpack.c.l.s8.bf16 %v3484
    %v3981 = vunpack.c.l.s8.bf16 %v3485
    %v3982 = vunpack.c.l.s8.bf16 %v3486
    %v3983 = vunpack.c.h.s8.bf16 %v3483
    %v3984 = vunpack.c.h.s8.bf16 %v3484
    %v3985 = vunpack.c.h.s8.bf16 %v3485
    %v3986 = vunpack.c.h.s8.bf16 %v3486
    %v3987 = vunpack.c.l.s8.bf16 %v3487
    %v3988 = vunpack.c.l.s8.bf16 %v3488
    %v3989 = vunpack.c.l.s8.bf16 %v3489
    %v3990 = vunpack.c.l.s8.bf16 %v3490
    %v3991 = vunpack.c.h.s8.bf16 %v3487
    %v3992 = vunpack.c.h.s8.bf16 %v3488
    %v3993 = vunpack.c.h.s8.bf16 %v3489
    %v3994 = vunpack.c.h.s8.bf16 %v3490
    %v3995 = vunpack.c.l.s8.bf16 %v3491
    %v3996 = vunpack.c.l.s8.bf16 %v3492
    %v3997 = vunpack.c.l.s8.bf16 %v3493
    %v3998 = vunpack.c.l.s8.bf16 %v3494
    %v3999 = vunpack.c.h.s8.bf16 %v3491
    %v4000 = vunpack.c.h.s8.bf16 %v3492
    %v4001 = vunpack.c.h.s8.bf16 %v3493
    %v4002 = vunpack.c.h.s8.bf16 %v3494
    %v4003 = vunpack.c.l.s8.bf16 %v3495
    %v4004 = vunpack.c.l.s8.bf16 %v3496
    %v4005 = vunpack.c.l.s8.bf16 %v3497
    %v4006 = vunpack.c.l.s8.bf16 %v3498
    %v4007 = vunpack.c.h.s8.bf16 %v3495
    %v4008 = vunpack.c.h.s8.bf16 %v3496
    %v4009 = vunpack.c.h.s8.bf16 %v3497
    %v4010 = vunpack.c.h.s8.bf16 %v3498
    %v4011 = vpack.c.bf16 %v3227, %v3227
    %v4012 = vpack.c.bf16 %v3228, %v3228
    %v4013 = vpack.c.bf16 %v3229, %v3229
    %v4014 = vpack.c.bf16 %v3230, %v3230
    %v4015 = vpack.c.bf16 %v3231, %v3231
    %v4016 = vpack.c.bf16 %v3232, %v3232
    %v4017 = vpack.c.bf16 %v3233, %v3233
    %v4018 = vpack.c.bf16 %v3234, %v3234
    %v4019 = vpack.c.bf16 %v3235, %v3235
    %v4020 = vpack.c.bf16 %v3236, %v3236
    %v4021 = vpack.c.bf16 %v3237, %v3237
    %v4022 = vpack.c.bf16 %v3238, %v3238
    %v4023 = vpack.c.bf16 %v3239, %v3239
    %v4024 = vpack.c.bf16 %v3240, %v3240
    %v4025 = vpack.c.bf16 %v3241, %v3241
    %v4026 = vpack.c.bf16 %v3242, %v3242
    %4027 = vmatprep.subr.bf16.mxu0 %v3528
    %4028 = vmatpush1.bf16.msra.mxu0 %v3527
    %4029 = vmatprep.subr.bf16.mxu0 %v3524
    %4030 = vmatpush1.bf16.msra.mxu0 %v3523
    %4031 = vmatprep.subr.bf16.mxu0 %v3520
    %4032 = vmatpush1.bf16.msra.mxu0 %v3519
    %4033 = vmatprep.subr.bf16.mxu0 %v3516
    %4034 = vmatpush1.bf16.msra.mxu0 %v3515
    %4035 = vmatprep.subr.bf16.mxu0 %v3512
    %4036 = vmatpush1.bf16.msra.mxu0 %v3511
    %4037 = vmatprep.subr.bf16.mxu0 %v3508
    %4038 = vmatpush1.bf16.msra.mxu0 %v3507
    %4039 = vmatprep.subr.bf16.mxu0 %v3504
    %4040 = vmatpush1.bf16.msra.mxu0 %v3503
    %4041 = vmatprep.subr.bf16.mxu0 %v3500
    %4042 = vmatpush1.bf16.msra.mxu0 %v3499
    %4043 = vmatprep.subr.bf16.mxu0 %v3560
    %4044 = vmatpush2.bf16.msra.mxu0 %v3559
    %4045 = vmatprep.subr.bf16.mxu0 %v3556
    %4046 = vmatpush2.bf16.msra.mxu0 %v3555
    %4047 = vmatprep.subr.bf16.mxu0 %v3552
    %4048 = vmatpush2.bf16.msra.mxu0 %v3551
    %4049 = vmatprep.subr.bf16.mxu0 %v3548
    %4050 = vmatpush2.bf16.msra.mxu0 %v3547
    %4051 = vmatprep.subr.bf16.mxu0 %v3544
    %4052 = vmatpush2.bf16.msra.mxu0 %v3543
    %4053 = vmatprep.subr.bf16.mxu0 %v3540
    %4054 = vmatpush2.bf16.msra.mxu0 %v3539
    %4055 = vmatprep.subr.bf16.mxu0 %v3536
    %4056 = vmatpush2.bf16.msra.mxu0 %v3535
    %4057 = vmatprep.subr.bf16.mxu0 %v3532
    %4058 = vmatpush2.bf16.msra.mxu0 %v3531
    %4059 = vmatprep.mubr.bf16.mxu0 %v4012
    %4060 = vmatmul.mubr.bf16.gmra.mxu0 %v4011
    %v4061 = vpop.f32.mrf.mxu0
    %v4062 = vadd.f32 0.0, %v4061
    %v4063 = vpop.f32.mrf.mxu0
    %v4064 = vadd.f32 0.0, %v4063
    %v4065 = vpop.f32.mrf.mxu0
    %v4066 = vpop.f32.mrf.mxu0
    %4067 = vdwg.mxu0
    %4068 = vmatprep.subr.bf16.mxu0 %v3592
    %4069 = vmatpush1.bf16.msra.mxu0 %v3591
    %4070 = vmatprep.subr.bf16.mxu0 %v3588
    %4071 = vmatpush1.bf16.msra.mxu0 %v3587
    %4072 = vmatprep.subr.bf16.mxu0 %v3584
    %4073 = vmatpush1.bf16.msra.mxu0 %v3583
    %4074 = vmatprep.subr.bf16.mxu0 %v3580
    %4075 = vmatpush1.bf16.msra.mxu0 %v3579
    %4076 = vmatprep.subr.bf16.mxu0 %v3576
    %4077 = vmatpush1.bf16.msra.mxu0 %v3575
    %4078 = vmatprep.subr.bf16.mxu0 %v3572
    %4079 = vmatpush1.bf16.msra.mxu0 %v3571
    %4080 = vmatprep.subr.bf16.mxu0 %v3568
    %4081 = vmatpush1.bf16.msra.mxu0 %v3567
    %4082 = vmatprep.subr.bf16.mxu0 %v3564
    %4083 = vmatpush1.bf16.msra.mxu0 %v3563
    %4084 = vmatprep.subr.bf16.mxu0 %v3624
    %4085 = vmatpush2.bf16.msra.mxu0 %v3623
    %4086 = vmatprep.subr.bf16.mxu0 %v3620
    %4087 = vmatpush2.bf16.msra.mxu0 %v3619
    %4088 = vmatprep.subr.bf16.mxu0 %v3616
    %4089 = vmatpush2.bf16.msra.mxu0 %v3615
    %4090 = vmatprep.subr.bf16.mxu0 %v3612
    %4091 = vmatpush2.bf16.msra.mxu0 %v3611
    %4092 = vmatprep.subr.bf16.mxu0 %v3608
    %4093 = vmatpush2.bf16.msra.mxu0 %v3607
    %4094 = vmatprep.subr.bf16.mxu0 %v3604
    %4095 = vmatpush2.bf16.msra.mxu0 %v3603
    %4096 = vmatprep.subr.bf16.mxu0 %v3600
    %4097 = vmatpush2.bf16.msra.mxu0 %v3599
    %4098 = vmatprep.subr.bf16.mxu0 %v3596
    %4099 = vmatpush2.bf16.msra.mxu0 %v3595
    %4100 = vmatprep.mubr.bf16.mxu0 %v4014
    %4101 = vmatmul.mubr.bf16.gmra.mxu0 %v4013
    %v4102 = vpop.f32.mrf.mxu0
    %v4103 = vadd.f32 %v4062, %v4102
    %v4104 = vpop.f32.mrf.mxu0
    %v4105 = vadd.f32 %v4064, %v4104
    %v4106 = vpop.f32.mrf.mxu0
    %v4107 = vpop.f32.mrf.mxu0
    %4108 = vdwg.mxu0
    %4109 = vmatprep.subr.bf16.mxu0 %v3656
    %4110 = vmatpush1.bf16.msra.mxu0 %v3655
    %4111 = vmatprep.subr.bf16.mxu0 %v3652
    %4112 = vmatpush1.bf16.msra.mxu0 %v3651
    %4113 = vmatprep.subr.bf16.mxu0 %v3648
    %4114 = vmatpush1.bf16.msra.mxu0 %v3647
    %4115 = vmatprep.subr.bf16.mxu0 %v3644
    %4116 = vmatpush1.bf16.msra.mxu0 %v3643
    %4117 = vmatprep.subr.bf16.mxu0 %v3640
    %4118 = vmatpush1.bf16.msra.mxu0 %v3639
    %4119 = vmatprep.subr.bf16.mxu0 %v3636
    %4120 = vmatpush1.bf16.msra.mxu0 %v3635
    %4121 = vmatprep.subr.bf16.mxu0 %v3632
    %4122 = vmatpush1.bf16.msra.mxu0 %v3631
    %4123 = vmatprep.subr.bf16.mxu0 %v3628
    %4124 = vmatpush1.bf16.msra.mxu0 %v3627
    %4125 = vmatprep.subr.bf16.mxu0 %v3688
    %4126 = vmatpush2.bf16.msra.mxu0 %v3687
    %4127 = vmatprep.subr.bf16.mxu0 %v3684
    %4128 = vmatpush2.bf16.msra.mxu0 %v3683
    %4129 = vmatprep.subr.bf16.mxu0 %v3680
    %4130 = vmatpush2.bf16.msra.mxu0 %v3679
    %4131 = vmatprep.subr.bf16.mxu0 %v3676
    %4132 = vmatpush2.bf16.msra.mxu0 %v3675
    %4133 = vmatprep.subr.bf16.mxu0 %v3672
    %4134 = vmatpush2.bf16.msra.mxu0 %v3671
    %4135 = vmatprep.subr.bf16.mxu0 %v3668
    %4136 = vmatpush2.bf16.msra.mxu0 %v3667
    %4137 = vmatprep.subr.bf16.mxu0 %v3664
    %4138 = vmatpush2.bf16.msra.mxu0 %v3663
    %4139 = vmatprep.subr.bf16.mxu0 %v3660
    %4140 = vmatpush2.bf16.msra.mxu0 %v3659
    %4141 = vmatprep.mubr.bf16.mxu0 %v4016
    %4142 = vmatmul.mubr.bf16.gmra.mxu0 %v4015
    %v4143 = vpop.f32.mrf.mxu0
    %v4144 = vadd.f32 %v4103, %v4143
    %v4145 = vpop.f32.mrf.mxu0
    %v4146 = vadd.f32 %v4105, %v4145
    %v4147 = vpop.f32.mrf.mxu0
    %v4148 = vpop.f32.mrf.mxu0
    %4149 = vdwg.mxu0
    %4150 = vmatprep.subr.bf16.mxu0 %v3720
    %4151 = vmatpush1.bf16.msra.mxu0 %v3719
    %4152 = vmatprep.subr.bf16.mxu0 %v3716
    %4153 = vmatpush1.bf16.msra.mxu0 %v3715
    %4154 = vmatprep.subr.bf16.mxu0 %v3712
    %4155 = vmatpush1.bf16.msra.mxu0 %v3711
    %4156 = vmatprep.subr.bf16.mxu0 %v3708
    %4157 = vmatpush1.bf16.msra.mxu0 %v3707
    %4158 = vmatprep.subr.bf16.mxu0 %v3704
    %4159 = vmatpush1.bf16.msra.mxu0 %v3703
    %4160 = vmatprep.subr.bf16.mxu0 %v3700
    %4161 = vmatpush1.bf16.msra.mxu0 %v3699
    %4162 = vmatprep.subr.bf16.mxu0 %v3696
    %4163 = vmatpush1.bf16.msra.mxu0 %v3695
    %4164 = vmatprep.subr.bf16.mxu0 %v3692
    %4165 = vmatpush1.bf16.msra.mxu0 %v3691
    %4166 = vmatprep.subr.bf16.mxu0 %v3752
    %4167 = vmatpush2.bf16.msra.mxu0 %v3751
    %4168 = vmatprep.subr.bf16.mxu0 %v3748
    %4169 = vmatpush2.bf16.msra.mxu0 %v3747
    %4170 = vmatprep.subr.bf16.mxu0 %v3744
    %4171 = vmatpush2.bf16.msra.mxu0 %v3743
    %4172 = vmatprep.subr.bf16.mxu0 %v3740
    %4173 = vmatpush2.bf16.msra.mxu0 %v3739
    %4174 = vmatprep.subr.bf16.mxu0 %v3736
    %4175 = vmatpush2.bf16.msra.mxu0 %v3735
    %4176 = vmatprep.subr.bf16.mxu0 %v3732
    %4177 = vmatpush2.bf16.msra.mxu0 %v3731
    %4178 = vmatprep.subr.bf16.mxu0 %v3728
    %4179 = vmatpush2.bf16.msra.mxu0 %v3727
    %4180 = vmatprep.subr.bf16.mxu0 %v3724
    %4181 = vmatpush2.bf16.msra.mxu0 %v3723
    %4182 = vmatprep.mubr.bf16.mxu0 %v4018
    %4183 = vmatmul.mubr.bf16.gmra.mxu0 %v4017
    %v4184 = vpop.f32.mrf.mxu0
    %v4185 = vadd.f32 %v4144, %v4184
    %v4186 = vpop.f32.mrf.mxu0
    %v4187 = vadd.f32 %v4146, %v4186
    %v4188 = vpop.f32.mrf.mxu0
    %v4189 = vpop.f32.mrf.mxu0
    %4190 = vdwg.mxu0
    %4191 = vmatprep.subr.bf16.mxu0 %v3784
    %4192 = vmatpush1.bf16.msra.mxu0 %v3783
    %4193 = vmatprep.subr.bf16.mxu0 %v3780
    %4194 = vmatpush1.bf16.msra.mxu0 %v3779
    %4195 = vmatprep.subr.bf16.mxu0 %v3776
    %4196 = vmatpush1.bf16.msra.mxu0 %v3775
    %4197 = vmatprep.subr.bf16.mxu0 %v3772
    %4198 = vmatpush1.bf16.msra.mxu0 %v3771
    %4199 = vmatprep.subr.bf16.mxu0 %v3768
    %4200 = vmatpush1.bf16.msra.mxu0 %v3767
    %4201 = vmatprep.subr.bf16.mxu0 %v3764
    %4202 = vmatpush1.bf16.msra.mxu0 %v3763
    %4203 = vmatprep.subr.bf16.mxu0 %v3760
    %4204 = vmatpush1.bf16.msra.mxu0 %v3759
    %4205 = vmatprep.subr.bf16.mxu0 %v3756
    %4206 = vmatpush1.bf16.msra.mxu0 %v3755
    %4207 = vmatprep.subr.bf16.mxu0 %v3816
    %4208 = vmatpush2.bf16.msra.mxu0 %v3815
    %4209 = vmatprep.subr.bf16.mxu0 %v3812
    %4210 = vmatpush2.bf16.msra.mxu0 %v3811
    %4211 = vmatprep.subr.bf16.mxu0 %v3808
    %4212 = vmatpush2.bf16.msra.mxu0 %v3807
    %4213 = vmatprep.subr.bf16.mxu0 %v3804
    %4214 = vmatpush2.bf16.msra.mxu0 %v3803
    %4215 = vmatprep.subr.bf16.mxu0 %v3800
    %4216 = vmatpush2.bf16.msra.mxu0 %v3799
    %4217 = vmatprep.subr.bf16.mxu0 %v3796
    %4218 = vmatpush2.bf16.msra.mxu0 %v3795
    %4219 = vmatprep.subr.bf16.mxu0 %v3792
    %4220 = vmatpush2.bf16.msra.mxu0 %v3791
    %4221 = vmatprep.subr.bf16.mxu0 %v3788
    %4222 = vmatpush2.bf16.msra.mxu0 %v3787
    %4223 = vmatprep.mubr.bf16.mxu0 %v4020
    %4224 = vmatmul.mubr.bf16.gmra.mxu0 %v4019
    %v4225 = vpop.f32.mrf.mxu0
    %v4226 = vadd.f32 %v4185, %v4225
    %v4227 = vpop.f32.mrf.mxu0
    %v4228 = vadd.f32 %v4187, %v4227
    %v4229 = vpop.f32.mrf.mxu0
    %v4230 = vpop.f32.mrf.mxu0
    %4231 = vdwg.mxu0
    %4232 = vmatprep.subr.bf16.mxu0 %v3848
    %4233 = vmatpush1.bf16.msra.mxu0 %v3847
    %4234 = vmatprep.subr.bf16.mxu0 %v3844
    %4235 = vmatpush1.bf16.msra.mxu0 %v3843
    %4236 = vmatprep.subr.bf16.mxu0 %v3840
    %4237 = vmatpush1.bf16.msra.mxu0 %v3839
    %4238 = vmatprep.subr.bf16.mxu0 %v3836
    %4239 = vmatpush1.bf16.msra.mxu0 %v3835
    %4240 = vmatprep.subr.bf16.mxu0 %v3832
    %4241 = vmatpush1.bf16.msra.mxu0 %v3831
    %4242 = vmatprep.subr.bf16.mxu0 %v3828
    %4243 = vmatpush1.bf16.msra.mxu0 %v3827
    %4244 = vmatprep.subr.bf16.mxu0 %v3824
    %4245 = vmatpush1.bf16.msra.mxu0 %v3823
    %4246 = vmatprep.subr.bf16.mxu0 %v3820
    %4247 = vmatpush1.bf16.msra.mxu0 %v3819
    %4248 = vmatprep.subr.bf16.mxu0 %v3880
    %4249 = vmatpush2.bf16.msra.mxu0 %v3879
    %4250 = vmatprep.subr.bf16.mxu0 %v3876
    %4251 = vmatpush2.bf16.msra.mxu0 %v3875
    %4252 = vmatprep.subr.bf16.mxu0 %v3872
    %4253 = vmatpush2.bf16.msra.mxu0 %v3871
    %4254 = vmatprep.subr.bf16.mxu0 %v3868
    %4255 = vmatpush2.bf16.msra.mxu0 %v3867
    %4256 = vmatprep.subr.bf16.mxu0 %v3864
    %4257 = vmatpush2.bf16.msra.mxu0 %v3863
    %4258 = vmatprep.subr.bf16.mxu0 %v3860
    %4259 = vmatpush2.bf16.msra.mxu0 %v3859
    %4260 = vmatprep.subr.bf16.mxu0 %v3856
    %4261 = vmatpush2.bf16.msra.mxu0 %v3855
    %4262 = vmatprep.subr.bf16.mxu0 %v3852
    %4263 = vmatpush2.bf16.msra.mxu0 %v3851
    %4264 = vmatprep.mubr.bf16.mxu0 %v4022
    %4265 = vmatmul.mubr.bf16.gmra.mxu0 %v4021
    %v4266 = vpop.f32.mrf.mxu0
    %v4267 = vadd.f32 %v4226, %v4266
    %v4268 = vpop.f32.mrf.mxu0
    %v4269 = vadd.f32 %v4228, %v4268
    %v4270 = vpop.f32.mrf.mxu0
    %v4271 = vpop.f32.mrf.mxu0
    %4272 = vdwg.mxu0
    %4273 = vmatprep.subr.bf16.mxu0 %v3912
    %4274 = vmatpush1.bf16.msra.mxu0 %v3911
    %4275 = vmatprep.subr.bf16.mxu0 %v3908
    %4276 = vmatpush1.bf16.msra.mxu0 %v3907
    %4277 = vmatprep.subr.bf16.mxu0 %v3904
    %4278 = vmatpush1.bf16.msra.mxu0 %v3903
    %4279 = vmatprep.subr.bf16.mxu0 %v3900
    %4280 = vmatpush1.bf16.msra.mxu0 %v3899
    %4281 = vmatprep.subr.bf16.mxu0 %v3896
    %4282 = vmatpush1.bf16.msra.mxu0 %v3895
    %4283 = vmatprep.subr.bf16.mxu0 %v3892
    %4284 = vmatpush1.bf16.msra.mxu0 %v3891
    %4285 = vmatprep.subr.bf16.mxu0 %v3888
    %4286 = vmatpush1.bf16.msra.mxu0 %v3887
    %4287 = vmatprep.subr.bf16.mxu0 %v3884
    %4288 = vmatpush1.bf16.msra.mxu0 %v3883
    %4289 = vmatprep.subr.bf16.mxu0 %v3944
    %4290 = vmatpush2.bf16.msra.mxu0 %v3943
    %4291 = vmatprep.subr.bf16.mxu0 %v3940
    %4292 = vmatpush2.bf16.msra.mxu0 %v3939
    %4293 = vmatprep.subr.bf16.mxu0 %v3936
    %4294 = vmatpush2.bf16.msra.mxu0 %v3935
    %4295 = vmatprep.subr.bf16.mxu0 %v3932
    %4296 = vmatpush2.bf16.msra.mxu0 %v3931
    %4297 = vmatprep.subr.bf16.mxu0 %v3928
    %4298 = vmatpush2.bf16.msra.mxu0 %v3927
    %4299 = vmatprep.subr.bf16.mxu0 %v3924
    %4300 = vmatpush2.bf16.msra.mxu0 %v3923
    %4301 = vmatprep.subr.bf16.mxu0 %v3920
    %4302 = vmatpush2.bf16.msra.mxu0 %v3919
    %4303 = vmatprep.subr.bf16.mxu0 %v3916
    %4304 = vmatpush2.bf16.msra.mxu0 %v3915
    %4305 = vmatprep.mubr.bf16.mxu0 %v4024
    %4306 = vmatmul.mubr.bf16.gmra.mxu0 %v4023
    %v4307 = vpop.f32.mrf.mxu0
    %v4308 = vadd.f32 %v4267, %v4307
    %v4309 = vpop.f32.mrf.mxu0
    %v4310 = vadd.f32 %v4269, %v4309
    %v4311 = vpop.f32.mrf.mxu0
    %v4312 = vpop.f32.mrf.mxu0
    %4313 = vdwg.mxu0
    %4314 = vmatprep.subr.bf16.mxu0 %v3976
    %4315 = vmatpush1.bf16.msra.mxu0 %v3975
    %4316 = vmatprep.subr.bf16.mxu0 %v3972
    %4317 = vmatpush1.bf16.msra.mxu0 %v3971
    %4318 = vmatprep.subr.bf16.mxu0 %v3968
    %4319 = vmatpush1.bf16.msra.mxu0 %v3967
    %4320 = vmatprep.subr.bf16.mxu0 %v3964
    %4321 = vmatpush1.bf16.msra.mxu0 %v3963
    %4322 = vmatprep.subr.bf16.mxu0 %v3960
    %4323 = vmatpush1.bf16.msra.mxu0 %v3959
    %4324 = vmatprep.subr.bf16.mxu0 %v3956
    %4325 = vmatpush1.bf16.msra.mxu0 %v3955
    %4326 = vmatprep.subr.bf16.mxu0 %v3952
    %4327 = vmatpush1.bf16.msra.mxu0 %v3951
    %4328 = vmatprep.subr.bf16.mxu0 %v3948
    %4329 = vmatpush1.bf16.msra.mxu0 %v3947
    %4330 = vmatprep.subr.bf16.mxu0 %v4008
    %4331 = vmatpush2.bf16.msra.mxu0 %v4007
    %4332 = vmatprep.subr.bf16.mxu0 %v4004
    %4333 = vmatpush2.bf16.msra.mxu0 %v4003
    %4334 = vmatprep.subr.bf16.mxu0 %v4000
    %4335 = vmatpush2.bf16.msra.mxu0 %v3999
    %4336 = vmatprep.subr.bf16.mxu0 %v3996
    %4337 = vmatpush2.bf16.msra.mxu0 %v3995
    %4338 = vmatprep.subr.bf16.mxu0 %v3992
    %4339 = vmatpush2.bf16.msra.mxu0 %v3991
    %4340 = vmatprep.subr.bf16.mxu0 %v3988
    %4341 = vmatpush2.bf16.msra.mxu0 %v3987
    %4342 = vmatprep.subr.bf16.mxu0 %v3984
    %4343 = vmatpush2.bf16.msra.mxu0 %v3983
    %4344 = vmatprep.subr.bf16.mxu0 %v3980
    %4345 = vmatpush2.bf16.msra.mxu0 %v3979
    %4346 = vmatprep.mubr.bf16.mxu0 %v4026
    %4347 = vmatmul.mubr.bf16.gmra.mxu0 %v4025
    %v4348 = vpop.f32.mrf.mxu0
    %v4349 = vadd.f32 %v4308, %v4348
    %v4350 = vpop.f32.mrf.mxu0
    %v4351 = vadd.f32 %v4310, %v4350
    %v4352 = vpop.f32.mrf.mxu0
    %v4353 = vpop.f32.mrf.mxu0
    %4354 = vdwg.mxu0
    %4355 = vmatprep.subr.bf16.mxu0 %v3530
    %4356 = vmatpush1.bf16.msra.mxu0 %v3529
    %4357 = vmatprep.subr.bf16.mxu0 %v3526
    %4358 = vmatpush1.bf16.msra.mxu0 %v3525
    %4359 = vmatprep.subr.bf16.mxu0 %v3522
    %4360 = vmatpush1.bf16.msra.mxu0 %v3521
    %4361 = vmatprep.subr.bf16.mxu0 %v3518
    %4362 = vmatpush1.bf16.msra.mxu0 %v3517
    %4363 = vmatprep.subr.bf16.mxu0 %v3514
    %4364 = vmatpush1.bf16.msra.mxu0 %v3513
    %4365 = vmatprep.subr.bf16.mxu0 %v3510
    %4366 = vmatpush1.bf16.msra.mxu0 %v3509
    %4367 = vmatprep.subr.bf16.mxu0 %v3506
    %4368 = vmatpush1.bf16.msra.mxu0 %v3505
    %4369 = vmatprep.subr.bf16.mxu0 %v3502
    %4370 = vmatpush1.bf16.msra.mxu0 %v3501
    %4371 = vmatprep.subr.bf16.mxu0 %v3562
    %4372 = vmatpush2.bf16.msra.mxu0 %v3561
    %4373 = vmatprep.subr.bf16.mxu0 %v3558
    %4374 = vmatpush2.bf16.msra.mxu0 %v3557
    %4375 = vmatprep.subr.bf16.mxu0 %v3554
    %4376 = vmatpush2.bf16.msra.mxu0 %v3553
    %4377 = vmatprep.subr.bf16.mxu0 %v3550
    %4378 = vmatpush2.bf16.msra.mxu0 %v3549
    %4379 = vmatprep.subr.bf16.mxu0 %v3546
    %4380 = vmatpush2.bf16.msra.mxu0 %v3545
    %4381 = vmatprep.subr.bf16.mxu0 %v3542
    %4382 = vmatpush2.bf16.msra.mxu0 %v3541
    %4383 = vmatprep.subr.bf16.mxu0 %v3538
    %4384 = vmatpush2.bf16.msra.mxu0 %v3537
    %4385 = vmatprep.subr.bf16.mxu0 %v3534
    %4386 = vmatpush2.bf16.msra.mxu0 %v3533
    %4387 = vmatprep.mubr.bf16.mxu0 %v4012
    %4388 = vmatmul.mubr.bf16.gmra.mxu0 %v4011
    %v4389 = vpop.f32.mrf.mxu0
    %v4390 = vadd.f32 0.0, %v4389
    %v4391 = vpop.f32.mrf.mxu0
    %v4392 = vadd.f32 0.0, %v4391
    %v4393 = vpop.f32.mrf.mxu0
    %v4394 = vpop.f32.mrf.mxu0
    %4395 = vdwg.mxu0
    %4396 = vmatprep.subr.bf16.mxu0 %v3594
    %4397 = vmatpush1.bf16.msra.mxu0 %v3593
    %4398 = vmatprep.subr.bf16.mxu0 %v3590
    %4399 = vmatpush1.bf16.msra.mxu0 %v3589
    %4400 = vmatprep.subr.bf16.mxu0 %v3586
    %4401 = vmatpush1.bf16.msra.mxu0 %v3585
    %4402 = vmatprep.subr.bf16.mxu0 %v3582
    %4403 = vmatpush1.bf16.msra.mxu0 %v3581
    %4404 = vmatprep.subr.bf16.mxu0 %v3578
    %4405 = vmatpush1.bf16.msra.mxu0 %v3577
    %4406 = vmatprep.subr.bf16.mxu0 %v3574
    %4407 = vmatpush1.bf16.msra.mxu0 %v3573
    %4408 = vmatprep.subr.bf16.mxu0 %v3570
    %4409 = vmatpush1.bf16.msra.mxu0 %v3569
    %4410 = vmatprep.subr.bf16.mxu0 %v3566
    %4411 = vmatpush1.bf16.msra.mxu0 %v3565
    %4412 = vmatprep.subr.bf16.mxu0 %v3626
    %4413 = vmatpush2.bf16.msra.mxu0 %v3625
    %4414 = vmatprep.subr.bf16.mxu0 %v3622
    %4415 = vmatpush2.bf16.msra.mxu0 %v3621
    %4416 = vmatprep.subr.bf16.mxu0 %v3618
    %4417 = vmatpush2.bf16.msra.mxu0 %v3617
    %4418 = vmatprep.subr.bf16.mxu0 %v3614
    %4419 = vmatpush2.bf16.msra.mxu0 %v3613
    %4420 = vmatprep.subr.bf16.mxu0 %v3610
    %4421 = vmatpush2.bf16.msra.mxu0 %v3609
    %4422 = vmatprep.subr.bf16.mxu0 %v3606
    %4423 = vmatpush2.bf16.msra.mxu0 %v3605
    %4424 = vmatprep.subr.bf16.mxu0 %v3602
    %4425 = vmatpush2.bf16.msra.mxu0 %v3601
    %4426 = vmatprep.subr.bf16.mxu0 %v3598
    %4427 = vmatpush2.bf16.msra.mxu0 %v3597
    %4428 = vmatprep.mubr.bf16.mxu0 %v4014
    %4429 = vmatmul.mubr.bf16.gmra.mxu0 %v4013
    %v4430 = vpop.f32.mrf.mxu0
    %v4431 = vadd.f32 %v4390, %v4430
    %v4432 = vpop.f32.mrf.mxu0
    %v4433 = vadd.f32 %v4392, %v4432
    %v4434 = vpop.f32.mrf.mxu0
    %v4435 = vpop.f32.mrf.mxu0
    %4436 = vdwg.mxu0
    %4437 = vmatprep.subr.bf16.mxu0 %v3658
    %4438 = vmatpush1.bf16.msra.mxu0 %v3657
    %4439 = vmatprep.subr.bf16.mxu0 %v3654
    %4440 = vmatpush1.bf16.msra.mxu0 %v3653
    %4441 = vmatprep.subr.bf16.mxu0 %v3650
    %4442 = vmatpush1.bf16.msra.mxu0 %v3649
    %4443 = vmatprep.subr.bf16.mxu0 %v3646
    %4444 = vmatpush1.bf16.msra.mxu0 %v3645
    %4445 = vmatprep.subr.bf16.mxu0 %v3642
    %4446 = vmatpush1.bf16.msra.mxu0 %v3641
    %4447 = vmatprep.subr.bf16.mxu0 %v3638
    %4448 = vmatpush1.bf16.msra.mxu0 %v3637
    %4449 = vmatprep.subr.bf16.mxu0 %v3634
    %4450 = vmatpush1.bf16.msra.mxu0 %v3633
    %4451 = vmatprep.subr.bf16.mxu0 %v3630
    %4452 = vmatpush1.bf16.msra.mxu0 %v3629
    %4453 = vmatprep.subr.bf16.mxu0 %v3690
    %4454 = vmatpush2.bf16.msra.mxu0 %v3689
    %4455 = vmatprep.subr.bf16.mxu0 %v3686
    %4456 = vmatpush2.bf16.msra.mxu0 %v3685
    %4457 = vmatprep.subr.bf16.mxu0 %v3682
    %4458 = vmatpush2.bf16.msra.mxu0 %v3681
    %4459 = vmatprep.subr.bf16.mxu0 %v3678
    %4460 = vmatpush2.bf16.msra.mxu0 %v3677
    %4461 = vmatprep.subr.bf16.mxu0 %v3674
    %4462 = vmatpush2.bf16.msra.mxu0 %v3673
    %4463 = vmatprep.subr.bf16.mxu0 %v3670
    %4464 = vmatpush2.bf16.msra.mxu0 %v3669
    %4465 = vmatprep.subr.bf16.mxu0 %v3666
    %4466 = vmatpush2.bf16.msra.mxu0 %v3665
    %4467 = vmatprep.subr.bf16.mxu0 %v3662
    %4468 = vmatpush2.bf16.msra.mxu0 %v3661
    %4469 = vmatprep.mubr.bf16.mxu0 %v4016
    %4470 = vmatmul.mubr.bf16.gmra.mxu0 %v4015
    %v4471 = vpop.f32.mrf.mxu0
    %v4472 = vadd.f32 %v4431, %v4471
    %v4473 = vpop.f32.mrf.mxu0
    %v4474 = vadd.f32 %v4433, %v4473
    %v4475 = vpop.f32.mrf.mxu0
    %v4476 = vpop.f32.mrf.mxu0
    %4477 = vdwg.mxu0
    %4478 = vmatprep.subr.bf16.mxu0 %v3722
    %4479 = vmatpush1.bf16.msra.mxu0 %v3721
    %4480 = vmatprep.subr.bf16.mxu0 %v3718
    %4481 = vmatpush1.bf16.msra.mxu0 %v3717
    %4482 = vmatprep.subr.bf16.mxu0 %v3714
    %4483 = vmatpush1.bf16.msra.mxu0 %v3713
    %4484 = vmatprep.subr.bf16.mxu0 %v3710
    %4485 = vmatpush1.bf16.msra.mxu0 %v3709
    %4486 = vmatprep.subr.bf16.mxu0 %v3706
    %4487 = vmatpush1.bf16.msra.mxu0 %v3705
    %4488 = vmatprep.subr.bf16.mxu0 %v3702
    %4489 = vmatpush1.bf16.msra.mxu0 %v3701
    %4490 = vmatprep.subr.bf16.mxu0 %v3698
    %4491 = vmatpush1.bf16.msra.mxu0 %v3697
    %4492 = vmatprep.subr.bf16.mxu0 %v3694
    %4493 = vmatpush1.bf16.msra.mxu0 %v3693
    %4494 = vmatprep.subr.bf16.mxu0 %v3754
    %4495 = vmatpush2.bf16.msra.mxu0 %v3753
    %4496 = vmatprep.subr.bf16.mxu0 %v3750
    %4497 = vmatpush2.bf16.msra.mxu0 %v3749
    %4498 = vmatprep.subr.bf16.mxu0 %v3746
    %4499 = vmatpush2.bf16.msra.mxu0 %v3745
    %4500 = vmatprep.subr.bf16.mxu0 %v3742
    %4501 = vmatpush2.bf16.msra.mxu0 %v3741
    %4502 = vmatprep.subr.bf16.mxu0 %v3738
    %4503 = vmatpush2.bf16.msra.mxu0 %v3737
    %4504 = vmatprep.subr.bf16.mxu0 %v3734
    %4505 = vmatpush2.bf16.msra.mxu0 %v3733
    %4506 = vmatprep.subr.bf16.mxu0 %v3730
    %4507 = vmatpush2.bf16.msra.mxu0 %v3729
    %4508 = vmatprep.subr.bf16.mxu0 %v3726
    %4509 = vmatpush2.bf16.msra.mxu0 %v3725
    %4510 = vmatprep.mubr.bf16.mxu0 %v4018
    %4511 = vmatmul.mubr.bf16.gmra.mxu0 %v4017
    %v4512 = vpop.f32.mrf.mxu0
    %v4513 = vadd.f32 %v4472, %v4512
    %v4514 = vpop.f32.mrf.mxu0
    %v4515 = vadd.f32 %v4474, %v4514
    %v4516 = vpop.f32.mrf.mxu0
    %v4517 = vpop.f32.mrf.mxu0
    %4518 = vdwg.mxu0
    %4519 = vmatprep.subr.bf16.mxu0 %v3786
    %4520 = vmatpush1.bf16.msra.mxu0 %v3785
    %4521 = vmatprep.subr.bf16.mxu0 %v3782
    %4522 = vmatpush1.bf16.msra.mxu0 %v3781
    %4523 = vmatprep.subr.bf16.mxu0 %v3778
    %4524 = vmatpush1.bf16.msra.mxu0 %v3777
    %4525 = vmatprep.subr.bf16.mxu0 %v3774
    %4526 = vmatpush1.bf16.msra.mxu0 %v3773
    %4527 = vmatprep.subr.bf16.mxu0 %v3770
    %4528 = vmatpush1.bf16.msra.mxu0 %v3769
    %4529 = vmatprep.subr.bf16.mxu0 %v3766
    %4530 = vmatpush1.bf16.msra.mxu0 %v3765
    %4531 = vmatprep.subr.bf16.mxu0 %v3762
    %4532 = vmatpush1.bf16.msra.mxu0 %v3761
    %4533 = vmatprep.subr.bf16.mxu0 %v3758
    %4534 = vmatpush1.bf16.msra.mxu0 %v3757
    %4535 = vmatprep.subr.bf16.mxu0 %v3818
    %4536 = vmatpush2.bf16.msra.mxu0 %v3817
    %4537 = vmatprep.subr.bf16.mxu0 %v3814
    %4538 = vmatpush2.bf16.msra.mxu0 %v3813
    %4539 = vmatprep.subr.bf16.mxu0 %v3810
    %4540 = vmatpush2.bf16.msra.mxu0 %v3809
    %4541 = vmatprep.subr.bf16.mxu0 %v3806
    %4542 = vmatpush2.bf16.msra.mxu0 %v3805
    %4543 = vmatprep.subr.bf16.mxu0 %v3802
    %4544 = vmatpush2.bf16.msra.mxu0 %v3801
    %4545 = vmatprep.subr.bf16.mxu0 %v3798
    %4546 = vmatpush2.bf16.msra.mxu0 %v3797
    %4547 = vmatprep.subr.bf16.mxu0 %v3794
    %4548 = vmatpush2.bf16.msra.mxu0 %v3793
    %4549 = vmatprep.subr.bf16.mxu0 %v3790
    %4550 = vmatpush2.bf16.msra.mxu0 %v3789
    %4551 = vmatprep.mubr.bf16.mxu0 %v4020
    %4552 = vmatmul.mubr.bf16.gmra.mxu0 %v4019
    %v4553 = vpop.f32.mrf.mxu0
    %v4554 = vadd.f32 %v4513, %v4553
    %v4555 = vpop.f32.mrf.mxu0
    %v4556 = vadd.f32 %v4515, %v4555
    %v4557 = vpop.f32.mrf.mxu0
    %v4558 = vpop.f32.mrf.mxu0
    %4559 = vdwg.mxu0
    %4560 = vmatprep.subr.bf16.mxu0 %v3850
    %4561 = vmatpush1.bf16.msra.mxu0 %v3849
    %4562 = vmatprep.subr.bf16.mxu0 %v3846
    %4563 = vmatpush1.bf16.msra.mxu0 %v3845
    %4564 = vmatprep.subr.bf16.mxu0 %v3842
    %4565 = vmatpush1.bf16.msra.mxu0 %v3841
    %4566 = vmatprep.subr.bf16.mxu0 %v3838
    %4567 = vmatpush1.bf16.msra.mxu0 %v3837
    %4568 = vmatprep.subr.bf16.mxu0 %v3834
    %4569 = vmatpush1.bf16.msra.mxu0 %v3833
    %4570 = vmatprep.subr.bf16.mxu0 %v3830
    %4571 = vmatpush1.bf16.msra.mxu0 %v3829
    %4572 = vmatprep.subr.bf16.mxu0 %v3826
    %4573 = vmatpush1.bf16.msra.mxu0 %v3825
    %4574 = vmatprep.subr.bf16.mxu0 %v3822
    %4575 = vmatpush1.bf16.msra.mxu0 %v3821
    %4576 = vmatprep.subr.bf16.mxu0 %v3882
    %4577 = vmatpush2.bf16.msra.mxu0 %v3881
    %4578 = vmatprep.subr.bf16.mxu0 %v3878
    %4579 = vmatpush2.bf16.msra.mxu0 %v3877
    %4580 = vmatprep.subr.bf16.mxu0 %v3874
    %4581 = vmatpush2.bf16.msra.mxu0 %v3873
    %4582 = vmatprep.subr.bf16.mxu0 %v3870
    %4583 = vmatpush2.bf16.msra.mxu0 %v3869
    %4584 = vmatprep.subr.bf16.mxu0 %v3866
    %4585 = vmatpush2.bf16.msra.mxu0 %v3865
    %4586 = vmatprep.subr.bf16.mxu0 %v3862
    %4587 = vmatpush2.bf16.msra.mxu0 %v3861
    %4588 = vmatprep.subr.bf16.mxu0 %v3858
    %4589 = vmatpush2.bf16.msra.mxu0 %v3857
    %4590 = vmatprep.subr.bf16.mxu0 %v3854
    %4591 = vmatpush2.bf16.msra.mxu0 %v3853
    %4592 = vmatprep.mubr.bf16.mxu0 %v4022
    %4593 = vmatmul.mubr.bf16.gmra.mxu0 %v4021
    %v4594 = vpop.f32.mrf.mxu0
    %v4595 = vadd.f32 %v4554, %v4594
    %v4596 = vpop.f32.mrf.mxu0
    %v4597 = vadd.f32 %v4556, %v4596
    %v4598 = vpop.f32.mrf.mxu0
    %v4599 = vpop.f32.mrf.mxu0
    %4600 = vdwg.mxu0
    %4601 = vmatprep.subr.bf16.mxu0 %v3914
    %4602 = vmatpush1.bf16.msra.mxu0 %v3913
    %4603 = vmatprep.subr.bf16.mxu0 %v3910
    %4604 = vmatpush1.bf16.msra.mxu0 %v3909
    %4605 = vmatprep.subr.bf16.mxu0 %v3906
    %4606 = vmatpush1.bf16.msra.mxu0 %v3905
    %4607 = vmatprep.subr.bf16.mxu0 %v3902
    %4608 = vmatpush1.bf16.msra.mxu0 %v3901
    %4609 = vmatprep.subr.bf16.mxu0 %v3898
    %4610 = vmatpush1.bf16.msra.mxu0 %v3897
    %4611 = vmatprep.subr.bf16.mxu0 %v3894
    %4612 = vmatpush1.bf16.msra.mxu0 %v3893
    %4613 = vmatprep.subr.bf16.mxu0 %v3890
    %4614 = vmatpush1.bf16.msra.mxu0 %v3889
    %4615 = vmatprep.subr.bf16.mxu0 %v3886
    %4616 = vmatpush1.bf16.msra.mxu0 %v3885
    %4617 = vmatprep.subr.bf16.mxu0 %v3946
    %4618 = vmatpush2.bf16.msra.mxu0 %v3945
    %4619 = vmatprep.subr.bf16.mxu0 %v3942
    %4620 = vmatpush2.bf16.msra.mxu0 %v3941
    %4621 = vmatprep.subr.bf16.mxu0 %v3938
    %4622 = vmatpush2.bf16.msra.mxu0 %v3937
    %4623 = vmatprep.subr.bf16.mxu0 %v3934
    %4624 = vmatpush2.bf16.msra.mxu0 %v3933
    %4625 = vmatprep.subr.bf16.mxu0 %v3930
    %4626 = vmatpush2.bf16.msra.mxu0 %v3929
    %4627 = vmatprep.subr.bf16.mxu0 %v3926
    %4628 = vmatpush2.bf16.msra.mxu0 %v3925
    %4629 = vmatprep.subr.bf16.mxu0 %v3922
    %4630 = vmatpush2.bf16.msra.mxu0 %v3921
    %4631 = vmatprep.subr.bf16.mxu0 %v3918
    %4632 = vmatpush2.bf16.msra.mxu0 %v3917
    %4633 = vmatprep.mubr.bf16.mxu0 %v4024
    %4634 = vmatmul.mubr.bf16.gmra.mxu0 %v4023
    %v4635 = vpop.f32.mrf.mxu0
    %v4636 = vadd.f32 %v4595, %v4635
    %v4637 = vpop.f32.mrf.mxu0
    %v4638 = vadd.f32 %v4597, %v4637
    %v4639 = vpop.f32.mrf.mxu0
    %v4640 = vpop.f32.mrf.mxu0
    %4641 = vdwg.mxu0
    %4642 = vmatprep.subr.bf16.mxu0 %v3978
    %4643 = vmatpush1.bf16.msra.mxu0 %v3977
    %4644 = vmatprep.subr.bf16.mxu0 %v3974
    %4645 = vmatpush1.bf16.msra.mxu0 %v3973
    %4646 = vmatprep.subr.bf16.mxu0 %v3970
    %4647 = vmatpush1.bf16.msra.mxu0 %v3969
    %4648 = vmatprep.subr.bf16.mxu0 %v3966
    %4649 = vmatpush1.bf16.msra.mxu0 %v3965
    %4650 = vmatprep.subr.bf16.mxu0 %v3962
    %4651 = vmatpush1.bf16.msra.mxu0 %v3961
    %4652 = vmatprep.subr.bf16.mxu0 %v3958
    %4653 = vmatpush1.bf16.msra.mxu0 %v3957
    %4654 = vmatprep.subr.bf16.mxu0 %v3954
    %4655 = vmatpush1.bf16.msra.mxu0 %v3953
    %4656 = vmatprep.subr.bf16.mxu0 %v3950
    %4657 = vmatpush1.bf16.msra.mxu0 %v3949
    %4658 = vmatprep.subr.bf16.mxu0 %v4010
    %4659 = vmatpush2.bf16.msra.mxu0 %v4009
    %4660 = vmatprep.subr.bf16.mxu0 %v4006
    %4661 = vmatpush2.bf16.msra.mxu0 %v4005
    %4662 = vmatprep.subr.bf16.mxu0 %v4002
    %4663 = vmatpush2.bf16.msra.mxu0 %v4001
    %4664 = vmatprep.subr.bf16.mxu0 %v3998
    %4665 = vmatpush2.bf16.msra.mxu0 %v3997
    %4666 = vmatprep.subr.bf16.mxu0 %v3994
    %4667 = vmatpush2.bf16.msra.mxu0 %v3993
    %4668 = vmatprep.subr.bf16.mxu0 %v3990
    %4669 = vmatpush2.bf16.msra.mxu0 %v3989
    %4670 = vmatprep.subr.bf16.mxu0 %v3986
    %4671 = vmatpush2.bf16.msra.mxu0 %v3985
    %4672 = vmatprep.subr.bf16.mxu0 %v3982
    %4673 = vmatpush2.bf16.msra.mxu0 %v3981
    %4674 = vmatprep.mubr.bf16.mxu0 %v4026
    %4675 = vmatmul.mubr.bf16.gmra.mxu0 %v4025
    %v4676 = vpop.f32.mrf.mxu0
    %v4677 = vadd.f32 %v4636, %v4676
    %v4678 = vpop.f32.mrf.mxu0
    %v4679 = vadd.f32 %v4638, %v4678
    %v4680 = vpop.f32.mrf.mxu0
    %v4681 = vpop.f32.mrf.mxu0
    %4682 = vdwg.mxu0
    %v4683 = vld [vmem:[#allocation9] sm:$0xf]
    %v4685 = vlaneseq
    %v4686 = vshrl.u32 %v4685, 7
    %v4687 = vsub.s32 0, %v4686
    %v4688 = vrot.slane %v4683, %v4687
    %v4689 = vlaneseq
    %v4690 = vshrl.u32 %v4689, 7
    %v4691 = vsub.s32 1, %v4690
    %v4692 = vrot.slane %v4683, %v4691
    %v4693 = vlaneseq
    %v4694 = vshrl.u32 %v4693, 7
    %v4695 = vsub.s32 2, %v4694
    %v4696 = vrot.slane %v4683, %v4695
    %v4697 = vlaneseq
    %v4698 = vshrl.u32 %v4697, 7
    %v4699 = vsub.s32 3, %v4698
    %v4700 = vrot.slane %v4683, %v4699
    %v4705 = vmul.f32 %v4349, %v4688
    %v4706 = vmul.f32 %v4351, %v4692
    %v4707 = vmul.f32 %v4677, %v4696
    %v4708 = vmul.f32 %v4679, %v4700
    %v4709 = vld [vmem:[#allocation10] sm:$0xf]
    %v4711 = vlaneseq
    %v4712 = vshrl.u32 %v4711, 7
    %v4713 = vsub.s32 0, %v4712
    %v4714 = vrot.slane %v4709, %v4713
    %v4715 = vlaneseq
    %v4716 = vshrl.u32 %v4715, 7
    %v4717 = vsub.s32 1, %v4716
    %v4718 = vrot.slane %v4709, %v4717
    %v4719 = vlaneseq
    %v4720 = vshrl.u32 %v4719, 7
    %v4721 = vsub.s32 2, %v4720
    %v4722 = vrot.slane %v4709, %v4721
    %v4723 = vlaneseq
    %v4724 = vshrl.u32 %v4723, 7
    %v4725 = vsub.s32 3, %v4724
    %v4726 = vrot.slane %v4709, %v4725
    %v4731 = vadd.f32 %v4705, %v4714
    %v4732 = vadd.f32 %v4706, %v4718
    %v4733 = vadd.f32 %v4707, %v4722
    %v4734 = vadd.f32 %v4708, %v4726
    %v4735 = vmax.f32 %v4731, 0.0
    %v4736 = vmax.f32 %v4732, 0.0
    %v4737 = vmax.f32 %v4733, 0.0
    %v4738 = vmax.f32 %v4734, 0.0
    %v4739 = vpack.c.bf16 %v4735, %v4735
    %v4740 = vpack.c.bf16 %v4736, %v4736
    %v4741 = vpack.c.bf16 %v4737, %v4737
    %v4742 = vpack.c.bf16 %v4738, %v4738
    %v4743 = vld [vmem:[#allocation12] sm:$0xf]
    %v4744 = vld [vmem:[#allocation12 + $0x4] sm:$0xf]
    %v4745 = vld [vmem:[#allocation12 + $0x8] sm:$0xf]
    %v4746 = vld [vmem:[#allocation12 + $0xc] sm:$0xf]
    %v4747 = vld [vmem:[#allocation12 + $0x10] sm:$0xf]
    %v4748 = vld [vmem:[#allocation12 + $0x14] sm:$0xf]
    %v4749 = vld [vmem:[#allocation12 + $0x18] sm:$0xf]
    %v4750 = vld [vmem:[#allocation12 + $0x1c] sm:$0xf]
    %v4751 = vld [vmem:[#allocation12 + $0x20] sm:$0xf]
    %v4752 = vld [vmem:[#allocation12 + $0x24] sm:$0xf]
    %v4753 = vld [vmem:[#allocation12 + $0x28] sm:$0xf]
    %v4754 = vld [vmem:[#allocation12 + $0x2c] sm:$0xf]
    %v4755 = vld [vmem:[#allocation12 + $0x30] sm:$0xf]
    %v4756 = vld [vmem:[#allocation12 + $0x34] sm:$0xf]
    %v4757 = vld [vmem:[#allocation12 + $0x38] sm:$0xf]
    %v4758 = vld [vmem:[#allocation12 + $0x3c] sm:$0xf]
    %v4759 = vld [vmem:[#allocation12 + $0x40] sm:$0xf]
    %v4760 = vld [vmem:[#allocation12 + $0x44] sm:$0xf]
    %v4761 = vld [vmem:[#allocation12 + $0x48] sm:$0xf]
    %v4762 = vld [vmem:[#allocation12 + $0x4c] sm:$0xf]
    %v4763 = vld [vmem:[#allocation12 + $0x50] sm:$0xf]
    %v4764 = vld [vmem:[#allocation12 + $0x54] sm:$0xf]
    %v4765 = vld [vmem:[#allocation12 + $0x58] sm:$0xf]
    %v4766 = vld [vmem:[#allocation12 + $0x5c] sm:$0xf]
    %v4767 = vld [vmem:[#allocation12 + $0x60] sm:$0xf]
    %v4768 = vld [vmem:[#allocation12 + $0x64] sm:$0xf]
    %v4769 = vld [vmem:[#allocation12 + $0x68] sm:$0xf]
    %v4770 = vld [vmem:[#allocation12 + $0x6c] sm:$0xf]
    %v4771 = vld [vmem:[#allocation12 + $0x70] sm:$0xf]
    %v4772 = vld [vmem:[#allocation12 + $0x74] sm:$0xf]
    %v4773 = vld [vmem:[#allocation12 + $0x78] sm:$0xf]
    %v4774 = vld [vmem:[#allocation12 + $0x7c] sm:$0xf]
    %v4775 = vld [vmem:[#allocation12 + $0x80] sm:$0xf]
    %v4776 = vld [vmem:[#allocation12 + $0x84] sm:$0xf]
    %v4777 = vld [vmem:[#allocation12 + $0x88] sm:$0xf]
    %v4778 = vld [vmem:[#allocation12 + $0x8c] sm:$0xf]
    %v4779 = vld [vmem:[#allocation12 + $0x90] sm:$0xf]
    %v4780 = vld [vmem:[#allocation12 + $0x94] sm:$0xf]
    %v4781 = vld [vmem:[#allocation12 + $0x98] sm:$0xf]
    %v4782 = vld [vmem:[#allocation12 + $0x9c] sm:$0xf]
    %v4783 = vld [vmem:[#allocation12 + $0xa0] sm:$0xf]
    %v4784 = vld [vmem:[#allocation12 + $0xa4] sm:$0xf]
    %v4785 = vld [vmem:[#allocation12 + $0xa8] sm:$0xf]
    %v4786 = vld [vmem:[#allocation12 + $0xac] sm:$0xf]
    %v4787 = vld [vmem:[#allocation12 + $0xb0] sm:$0xf]
    %v4788 = vld [vmem:[#allocation12 + $0xb4] sm:$0xf]
    %v4789 = vld [vmem:[#allocation12 + $0xb8] sm:$0xf]
    %v4790 = vld [vmem:[#allocation12 + $0xbc] sm:$0xf]
    %v4791 = vld [vmem:[#allocation12 + $0xc0] sm:$0xf]
    %v4792 = vld [vmem:[#allocation12 + $0xc4] sm:$0xf]
    %v4793 = vld [vmem:[#allocation12 + $0xc8] sm:$0xf]
    %v4794 = vld [vmem:[#allocation12 + $0xcc] sm:$0xf]
    %v4795 = vld [vmem:[#allocation12 + $0xd0] sm:$0xf]
    %v4796 = vld [vmem:[#allocation12 + $0xd4] sm:$0xf]
    %v4797 = vld [vmem:[#allocation12 + $0xd8] sm:$0xf]
    %v4798 = vld [vmem:[#allocation12 + $0xdc] sm:$0xf]
    %v4799 = vld [vmem:[#allocation12 + $0xe0] sm:$0xf]
    %v4800 = vld [vmem:[#allocation12 + $0xe4] sm:$0xf]
    %v4801 = vld [vmem:[#allocation12 + $0xe8] sm:$0xf]
    %v4802 = vld [vmem:[#allocation12 + $0xec] sm:$0xf]
    %v4803 = vld [vmem:[#allocation12 + $0xf0] sm:$0xf]
    %v4804 = vld [vmem:[#allocation12 + $0xf4] sm:$0xf]
    %v4805 = vld [vmem:[#allocation12 + $0xf8] sm:$0xf]
    %v4806 = vld [vmem:[#allocation12 + $0xfc] sm:$0xf]
    %v4807 = vld [vmem:[#allocation13] sm:$0x1]
    %v4809 = vlaneseq
    %v4810 = vshrl.u32 %v4809, 7
    %v4811 = vsub.s32 0, %v4810
    %v4812 = vrot.slane %v4807, %v4811
    %v4878 = vunpack.c.l.b16 %v4743
    %v4879 = vunpack.c.l.b16 %v4744
    %v4880 = vunpack.c.l.b16 %v4745
    %v4881 = vunpack.c.l.b16 %v4746
    %v4882 = vunpack.c.l.b16 %v4747
    %v4883 = vunpack.c.l.b16 %v4748
    %v4884 = vunpack.c.l.b16 %v4749
    %v4885 = vunpack.c.l.b16 %v4750
    %v4886 = vunpack.c.l.b16 %v4751
    %v4887 = vunpack.c.l.b16 %v4752
    %v4888 = vunpack.c.l.b16 %v4753
    %v4889 = vunpack.c.l.b16 %v4754
    %v4890 = vunpack.c.l.b16 %v4755
    %v4891 = vunpack.c.l.b16 %v4756
    %v4892 = vunpack.c.l.b16 %v4757
    %v4893 = vunpack.c.l.b16 %v4758
    %v4894 = vunpack.c.l.b16 %v4759
    %v4895 = vunpack.c.l.b16 %v4760
    %v4896 = vunpack.c.l.b16 %v4761
    %v4897 = vunpack.c.l.b16 %v4762
    %v4898 = vunpack.c.l.b16 %v4763
    %v4899 = vunpack.c.l.b16 %v4764
    %v4900 = vunpack.c.l.b16 %v4765
    %v4901 = vunpack.c.l.b16 %v4766
    %v4902 = vunpack.c.l.b16 %v4767
    %v4903 = vunpack.c.l.b16 %v4768
    %v4904 = vunpack.c.l.b16 %v4769
    %v4905 = vunpack.c.l.b16 %v4770
    %v4906 = vunpack.c.l.b16 %v4771
    %v4907 = vunpack.c.l.b16 %v4772
    %v4908 = vunpack.c.l.b16 %v4773
    %v4909 = vunpack.c.l.b16 %v4774
    %v4910 = vunpack.c.l.b16 %v4775
    %v4911 = vunpack.c.l.b16 %v4776
    %v4912 = vunpack.c.l.b16 %v4777
    %v4913 = vunpack.c.l.b16 %v4778
    %v4914 = vunpack.c.l.b16 %v4779
    %v4915 = vunpack.c.l.b16 %v4780
    %v4916 = vunpack.c.l.b16 %v4781
    %v4917 = vunpack.c.l.b16 %v4782
    %v4918 = vunpack.c.l.b16 %v4783
    %v4919 = vunpack.c.l.b16 %v4784
    %v4920 = vunpack.c.l.b16 %v4785
    %v4921 = vunpack.c.l.b16 %v4786
    %v4922 = vunpack.c.l.b16 %v4787
    %v4923 = vunpack.c.l.b16 %v4788
    %v4924 = vunpack.c.l.b16 %v4789
    %v4925 = vunpack.c.l.b16 %v4790
    %v4926 = vunpack.c.l.b16 %v4791
    %v4927 = vunpack.c.l.b16 %v4792
    %v4928 = vunpack.c.l.b16 %v4793
    %v4929 = vunpack.c.l.b16 %v4794
    %v4930 = vunpack.c.l.b16 %v4795
    %v4931 = vunpack.c.l.b16 %v4796
    %v4932 = vunpack.c.l.b16 %v4797
    %v4933 = vunpack.c.l.b16 %v4798
    %v4934 = vunpack.c.l.b16 %v4799
    %v4935 = vunpack.c.l.b16 %v4800
    %v4936 = vunpack.c.l.b16 %v4801
    %v4937 = vunpack.c.l.b16 %v4802
    %v4938 = vunpack.c.l.b16 %v4803
    %v4939 = vunpack.c.l.b16 %v4804
    %v4940 = vunpack.c.l.b16 %v4805
    %v4941 = vunpack.c.l.b16 %v4806
    %v4942 = vpack.c.b16 %v4879, %v4878
    %v4943 = vpack.c.b16 %v4881, %v4880
    %v4944 = vpack.c.b16 %v4883, %v4882
    %v4945 = vpack.c.b16 %v4885, %v4884
    %v4946 = vpack.c.b16 %v4887, %v4886
    %v4947 = vpack.c.b16 %v4889, %v4888
    %v4948 = vpack.c.b16 %v4891, %v4890
    %v4949 = vpack.c.b16 %v4893, %v4892
    %v4950 = vpack.c.b16 %v4895, %v4894
    %v4951 = vpack.c.b16 %v4897, %v4896
    %v4952 = vpack.c.b16 %v4899, %v4898
    %v4953 = vpack.c.b16 %v4901, %v4900
    %v4954 = vpack.c.b16 %v4903, %v4902
    %v4955 = vpack.c.b16 %v4905, %v4904
    %v4956 = vpack.c.b16 %v4907, %v4906
    %v4957 = vpack.c.b16 %v4909, %v4908
    %v4958 = vpack.c.b16 %v4911, %v4910
    %v4959 = vpack.c.b16 %v4913, %v4912
    %v4960 = vpack.c.b16 %v4915, %v4914
    %v4961 = vpack.c.b16 %v4917, %v4916
    %v4962 = vpack.c.b16 %v4919, %v4918
    %v4963 = vpack.c.b16 %v4921, %v4920
    %v4964 = vpack.c.b16 %v4923, %v4922
    %v4965 = vpack.c.b16 %v4925, %v4924
    %v4966 = vpack.c.b16 %v4927, %v4926
    %v4967 = vpack.c.b16 %v4929, %v4928
    %v4968 = vpack.c.b16 %v4931, %v4930
    %v4969 = vpack.c.b16 %v4933, %v4932
    %v4970 = vpack.c.b16 %v4935, %v4934
    %v4971 = vpack.c.b16 %v4937, %v4936
    %v4972 = vpack.c.b16 %v4939, %v4938
    %v4973 = vpack.c.b16 %v4941, %v4940
    %5006 = vmatprep.subr.bf16.mxu0 0
    %5007 = vmatpush1.bf16.msra.mxu0 %v4949
    %5008 = vmatprep.subr.bf16.mxu0 0
    %5009 = vmatpush1.bf16.msra.mxu0 %v4948
    %5010 = vmatprep.subr.bf16.mxu0 0
    %5011 = vmatpush1.bf16.msra.mxu0 %v4947
    %5012 = vmatprep.subr.bf16.mxu0 0
    %5013 = vmatpush1.bf16.msra.mxu0 %v4946
    %5014 = vmatprep.subr.bf16.mxu0 0
    %5015 = vmatpush1.bf16.msra.mxu0 %v4945
    %5016 = vmatprep.subr.bf16.mxu0 0
    %5017 = vmatpush1.bf16.msra.mxu0 %v4944
    %5018 = vmatprep.subr.bf16.mxu0 0
    %5019 = vmatpush1.bf16.msra.mxu0 %v4943
    %5020 = vmatprep.subr.bf16.mxu0 0
    %5021 = vmatpush1.bf16.msra.mxu0 %v4942
    %5022 = vmatprep.subr.bf16.mxu0 0
    %5023 = vmatpush2.bf16.msra.mxu0 %v4957
    %5024 = vmatprep.subr.bf16.mxu0 0
    %5025 = vmatpush2.bf16.msra.mxu0 %v4956
    %5026 = vmatprep.subr.bf16.mxu0 0
    %5027 = vmatpush2.bf16.msra.mxu0 %v4955
    %5028 = vmatprep.subr.bf16.mxu0 0
    %5029 = vmatpush2.bf16.msra.mxu0 %v4954
    %5030 = vmatprep.subr.bf16.mxu0 0
    %5031 = vmatpush2.bf16.msra.mxu0 %v4953
    %5032 = vmatprep.subr.bf16.mxu0 0
    %5033 = vmatpush2.bf16.msra.mxu0 %v4952
    %5034 = vmatprep.subr.bf16.mxu0 0
    %5035 = vmatpush2.bf16.msra.mxu0 %v4951
    %5036 = vmatprep.subr.bf16.mxu0 0
    %5037 = vmatpush2.bf16.msra.mxu0 %v4950
    %5038 = vmatprep.mubr.bf16.mxu0 %v4740
    %5039 = vmatmul.mubr.bf16.gmra.mxu0 %v4739
    %v5040 = vpop.f32.mrf.mxu0
    %v5041 = vadd.f32 %v4812, %v5040
    %v5042 = vpop.f32.mrf.mxu0
    %v5043 = vpop.f32.mrf.mxu0
    %v5044 = vpop.f32.mrf.mxu0
    %5045 = vdwg.mxu0
    %5046 = vmatprep.subr.bf16.mxu0 0
    %5047 = vmatpush1.bf16.msra.mxu0 %v4965
    %5048 = vmatprep.subr.bf16.mxu0 0
    %5049 = vmatpush1.bf16.msra.mxu0 %v4964
    %5050 = vmatprep.subr.bf16.mxu0 0
    %5051 = vmatpush1.bf16.msra.mxu0 %v4963
    %5052 = vmatprep.subr.bf16.mxu0 0
    %5053 = vmatpush1.bf16.msra.mxu0 %v4962
    %5054 = vmatprep.subr.bf16.mxu0 0
    %5055 = vmatpush1.bf16.msra.mxu0 %v4961
    %5056 = vmatprep.subr.bf16.mxu0 0
    %5057 = vmatpush1.bf16.msra.mxu0 %v4960
    %5058 = vmatprep.subr.bf16.mxu0 0
    %5059 = vmatpush1.bf16.msra.mxu0 %v4959
    %5060 = vmatprep.subr.bf16.mxu0 0
    %5061 = vmatpush1.bf16.msra.mxu0 %v4958
    %5062 = vmatprep.subr.bf16.mxu0 0
    %5063 = vmatpush2.bf16.msra.mxu0 %v4973
    %5064 = vmatprep.subr.bf16.mxu0 0
    %5065 = vmatpush2.bf16.msra.mxu0 %v4972
    %5066 = vmatprep.subr.bf16.mxu0 0
    %5067 = vmatpush2.bf16.msra.mxu0 %v4971
    %5068 = vmatprep.subr.bf16.mxu0 0
    %5069 = vmatpush2.bf16.msra.mxu0 %v4970
    %5070 = vmatprep.subr.bf16.mxu0 0
    %5071 = vmatpush2.bf16.msra.mxu0 %v4969
    %5072 = vmatprep.subr.bf16.mxu0 0
    %5073 = vmatpush2.bf16.msra.mxu0 %v4968
    %5074 = vmatprep.subr.bf16.mxu0 0
    %5075 = vmatpush2.bf16.msra.mxu0 %v4967
    %5076 = vmatprep.subr.bf16.mxu0 0
    %5077 = vmatpush2.bf16.msra.mxu0 %v4966
    %5078 = vmatprep.mubr.bf16.mxu0 %v4742
    %5079 = vmatmul.mubr.bf16.gmra.mxu0 %v4741
    %v5080 = vpop.f32.mrf.mxu0
    %v5081 = vadd.f32 %v5041, %v5080
    %v5082 = vpop.f32.mrf.mxu0
    %v5083 = vpop.f32.mrf.mxu0
    %v5084 = vpop.f32.mrf.mxu0
    %5085 = vdwg.mxu0
    %v5086 = vmax.f32 %v5081, 0.0
    %v5087 = vpack.c.bf16 %v5086, %v5086
    %v5088 = vld [vmem:[#allocation15] sm:$0xf]
    %v5089 = vld [vmem:[#allocation15 + $0x4] sm:$0xf]
    %v5090 = vld [vmem:[#allocation15 + $0x8] sm:$0xf]
    %v5091 = vld [vmem:[#allocation15 + $0xc] sm:$0xf]
    %v5092 = vld [vmem:[#allocation15 + $0x10] sm:$0xf]
    %v5093 = vld [vmem:[#allocation15 + $0x14] sm:$0xf]
    %v5094 = vld [vmem:[#allocation15 + $0x18] sm:$0xf]
    %v5095 = vld [vmem:[#allocation15 + $0x1c] sm:$0xf]
    %v5096 = vld [vmem:[#allocation15 + $0x20] sm:$0xf]
    %v5097 = vld [vmem:[#allocation15 + $0x24] sm:$0xf]
    %v5098 = vld [vmem:[#allocation15 + $0x28] sm:$0xf]
    %v5099 = vld [vmem:[#allocation15 + $0x2c] sm:$0xf]
    %v5100 = vld [vmem:[#allocation15 + $0x30] sm:$0xf]
    %v5101 = vld [vmem:[#allocation15 + $0x34] sm:$0xf]
    %v5102 = vld [vmem:[#allocation15 + $0x38] sm:$0xf]
    %v5103 = vld [vmem:[#allocation15 + $0x3c] sm:$0xf]
    %v5104 = vld [vmem:[#allocation16] sm:$0x1]
    %v5106 = vlaneseq
    %v5107 = vshrl.u32 %v5106, 7
    %v5108 = vsub.s32 0, %v5107
    %v5109 = vrot.slane %v5104, %v5108
    %v5127 = vunpack.c.l.b16 %v5088
    %v5128 = vunpack.c.l.b16 %v5089
    %v5129 = vunpack.c.l.b16 %v5090
    %v5130 = vunpack.c.l.b16 %v5091
    %v5131 = vunpack.c.l.b16 %v5092
    %v5132 = vunpack.c.l.b16 %v5093
    %v5133 = vunpack.c.l.b16 %v5094
    %v5134 = vunpack.c.l.b16 %v5095
    %v5135 = vunpack.c.l.b16 %v5096
    %v5136 = vunpack.c.l.b16 %v5097
    %v5137 = vunpack.c.l.b16 %v5098
    %v5138 = vunpack.c.l.b16 %v5099
    %v5139 = vunpack.c.l.b16 %v5100
    %v5140 = vunpack.c.l.b16 %v5101
    %v5141 = vunpack.c.l.b16 %v5102
    %v5142 = vunpack.c.l.b16 %v5103
    %v5143 = vpack.c.b16 %v5128, %v5127
    %v5144 = vpack.c.b16 %v5130, %v5129
    %v5145 = vpack.c.b16 %v5132, %v5131
    %v5146 = vpack.c.b16 %v5134, %v5133
    %v5147 = vpack.c.b16 %v5136, %v5135
    %v5148 = vpack.c.b16 %v5138, %v5137
    %v5149 = vpack.c.b16 %v5140, %v5139
    %v5150 = vpack.c.b16 %v5142, %v5141
    %5159 = vmatprep.subr.bf16.mxu0 0
    %5160 = vmatpush1.bf16.msra.mxu0 %v5150
    %5161 = vmatprep.subr.bf16.mxu0 0
    %5162 = vmatpush1.bf16.msra.mxu0 %v5149
    %5163 = vmatprep.subr.bf16.mxu0 0
    %5164 = vmatpush1.bf16.msra.mxu0 %v5148
    %5165 = vmatprep.subr.bf16.mxu0 0
    %5166 = vmatpush1.bf16.msra.mxu0 %v5147
    %5167 = vmatprep.subr.bf16.mxu0 0
    %5168 = vmatpush1.bf16.msra.mxu0 %v5146
    %5169 = vmatprep.subr.bf16.mxu0 0
    %5170 = vmatpush1.bf16.msra.mxu0 %v5145
    %5171 = vmatprep.subr.bf16.mxu0 0
    %5172 = vmatpush1.bf16.msra.mxu0 %v5144
    %5173 = vmatprep.subr.bf16.mxu0 0
    %5174 = vmatpush1.bf16.msra.mxu0 %v5143
    %5175 = vmatprep.subr.bf16.mxu0 0
    %5176 = vmatpush2.bf16.msra.mxu0 0
    %5177 = vmatprep.subr.bf16.mxu0 0
    %5178 = vmatpush2.bf16.msra.mxu0 0
    %5179 = vmatprep.subr.bf16.mxu0 0
    %5180 = vmatpush2.bf16.msra.mxu0 0
    %5181 = vmatprep.subr.bf16.mxu0 0
    %5182 = vmatpush2.bf16.msra.mxu0 0
    %5183 = vmatprep.subr.bf16.mxu0 0
    %5184 = vmatpush2.bf16.msra.mxu0 0
    %5185 = vmatprep.subr.bf16.mxu0 0
    %5186 = vmatpush2.bf16.msra.mxu0 0
    %5187 = vmatprep.subr.bf16.mxu0 0
    %5188 = vmatpush2.bf16.msra.mxu0 0
    %5189 = vmatprep.subr.bf16.mxu0 0
    %5190 = vmatpush2.bf16.msra.mxu0 0
    %5191 = vmatprep.mubr.bf16.mxu0 0
    %5192 = vmatmul.mubr.bf16.gmra.mxu0 %v5087
    %v5193 = vpop.f32.mrf.mxu0
    %v5194 = vadd.f32 %v5109, %v5193
    %v5195 = vpop.f32.mrf.mxu0
    %v5196 = vpop.f32.mrf.mxu0
    %v5197 = vpop.f32.mrf.mxu0
    %5198 = vdwg.mxu0
    %5199 = vst [vmem:[%s11] sm:$0xff] %v5194
    // Predicated region
    $region86: #{network_forward.1} parent=1 // pred_check
      _
    $region87: #{network_forward.1} parent=1 // pred_check_branch
      %5201 = sbr.rel (0) target = $region89
    $region88: #{network_forward.1} parent=1 // pred_region
      _
    $region89: #{network_forward.1} parent=1 // pred_fallthru
      _
    // Predicated region
    $region90: #{network_forward.1} parent=1 // pred_check
      _
    $region91: #{network_forward.1} parent=1 // pred_check_branch
      %5203 = sbr.rel (0) target = $region93
    $region92: #{network_forward.1} parent=1 // pred_region
      _
    $region93: #{network_forward.1} parent=1 // pred_fallthru
      _
    %5204 = vsyncpa [#allocation3], 1
    %5205 = vsyncpa [#allocation5], 1
    %5206 = vsyncpa [#allocation8], 1
    %5207 = vsyncpa [#allocation11], 1
    %5208 = vsyncpa [#allocation14], 1
    %5209 = vsyncpa [#allocation17], 1

</llo_original>
